<compile_context>
chip_gen: v6e
topology: v6e:2x2x1
jax: 0.10.0
libtpu: 0.0.40
codegen_flags: <defaults>
</compile_context>

<pallas_src>
import jax
import jax.numpy as jnp
from jax.experimental import pallas as pl
from jax.experimental.pallas import tpu as pltpu


def _attention_kernel(x_ref, w_att_ref, b_att_ref, w_ctx_ref, ctx_ref, aw_ref):
    # x_ref:     (TB, S, D)   batch tile of the LSTM output
    # w_att_ref: (D, D)       attention Linear weight, pre-transposed to (in, out)
    # b_att_ref: (1, D)       attention Linear bias
    # w_ctx_ref: (1, D)       context-vector weight as a row
    # ctx_ref:   (TB, 1, D)   context output tile
    # aw_ref:    (TB, S)      attention-weights output tile (lane-dense)
    TB, S, D = x_ref.shape
    x3 = x_ref[...]          # (TB, S, D), f32

    w_att = w_att_ref[...]   # (D, D)
    bias = b_att_ref[...]    # (1, D)

    if S % 8 == 0:
        # Layout-free collapse of the leading dims -> one big MXU matmul.
        x2 = x3.reshape(TB * S, D)
        h2 = jnp.tanh(
            jnp.dot(x2, w_att, preferred_element_type=jnp.float32) + bias
        )  # (TB*S, D)
        h3 = h2.reshape(TB, S, D)
    else:
        # Fallback for sublane-unaligned S: keep the batched contraction.
        h3 = jnp.tanh(
            jnp.einsum("bsd,de->bse", x3, w_att,
                       preferred_element_type=jnp.float32) + bias
        )  # (TB, S, D)

    # scores[b, s] = <h[b, s, :], w_ctx>  -> VPU multiply + lane reduce,
    # produced directly in the lane-dense (TB, S) layout.
    scores = jnp.sum(h3 * w_ctx_ref[...], axis=-1)         # (TB, S)

    # Per-batch-row softmax over the sequence (lane) axis.
    m = jnp.max(scores, axis=-1, keepdims=True)             # (TB, 1)
    e = jnp.exp(scores - m)                                  # (TB, S)  (EUP)
    denom = jnp.sum(e, axis=-1, keepdims=True)               # (TB, 1)
    weights = e * pl.reciprocal(denom, approx=False)         # (TB, S)

    aw_ref[...] = weights.astype(aw_ref.dtype)

    # context[b, d] = sum_s weights[b, s] * x[b, s, d]  -> MXU batched
    # contraction over S (q = 1), like the flash-attention PV step.
    ctx = jnp.einsum(
        "bqs,bsd->bqd",
        weights[:, None, :].astype(x3.dtype),
        x3,
        preferred_element_type=jnp.float32,
    )  # (TB, 1, D)
    ctx_ref[...] = ctx.astype(ctx_ref.dtype)


def _pick_block_batch(B, S, target_rows=256):
    """Pick TB (batch elements per grid step).

    Constraints:
      * B % TB == 0 (no remainder handling needed),
      * TB % 8 == 0 or TB == B (keeps the (8,128) rule happy for the
        (TB, S)-style output blocks).
    Preference: smallest valid TB with TB*S >= target_rows (fills the MXU M
    dimension) while keeping the grid as long as possible so both v7x
    TensorCores stay busy; otherwise the largest valid TB.
    """
    valid = [tb for tb in range(1, B + 1)
             if B % tb == 0 and (tb % 8 == 0 or tb == B)]
    for tb in valid:  # ascending
        if tb * S >= target_rows:
            return tb
    return valid[-1]


def attention_forward(lstm_output, w_att, b_att, w_ctx, *, block_batch=None):
    """lstm_output: (B, S, D); w_att: (D, D) torch layout (out, in);
    b_att: (D,); w_ctx: (1, D) torch layout.
    Returns (context (B, D), attention_weights (B, S, 1))."""
    B, S, D = lstm_output.shape
    TB = _pick_block_batch(B, S) if block_batch is None else block_batch
    assert B % TB == 0 and (TB % 8 == 0 or TB == B)

    # Pre-transpose weights to (in, out) so the kernel does plain x @ W.
    w_att_t = jnp.transpose(w_att)       # (D, D)
    b_att_2d = b_att.reshape(1, D)       # (1, D)
    w_ctx_row = w_ctx.reshape(1, D)      # (1, D)

    ctx3, aw2 = pl.pallas_call(
        _attention_kernel,
        out_shape=(
            jax.ShapeDtypeStruct((B, 1, D), lstm_output.dtype),  # context
            jax.ShapeDtypeStruct((B, S), lstm_output.dtype),     # weights
        ),
        grid_spec=pltpu.PrefetchScalarGridSpec(
            num_scalar_prefetch=0,
            grid=(B // TB,),
            in_specs=[
                pl.BlockSpec((TB, S, D), lambda i: (i, 0, 0)),  # x tile
                pl.BlockSpec((D, D), lambda i: (0, 0)),         # W_att^T (shared)
                pl.BlockSpec((1, D), lambda i: (0, 0)),         # bias (shared)
                pl.BlockSpec((1, D), lambda i: (0, 0)),         # w_ctx row (shared)
            ],
            out_specs=[
                pl.BlockSpec((TB, 1, D), lambda i: (i, 0, 0)),  # context
                pl.BlockSpec((TB, S), lambda i: (i, 0)),        # attention weights
            ],
        ),
        compiler_params=pltpu.CompilerParams(
            dimension_semantics=("parallel",),
        ),
    )(lstm_output, w_att_t, b_att_2d, w_ctx_row)

    context = ctx3.reshape(B, D)
    attention_weights = aw2.reshape(B, S, 1)
    return context, attention_weights


def attention_ref(lstm_output, w_att, b_att, w_ctx):
    """Pure-JAX reference mirroring the PyTorch forward."""
    h = jnp.tanh(jnp.einsum("bsd,od->bso", lstm_output, w_att) + b_att)
    scores = jnp.einsum("bsd,od->bso", h, w_ctx)           # (B, S, 1)
    weights = jax.nn.softmax(scores, axis=1)
    context = jnp.sum(weights * lstm_output, axis=1)       # (B, D)
    return context, weights


if __name__ == "__main__":
    hidden_size = 32
    D = hidden_size * 2     # 64
    B, S = 64, 8            # enough batch to exercise TB=32, grid=(2,)

    key = jax.random.PRNGKey(0)
    k_x, k_w1, k_b1, k_w2 = jax.random.split(key, 4)

    # Deterministic "parameters" (same shapes as the nn.Linear layers).
    lstm_output = jax.random.normal(k_x, (B, S, D), dtype=jnp.float32)
    w_att = jax.random.normal(k_w1, (D, D), dtype=jnp.float32) * 0.1   # Linear(2H, 2H).weight
    b_att = jax.random.normal(k_b1, (D,), dtype=jnp.float32) * 0.1     # Linear(2H, 2H).bias
    w_ctx = jax.random.normal(k_w2, (1, D), dtype=jnp.float32) * 0.1   # Linear(2H, 1).weight

    context, attn_weights = attention_forward(lstm_output, w_att, b_att, w_ctx)
    jax.block_until_ready((context, attn_weights))

    ctx_ref, aw_ref = attention_ref(lstm_output, w_att, b_att, w_ctx)
    assert context.shape == (B, D)
    assert attn_weights.shape == (B, S, 1)
    assert jnp.allclose(context, ctx_ref, atol=2e-5, rtol=2e-5)
    assert jnp.allclose(attn_weights, aw_ref, atol=2e-5, rtol=2e-5)

    print("KERNEL_OK")
</pallas_src>

<mosaic_0001>
module attributes {stable_mosaic.version = 11 : i64} {
  func.func @_attention_kernel(%arg0: i32, %arg1: memref<32x8x64xf32, #tpu.memory_space<vmem>>, %arg2: memref<64x64xf32, #tpu.memory_space<vmem>>, %arg3: memref<1x64xf32, #tpu.memory_space<vmem>>, %arg4: memref<1x64xf32, #tpu.memory_space<vmem>>, %arg5: memref<32x1x64xf32, #tpu.memory_space<vmem>>, %arg6: memref<32x8xf32, #tpu.memory_space<vmem>>) attributes {dimension_semantics = [#tpu.dimension_semantics<parallel>], iteration_bounds = array<i64: 2>, scalar_prefetch = 0 : i64, scratch_operands = 0 : i64, tpu.core_type = #tpu.core_type<tc>, window_params = [{transform_indices = @transform_0, window_bounds = array<i64: 32, 8, 64>}, {pipeline_mode = #tpu.pipeline_mode<synchronous>, transform_indices = @transform_1, window_bounds = array<i64: 64, 64>}, {pipeline_mode = #tpu.pipeline_mode<synchronous>, transform_indices = @transform_2, window_bounds = array<i64: 1, 64>}, {pipeline_mode = #tpu.pipeline_mode<synchronous>, transform_indices = @transform_3, window_bounds = array<i64: 1, 64>}, {transform_indices = @transform_4, window_bounds = array<i64: 32, 1, 64>}, {transform_indices = @transform_5, window_bounds = array<i64: 32, 8>}]} {
    %c0 = arith.constant 0 : index
    %c0_0 = arith.constant 0 : index
    %c0_1 = arith.constant 0 : index
    %0 = vector.load %arg1[%c0, %c0_0, %c0_1] : memref<32x8x64xf32, #tpu.memory_space<vmem>>, vector<32x8x64xf32>
    %c0_2 = arith.constant 0 : index
    %c0_3 = arith.constant 0 : index
    %1 = vector.load %arg2[%c0_2, %c0_3] : memref<64x64xf32, #tpu.memory_space<vmem>>, vector<64x64xf32>
    %c0_4 = arith.constant 0 : index
    %c0_5 = arith.constant 0 : index
    %2 = vector.load %arg3[%c0_4, %c0_5] : memref<1x64xf32, #tpu.memory_space<vmem>>, vector<1x64xf32>
    %3 = vector.shape_cast %0 : vector<32x8x64xf32> to vector<256x64xf32>
    %cst = arith.constant dense<0.000000e+00> : vector<256x64xf32>
    %4 = tpu.matmul %3, %1, %cst {dimension_numbers = #tpu.dot_dimension_numbers<[1], [0], [0], [1], [0, 0, 1, 1], [], []>} : vector<256x64xf32>, vector<64x64xf32>, vector<256x64xf32> -> vector<256x64xf32>
    %5 = vector.broadcast %2 : vector<1x64xf32> to vector<256x64xf32>
    %6 = arith.addf %4, %5 : vector<256x64xf32>
    %7 = math.tanh %6 : vector<256x64xf32>
    %8 = vector.shape_cast %7 : vector<256x64xf32> to vector<32x8x64xf32>
    %c0_6 = arith.constant 0 : index
    %c0_7 = arith.constant 0 : index
    %9 = vector.load %arg4[%c0_6, %c0_7] : memref<1x64xf32, #tpu.memory_space<vmem>>, vector<1x64xf32>
    %10 = vector.shape_cast %9 : vector<1x64xf32> to vector<1x1x64xf32>
    %11 = vector.broadcast %10 : vector<1x1x64xf32> to vector<32x8x64xf32>
    %12 = arith.mulf %8, %11 : vector<32x8x64xf32>
    %cst_8 = arith.constant dense<0.000000e+00> : vector<32x8xf32>
    %13 = vector.multi_reduction <add>, %12, %cst_8 [2] : vector<32x8x64xf32> to vector<32x8xf32>
    %cst_9 = arith.constant dense<0xFF800000> : vector<32xf32>
    %14 = vector.multi_reduction <maximumf>, %13, %cst_9 [1] : vector<32x8xf32> to vector<32xf32>
    %15 = vector.shape_cast %14 : vector<32xf32> to vector<32x1xf32>
    %16 = vector.broadcast %15 : vector<32x1xf32> to vector<32x8xf32>
    %17 = arith.subf %13, %16 : vector<32x8xf32>
    %18 = math.exp %17 : vector<32x8xf32>
    %cst_10 = arith.constant dense<0.000000e+00> : vector<32xf32>
    %19 = vector.multi_reduction <add>, %18, %cst_10 [1] : vector<32x8xf32> to vector<32xf32>
    %20 = vector.shape_cast %19 : vector<32xf32> to vector<32x1xf32>
    %21 = tpu.reciprocal %20 : vector<32x1xf32> -> vector<32x1xf32>
    %22 = vector.broadcast %21 : vector<32x1xf32> to vector<32x8xf32>
    %23 = arith.mulf %18, %22 : vector<32x8xf32>
    %c0_11 = arith.constant 0 : index
    %c0_12 = arith.constant 0 : index
    %24 = vector.load %arg6[%c0_11, %c0_12] : memref<32x8xf32, #tpu.memory_space<vmem>>, vector<32x8xf32>
    tpu.vector_store %arg6[%c0_11, %c0_12], %23 {strides = array<i32>} : memref<32x8xf32, #tpu.memory_space<vmem>>, vector<32x8xf32>,
    %25 = vector.shape_cast %23 : vector<32x8xf32> to vector<32x1x8xf32>
    "tpu.trace_start"() <{level = 10 : i32, message = "bqs,bsd->bqd"}> : () -> ()
    %cst_13 = arith.constant dense<0.000000e+00> : vector<32x1x64xf32>
    %26 = tpu.matmul %25, %0, %cst_13 {dimension_numbers = #tpu.dot_dimension_numbers<[2], [1], [1], [2], [0, 0, 0, 1, 1, 2], [0], [0]>} : vector<32x1x8xf32>, vector<32x8x64xf32>, vector<32x1x64xf32> -> vector<32x1x64xf32>
    "tpu.trace_stop"() : () -> ()
    %c0_14 = arith.constant 0 : index
    %c0_15 = arith.constant 0 : index
    %c0_16 = arith.constant 0 : index
    %27 = vector.load %arg5[%c0_14, %c0_15, %c0_16] : memref<32x1x64xf32, #tpu.memory_space<vmem>>, vector<32x1x64xf32>
    tpu.vector_store %arg5[%c0_14, %c0_15, %c0_16], %26 {strides = array<i32>} : memref<32x1x64xf32, #tpu.memory_space<vmem>>, vector<32x1x64xf32>,
    return
  }
  func.func @transform_0(%arg0: i32) -> (i32, i32, i32) {
    %c0_i32 = arith.constant 0 : i32
    %c0_i32_0 = arith.constant 0 : i32
    %c0_i32_1 = arith.constant 0 : i32
    return %arg0, %c0_i32, %c0_i32_0 : i32, i32, i32
  }
  func.func @transform_1(%arg0: i32) -> (i32, i32) {
    %c0_i32 = arith.constant 0 : i32
    %c0_i32_0 = arith.constant 0 : i32
    %c0_i32_1 = arith.constant 0 : i32
    return %c0_i32, %c0_i32_0 : i32, i32
  }
  func.func @transform_2(%arg0: i32) -> (i32, i32) {
    %c0_i32 = arith.constant 0 : i32
    %c0_i32_0 = arith.constant 0 : i32
    %c0_i32_1 = arith.constant 0 : i32
    return %c0_i32, %c0_i32_0 : i32, i32
  }
  func.func @transform_3(%arg0: i32) -> (i32, i32) {
    %c0_i32 = arith.constant 0 : i32
    %c0_i32_0 = arith.constant 0 : i32
    %c0_i32_1 = arith.constant 0 : i32
    return %c0_i32, %c0_i32_0 : i32, i32
  }
  func.func @transform_4(%arg0: i32) -> (i32, i32, i32) {
    %c0_i32 = arith.constant 0 : i32
    %c0_i32_0 = arith.constant 0 : i32
    %c0_i32_1 = arith.constant 0 : i32
    return %arg0, %c0_i32, %c0_i32_0 : i32, i32, i32
  }
  func.func @transform_5(%arg0: i32) -> (i32, i32) {
    %c0_i32 = arith.constant 0 : i32
    %c0_i32_0 = arith.constant 0 : i32
    return %arg0, %c0_i32 : i32, i32
  }
}

</mosaic_0001>

<llo_original>
// kernel: tpu_custom_call.1
$region0: #{tpu_custom_call.1}
  #allocation0 [shape = 'u32[]', space=smem, size = 0x4, offset = 0x4, fixed_abs, tag = 'smem constant byte address 0x4 - core index']
  #allocation1 [shape = 'u32[144,128]{1,0:T(1,128)}', space=vmem, size = 0x12000, scoped, tag = 'internal scratch']
  %s0 = inlined_call_operand.hbm [shape: f32[64,8,64], index: 0, kind: input, shape index: {}]
  %s1 = inlined_call_operand.hbm [shape: f32[64,64], index: 1, kind: input, shape index: {}]
  %s2 = inlined_call_operand.vmem [shape: f32[1,64], index: 2, kind: input, shape index: {}]
  %s3 = inlined_call_operand.vmem [shape: f32[1,64], index: 3, kind: input, shape index: {}]
  %s4 = inlined_call_operand.hbm [shape: f32[64,1,64], index: 4, kind: output, shape index: {0}]
  %s5 = inlined_call_operand.vmem [shape: f32[64,8], index: 5, kind: output, shape index: {1}]
  %6 = xla_tuple %s4, %s5
  %s7 = sld [smem:[#allocation0]]
  $region65: #{tpu_custom_call.1} parent=0
    _
  %s9 = ssub.s32 1, %s7
  %s10 = scalar_select 0, %s9, %s7
  $region1: #{tpu_custom_call.1} parent=0
    #allocation2 [shape = 'u8[262144]{0}', space=vmem, size = 0x40000, scoped, tag = 'input window, operand 0']
    #allocation3 [shape = 's32[2]{0}', space=sflag, size = 0x8, scoped, tag = 'scoped memory for tpu_custom_call.1']
    #allocation4 [shape = 's32[2]{0}', space=sflag, size = 0x8, scoped, tag = 'scoped memory for tpu_custom_call.1']
    #allocation5 [shape = 'u8[32768]{0}', space=vmem, size = 0x8000, scoped, tag = 'input window, operand 1, single buffered']
    #allocation6 [shape = 's32[1]{0}', space=sflag, size = 0x4, scoped, tag = 'scoped memory for tpu_custom_call.1']
    #allocation7 [shape = 'u8[32768]{0}', space=vmem, size = 0x8000, scoped, tag = 'output window, operand 0']
    %11 = vsyncpa [#allocation3], 0
    %s12 = scalar_lea.sflag [#allocation3], 1
    %13 = vsyncpa %s12, 0
    %14 = vsyncpa [#allocation6], 0
    %15 = vsyncpa [#allocation4], 0
    %s16 = scalar_lea.sflag [#allocation4], 1
    %17 = vsyncpa %s16, 0
    loop: start=0, step=1, limit=4
    $region2: #{tpu_custom_call.1} parent=1 // loop_pre_header
      _
    $region3: #{tpu_custom_call.1} parent=1 // loop_header
      %s19 = sphi 0, %s23
      %p20 = scmp.ge.s32.totalorder %s19, 4
      %s29 = sphi 0, %s31
      %s32 = sphi 0, %s29
      %s33 = sphi 0, %s32
      %s49 = sphi 0, %s33
      %s53 = sphi 0, %s53
      %s55 = sphi 0, %s53
      %s56 = sphi 0, %s55
      %s70 = sphi 0, %s56
      %s74 = sphi 0, %s74
      %s76 = sphi 0, %s74
      %s77 = sphi 0, %s76
      %s91 = sphi 0, %s77
      %s95 = sphi 0, %s95
      %s97 = sphi 0, %s95
      %s98 = sphi 0, %s97
      %s112 = sphi 0, %s98
      %s118 = sphi 0, %s120
      %s121 = sphi 0, %s118
      %s122 = sphi 0, %s121
      %s138 = sphi 0, %s122
      %s144 = sphi 0, %s146
      %s147 = sphi 0, %s144
      %s148 = sphi 0, %s147
      %s164 = sphi 0, %s148
    $region4: #{tpu_custom_call.1} parent=1 // loop_header_branch
      %22 = sbr.rel (%p20) target = $region8
    $region5: #{tpu_custom_call.1} parent=1 // loop_body
      %s24 = ssub.s32 %s19, 1
      %s25 = ssub.s32 %s19, 2
      %s26 = sadd.s32 %s19, 1
      %s27 = ssub.s32 %s19, %s26
      %p28 = scmp.eq.s32.totalorder %s27, 0
      %s30 = sadd.s32 %s29, 1
      %s31 = scalar_select %p28, %s29, %s30
      %p34 = pneg %p28
      %p35 = scmp.eq.s32.totalorder %s19, 1
      %p36 = por %p34, %p35
      %p37 = scmp.ne.s32.totalorder %s29, %s32
      %p38 = scmp.eq.s32.totalorder %s19, 0
      %p39 = por %p37, %p38
      %p40 = scmp.ne.s32.totalorder %s29, %s32
      %p41 = scmp.eq.s32.totalorder %s24, 1
      %p42 = por %p40, %p41
      %p43 = scmp.ne.s32.totalorder %s32, %s33
      %p44 = scmp.eq.s32.totalorder %s24, 0
      %p45 = por %p43, %p44
      %p46 = scmp.ne.s32.totalorder %s32, %s33
      %p47 = scmp.eq.s32.totalorder %s25, 1
      %p48 = por %p46, %p47
      %p50 = scmp.ne.s32.totalorder %s33, %s49
      %p51 = scmp.eq.s32.totalorder %s25, 0
      %p52 = por %p50, %p51
      %s54 = sadd.s32 %s53, 1
      %p57 = scmp.eq.s32.totalorder %s19, 1
      %p58 = scmp.ne.s32.totalorder %s53, %s55
      %p59 = scmp.eq.s32.totalorder %s19, 0
      %p60 = por %p58, %p59
      %p61 = scmp.ne.s32.totalorder %s53, %s55
      %p62 = scmp.eq.s32.totalorder %s24, 1
      %p63 = por %p61, %p62
      %p64 = scmp.ne.s32.totalorder %s55, %s56
      %p65 = scmp.eq.s32.totalorder %s24, 0
      %p66 = por %p64, %p65
      %p67 = scmp.ne.s32.totalorder %s55, %s56
      %p68 = scmp.eq.s32.totalorder %s25, 1
      %p69 = por %p67, %p68
      %p71 = scmp.ne.s32.totalorder %s56, %s70
      %p72 = scmp.eq.s32.totalorder %s25, 0
      %p73 = por %p71, %p72
      %s75 = sadd.s32 %s74, 1
      %p78 = scmp.eq.s32.totalorder %s19, 1
      %p79 = scmp.ne.s32.totalorder %s74, %s76
      %p80 = scmp.eq.s32.totalorder %s19, 0
      %p81 = por %p79, %p80
      %p82 = scmp.ne.s32.totalorder %s74, %s76
      %p83 = scmp.eq.s32.totalorder %s24, 1
      %p84 = por %p82, %p83
      %p85 = scmp.ne.s32.totalorder %s76, %s77
      %p86 = scmp.eq.s32.totalorder %s24, 0
      %p87 = por %p85, %p86
      %p88 = scmp.ne.s32.totalorder %s76, %s77
      %p89 = scmp.eq.s32.totalorder %s25, 1
      %p90 = por %p88, %p89
      %p92 = scmp.ne.s32.totalorder %s77, %s91
      %p93 = scmp.eq.s32.totalorder %s25, 0
      %p94 = por %p92, %p93
      %s96 = sadd.s32 %s95, 1
      %p99 = scmp.eq.s32.totalorder %s19, 1
      %p100 = scmp.ne.s32.totalorder %s95, %s97
      %p101 = scmp.eq.s32.totalorder %s19, 0
      %p102 = por %p100, %p101
      %p103 = scmp.ne.s32.totalorder %s95, %s97
      %p104 = scmp.eq.s32.totalorder %s24, 1
      %p105 = por %p103, %p104
      %p106 = scmp.ne.s32.totalorder %s97, %s98
      %p107 = scmp.eq.s32.totalorder %s24, 0
      %p108 = por %p106, %p107
      %p109 = scmp.ne.s32.totalorder %s97, %s98
      %p110 = scmp.eq.s32.totalorder %s25, 1
      %p111 = por %p109, %p110
      %p113 = scmp.ne.s32.totalorder %s98, %s112
      %p114 = scmp.eq.s32.totalorder %s25, 0
      %p115 = por %p113, %p114
      %s116 = ssub.s32 %s19, %s26
      %p117 = scmp.eq.s32.totalorder %s116, 0
      %s119 = sadd.s32 %s118, 1
      %s120 = scalar_select %p117, %s118, %s119
      %p123 = pneg %p117
      %p124 = scmp.eq.s32.totalorder %s19, 1
      %p125 = por %p123, %p124
      %p126 = scmp.ne.s32.totalorder %s118, %s121
      %p127 = scmp.eq.s32.totalorder %s19, 0
      %p128 = por %p126, %p127
      %p129 = scmp.ne.s32.totalorder %s118, %s121
      %p130 = scmp.eq.s32.totalorder %s24, 1
      %p131 = por %p129, %p130
      %p132 = scmp.ne.s32.totalorder %s121, %s122
      %p133 = scmp.eq.s32.totalorder %s24, 0
      %p134 = por %p132, %p133
      %p135 = scmp.ne.s32.totalorder %s121, %s122
      %p136 = scmp.eq.s32.totalorder %s25, 1
      %p137 = por %p135, %p136
      %p139 = scmp.ne.s32.totalorder %s122, %s138
      %p140 = scmp.eq.s32.totalorder %s25, 0
      %p141 = por %p139, %p140
      %s142 = ssub.s32 %s19, %s26
      %p143 = scmp.eq.s32.totalorder %s142, 0
      %s145 = sadd.s32 %s144, 1
      %s146 = scalar_select %p143, %s144, %s145
      %p149 = pneg %p143
      %p150 = scmp.eq.s32.totalorder %s19, 1
      %p151 = por %p149, %p150
      %p152 = scmp.ne.s32.totalorder %s144, %s147
      %p153 = scmp.eq.s32.totalorder %s19, 0
      %p154 = por %p152, %p153
      %p155 = scmp.ne.s32.totalorder %s144, %s147
      %p156 = scmp.eq.s32.totalorder %s24, 1
      %p157 = por %p155, %p156
      %p158 = scmp.ne.s32.totalorder %s147, %s148
      %p159 = scmp.eq.s32.totalorder %s24, 0
      %p160 = por %p158, %p159
      %p161 = scmp.ne.s32.totalorder %s147, %s148
      %p162 = scmp.eq.s32.totalorder %s25, 1
      %p163 = por %p161, %p162
      %p165 = scmp.ne.s32.totalorder %s148, %s164
      %p166 = scmp.eq.s32.totalorder %s25, 0
      %p167 = por %p165, %p166
      %p168 = scmp.le.s32.totalorder 1, %s19
      %p169 = scmp.lt.s32.totalorder %s19, 3
      %p170 = pnand %p168, %p169
      %p171 = pneg %p170
      // Predicated region
      $region9: #{tpu_custom_call.1} parent=5 // pred_check
        _
      $region10: #{tpu_custom_call.1} parent=5 // pred_check_branch
        %173 = sbr.rel (%p170) target = $region12
      $region11: #{tpu_custom_call.1} parent=5 // pred_region
        %s174 = ssub.s32 %s19, 1
        // Predicated region
        $region13: #{tpu_custom_call.1} parent=11 // pred_check
          %p175 = pneg %p66
        $region14: #{tpu_custom_call.1} parent=11 // pred_check_branch
          %177 = sbr.rel (%p175) target = $region16
        $region15: #{tpu_custom_call.1} parent=11 // pred_region
          %s179 = ssub.s32 1024, 1024
          %180 = vsyncadd [#allocation6], %s179
          %s181 = sshll.u32 [#allocation5], 4
          %s182 = int_to_ptr.vmem [resolvable:$true] %s181
          %187 = dma.hbm_to_vmem [thread:$0]  %s1, 1024, %s182, [#allocation6], 128, 128, 8
        $region16: #{tpu_custom_call.1} parent=11 // pred_fallthru
          _
        // Predicated region
        $region17: #{tpu_custom_call.1} parent=11 // pred_check
          %p188 = pneg %p87
        $region18: #{tpu_custom_call.1} parent=11 // pred_check_branch
          %190 = sbr.rel (%p188) target = $region20
        $region19: #{tpu_custom_call.1} parent=11 // pred_region
          _
        $region20: #{tpu_custom_call.1} parent=11 // pred_fallthru
          _
        // Predicated region
        $region21: #{tpu_custom_call.1} parent=11 // pred_check
          %p191 = pneg %p108
        $region22: #{tpu_custom_call.1} parent=11 // pred_check_branch
          %193 = sbr.rel (%p191) target = $region24
        $region23: #{tpu_custom_call.1} parent=11 // pred_region
          _
        $region24: #{tpu_custom_call.1} parent=11 // pred_fallthru
          _
      $region12: #{tpu_custom_call.1} parent=5 // pred_fallthru
        _
      %p194 = scmp.lt.s32.totalorder %s19, 2
      // Predicated region
      $region25: #{tpu_custom_call.1} parent=5 // pred_check
        %p195 = pneg %p194
      $region26: #{tpu_custom_call.1} parent=5 // pred_check_branch
        %197 = sbr.rel (%p195) target = $region28
      $region27: #{tpu_custom_call.1} parent=5 // pred_region
        // Predicated region
        $region29: #{tpu_custom_call.1} parent=27 // pred_check
          %p198 = pneg %p39
        $region30: #{tpu_custom_call.1} parent=27 // pred_check_branch
          %200 = sbr.rel (%p198) target = $region32
        $region31: #{tpu_custom_call.1} parent=27 // pred_region
          %s201 = sand.u32 %s29, 1
          %s202 = scalar_lea.sflag [#allocation3], %s201
          %s203 = sand.u32 %s29, 1
          %s204 = smul.addr %s203, 256
          %s205 = scalar_lea.vmem [#allocation2], %s204
          %s206 = smul.u32 32, %s19
          %s208 = ssub.s32 4096, 4096
          %209 = vsyncadd %s202, %s208
          %s210 = smul.addr %s206, 128
          %s211 = scalar_lea.hbm %s0, %s210
          %s212 = sshll.u32 %s205, 4
          %s213 = int_to_ptr.vmem [resolvable:$true] %s212
          %218 = dma.hbm_to_vmem [thread:$0]  %s211, 4096, %s213, %s202, 128, 128, 8
        $region32: #{tpu_custom_call.1} parent=27 // pred_fallthru
          _
      $region28: #{tpu_custom_call.1} parent=5 // pred_fallthru
        _
      %p219 = scmp.le.s32.totalorder 1, %s19
      %p220 = scmp.lt.s32.totalorder %s19, 3
      %p221 = pnand %p219, %p220
      %p222 = pneg %p221
      // Predicated region
      $region33: #{tpu_custom_call.1} parent=5 // pred_check
        _
      $region34: #{tpu_custom_call.1} parent=5 // pred_check_branch
        %224 = sbr.rel (%p221) target = $region36
      $region35: #{tpu_custom_call.1} parent=5 // pred_region
        %s225 = ssub.s32 %s19, 1
        %s226 = sand.u32 %s32, 1
        %s227 = scalar_lea.sflag [#allocation3], %s226
        %s228 = sand.u32 %s32, 1
        %s229 = smul.addr %s228, 256
        %s230 = scalar_lea.vmem [#allocation2], %s229
        // Predicated region
        $region37: #{tpu_custom_call.1} parent=35 // pred_check
          %p231 = pneg %p45
        $region38: #{tpu_custom_call.1} parent=35 // pred_check_branch
          %233 = sbr.rel (%p231) target = $region40
        $region39: #{tpu_custom_call.1} parent=35 // pred_region
          %234 = dma.done %s227, 4096
        $region40: #{tpu_custom_call.1} parent=35 // pred_fallthru
          _
        // Predicated region
        $region41: #{tpu_custom_call.1} parent=35 // pred_check
          %p235 = pneg %p66
        $region42: #{tpu_custom_call.1} parent=35 // pred_check_branch
          %237 = sbr.rel (%p235) target = $region44
        $region43: #{tpu_custom_call.1} parent=35 // pred_region
          %238 = dma.done [#allocation6], 1024
        $region44: #{tpu_custom_call.1} parent=35 // pred_fallthru
          _
        %s239 = sand.u32 %s32, 1
        %s240 = scalar_lea.sflag [#allocation3], %s239
        %s241 = sand.u32 %s32, 1
        %s242 = smul.addr %s241, 256
        %s243 = scalar_lea.vmem [#allocation2], %s242
        %p244 = pneg %p45
        %p245 = pneg %p42
        %p246 = pneg %p66
        %p247 = pneg %p63
        %p248 = pneg %p87
        %p249 = pneg %p84
        %p250 = pneg %p108
        %p251 = pneg %p105
        %p252 = pneg %p134
        %p253 = pneg %p131
        %s254 = sand.u32 %s121, 1
        %s255 = scalar_lea.sflag [#allocation4], %s254
        %s256 = sand.u32 %s121, 1
        %s257 = smul.addr %s256, 32
        %s258 = scalar_lea.vmem [#allocation7], %s257
        %p259 = pneg %p160
        %p260 = pneg %p157
        %s261 = smul.u32 4, %s24
        %p262 = scmp.lt.s32.totalorder %s261, 7
        %s263 = scalar_select %p262, %s261, 7
        %s264 = smul.addr %s263, 8
        %s265 = scalar_lea.vmem %s5, %s264
        %s266 = smul.u32 32, %s24
        %s267 = smul.u32 32, %s24
        %s268 = smul.u32 4, %s24
        %p269 = scmp.lt.s32.totalorder %s268, 7
        %s270 = scalar_select %p269, %s268, 7
        %s271 = smul.addr %s270, 8
        %s272 = scalar_lea.vmem %s5, %s271
        %s273 = smul.u32 4, %s24
        %v274 = vld [vmem:[%s230] sm:$0xff]
        %v275 = vld [vmem:[%s230 + $0x8] sm:$0xff]
        %v276 = vld [vmem:[%s230 + $0x10] sm:$0xff]
        %v277 = vld [vmem:[%s230 + $0x18] sm:$0xff]
        %v278 = vld [vmem:[%s230 + $0x20] sm:$0xff]
        %v279 = vld [vmem:[%s230 + $0x28] sm:$0xff]
        %v280 = vld [vmem:[%s230 + $0x30] sm:$0xff]
        %v281 = vld [vmem:[%s230 + $0x38] sm:$0xff]
        %v282 = vld [vmem:[%s230 + $0x40] sm:$0xff]
        %v283 = vld [vmem:[%s230 + $0x48] sm:$0xff]
        %v284 = vld [vmem:[%s230 + $0x50] sm:$0xff]
        %v285 = vld [vmem:[%s230 + $0x58] sm:$0xff]
        %v286 = vld [vmem:[%s230 + $0x60] sm:$0xff]
        %v287 = vld [vmem:[%s230 + $0x68] sm:$0xff]
        %v288 = vld [vmem:[%s230 + $0x70] sm:$0xff]
        %v289 = vld [vmem:[%s230 + $0x78] sm:$0xff]
        %v290 = vld [vmem:[%s230 + $0x80] sm:$0xff]
        %v291 = vld [vmem:[%s230 + $0x88] sm:$0xff]
        %v292 = vld [vmem:[%s230 + $0x90] sm:$0xff]
        %v293 = vld [vmem:[%s230 + $0x98] sm:$0xff]
        %v294 = vld [vmem:[%s230 + $0xa0] sm:$0xff]
        %v295 = vld [vmem:[%s230 + $0xa8] sm:$0xff]
        %v296 = vld [vmem:[%s230 + $0xb0] sm:$0xff]
        %v297 = vld [vmem:[%s230 + $0xb8] sm:$0xff]
        %v298 = vld [vmem:[%s230 + $0xc0] sm:$0xff]
        %v299 = vld [vmem:[%s230 + $0xc8] sm:$0xff]
        %v300 = vld [vmem:[%s230 + $0xd0] sm:$0xff]
        %v301 = vld [vmem:[%s230 + $0xd8] sm:$0xff]
        %v302 = vld [vmem:[%s230 + $0xe0] sm:$0xff]
        %v303 = vld [vmem:[%s230 + $0xe8] sm:$0xff]
        %v304 = vld [vmem:[%s230 + $0xf0] sm:$0xff]
        %v305 = vld [vmem:[%s230 + $0xf8] sm:$0xff]
        %v306 = vld [vmem:[#allocation5] sm:$0xff]
        %v307 = vld [vmem:[#allocation5 + $0x8] sm:$0xff]
        %v308 = vld [vmem:[#allocation5 + $0x10] sm:$0xff]
        %v309 = vld [vmem:[#allocation5 + $0x18] sm:$0xff]
        %v310 = vld [vmem:[#allocation5 + $0x20] sm:$0xff]
        %v311 = vld [vmem:[#allocation5 + $0x28] sm:$0xff]
        %v312 = vld [vmem:[#allocation5 + $0x30] sm:$0xff]
        %v313 = vld [vmem:[#allocation5 + $0x38] sm:$0xff]
        %v314 = vld [vmem:[%s2] sm:$0x1]
        %v316 = vlaneseq
        %v317 = vshrl.u32 %v316, 7
        %v318 = vsub.s32 0, %v317
        %v319 = vrot.slane %v314, %v318
        %vm321 = vcmask 523264
        %v323 = vsel %vm321, %v274, 0
        %v326 = vsel %vm321, %v275, 0
        %v329 = vsel %vm321, %v276, 0
        %v332 = vsel %vm321, %v277, 0
        %v335 = vsel %vm321, %v278, 0
        %v338 = vsel %vm321, %v279, 0
        %v341 = vsel %vm321, %v280, 0
        %v344 = vsel %vm321, %v281, 0
        %v347 = vsel %vm321, %v282, 0
        %v350 = vsel %vm321, %v283, 0
        %v353 = vsel %vm321, %v284, 0
        %v356 = vsel %vm321, %v285, 0
        %v359 = vsel %vm321, %v286, 0
        %v362 = vsel %vm321, %v287, 0
        %v365 = vsel %vm321, %v288, 0
        %v368 = vsel %vm321, %v289, 0
        %v371 = vsel %vm321, %v290, 0
        %v374 = vsel %vm321, %v291, 0
        %v377 = vsel %vm321, %v292, 0
        %v380 = vsel %vm321, %v293, 0
        %v383 = vsel %vm321, %v294, 0
        %v386 = vsel %vm321, %v295, 0
        %v389 = vsel %vm321, %v296, 0
        %v392 = vsel %vm321, %v297, 0
        %v395 = vsel %vm321, %v298, 0
        %v398 = vsel %vm321, %v299, 0
        %v401 = vsel %vm321, %v300, 0
        %v404 = vsel %vm321, %v301, 0
        %v407 = vsel %vm321, %v302, 0
        %v410 = vsel %vm321, %v303, 0
        %v413 = vsel %vm321, %v304, 0
        %v416 = vsel %vm321, %v305, 0
        %418 = vmatprep.subr.mxu0 0.0
        %419 = vmatpush1.msra.mxu0 0.0
        %420 = vmatprep.subr.mxu0 0.0
        %421 = vmatpush1.msra.mxu0 0.0
        %422 = vmatprep.subr.mxu0 0.0
        %423 = vmatpush1.msra.mxu0 0.0
        %424 = vmatprep.subr.mxu0 0.0
        %425 = vmatpush1.msra.mxu0 0.0
        %426 = vmatprep.subr.mxu0 0.0
        %427 = vmatpush1.msra.mxu0 0.0
        %428 = vmatprep.subr.mxu0 0.0
        %429 = vmatpush1.msra.mxu0 0.0
        %430 = vmatprep.subr.mxu0 0.0
        %431 = vmatpush1.msra.mxu0 0.0
        %432 = vmatprep.subr.mxu0 0.0
        %433 = vmatpush1.msra.mxu0 0.0
        %434 = vmatprep.subr.mxu0 0.0
        %435 = vmatpush1.msra.mxu0 %v313
        %436 = vmatprep.subr.mxu0 0.0
        %437 = vmatpush1.msra.mxu0 %v312
        %438 = vmatprep.subr.mxu0 0.0
        %439 = vmatpush1.msra.mxu0 %v311
        %440 = vmatprep.subr.mxu0 0.0
        %441 = vmatpush1.msra.mxu0 %v310
        %442 = vmatprep.subr.mxu0 0.0
        %443 = vmatpush1.msra.mxu0 %v309
        %444 = vmatprep.subr.mxu0 0.0
        %445 = vmatpush1.msra.mxu0 %v308
        %446 = vmatprep.subr.mxu0 0.0
        %447 = vmatpush1.msra.mxu0 %v307
        %448 = vmatprep.subr.mxu0 0.0
        %449 = vmatpush1.msra.mxu0 %v306
        %450 = vmatprep.subr.mxu0 0.0
        %451 = vmatpush2.msra.mxu0 0.0
        %452 = vmatprep.subr.mxu0 0.0
        %453 = vmatpush2.msra.mxu0 0.0
        %454 = vmatprep.subr.mxu0 0.0
        %455 = vmatpush2.msra.mxu0 0.0
        %456 = vmatprep.subr.mxu0 0.0
        %457 = vmatpush2.msra.mxu0 0.0
        %458 = vmatprep.subr.mxu0 0.0
        %459 = vmatpush2.msra.mxu0 0.0
        %460 = vmatprep.subr.mxu0 0.0
        %461 = vmatpush2.msra.mxu0 0.0
        %462 = vmatprep.subr.mxu0 0.0
        %463 = vmatpush2.msra.mxu0 0.0
        %464 = vmatprep.subr.mxu0 0.0
        %465 = vmatpush2.msra.mxu0 0.0
        %466 = vmatprep.subr.mxu0 0.0
        %467 = vmatpush2.msra.mxu0 0.0
        %468 = vmatprep.subr.mxu0 0.0
        %469 = vmatpush2.msra.mxu0 0.0
        %470 = vmatprep.subr.mxu0 0.0
        %471 = vmatpush2.msra.mxu0 0.0
        %472 = vmatprep.subr.mxu0 0.0
        %473 = vmatpush2.msra.mxu0 0.0
        %474 = vmatprep.subr.mxu0 0.0
        %475 = vmatpush2.msra.mxu0 0.0
        %476 = vmatprep.subr.mxu0 0.0
        %477 = vmatpush2.msra.mxu0 0.0
        %478 = vmatprep.subr.mxu0 0.0
        %479 = vmatpush2.msra.mxu0 0.0
        %480 = vmatprep.subr.mxu0 0.0
        %481 = vmatpush2.msra.mxu0 0.0
        %482 = vmatprep.mubr.f32.mxu0 0.0
        %483 = vmatmul.mubr.f32.gmra.mxu0 %v323
        %v484 = vpop.f32.mrf.mxu0
        %v485 = vadd.f32 %v319, %v484
        %v486 = vpop.f32.mrf.mxu0
        %487 = vmatprep.mubr.f32.mxu0 0.0
        %488 = vmatmul.mubr.f32.gmra.mxu0 %v326
        %v489 = vpop.f32.mrf.mxu0
        %v490 = vadd.f32 %v319, %v489
        %v491 = vpop.f32.mrf.mxu0
        %492 = vmatprep.mubr.f32.mxu0 0.0
        %493 = vmatmul.mubr.f32.gmra.mxu0 %v329
        %v494 = vpop.f32.mrf.mxu0
        %v495 = vadd.f32 %v319, %v494
        %v496 = vpop.f32.mrf.mxu0
        %497 = vmatprep.mubr.f32.mxu0 0.0
        %498 = vmatmul.mubr.f32.gmra.mxu0 %v332
        %v499 = vpop.f32.mrf.mxu0
        %v500 = vadd.f32 %v319, %v499
        %v501 = vpop.f32.mrf.mxu0
        %502 = vmatprep.mubr.f32.mxu0 0.0
        %503 = vmatmul.mubr.f32.gmra.mxu0 %v335
        %v504 = vpop.f32.mrf.mxu0
        %v505 = vadd.f32 %v319, %v504
        %v506 = vpop.f32.mrf.mxu0
        %507 = vmatprep.mubr.f32.mxu0 0.0
        %508 = vmatmul.mubr.f32.gmra.mxu0 %v338
        %v509 = vpop.f32.mrf.mxu0
        %v510 = vadd.f32 %v319, %v509
        %v511 = vpop.f32.mrf.mxu0
        %512 = vmatprep.mubr.f32.mxu0 0.0
        %513 = vmatmul.mubr.f32.gmra.mxu0 %v341
        %v514 = vpop.f32.mrf.mxu0
        %v515 = vadd.f32 %v319, %v514
        %v516 = vpop.f32.mrf.mxu0
        %517 = vmatprep.mubr.f32.mxu0 0.0
        %518 = vmatmul.mubr.f32.gmra.mxu0 %v344
        %v519 = vpop.f32.mrf.mxu0
        %v520 = vadd.f32 %v319, %v519
        %v521 = vpop.f32.mrf.mxu0
        %522 = vmatprep.mubr.f32.mxu0 0.0
        %523 = vmatmul.mubr.f32.gmra.mxu0 %v347
        %v524 = vpop.f32.mrf.mxu0
        %v525 = vadd.f32 %v319, %v524
        %v526 = vpop.f32.mrf.mxu0
        %527 = vmatprep.mubr.f32.mxu0 0.0
        %528 = vmatmul.mubr.f32.gmra.mxu0 %v350
        %v529 = vpop.f32.mrf.mxu0
        %v530 = vadd.f32 %v319, %v529
        %v531 = vpop.f32.mrf.mxu0
        %532 = vmatprep.mubr.f32.mxu0 0.0
        %533 = vmatmul.mubr.f32.gmra.mxu0 %v353
        %v534 = vpop.f32.mrf.mxu0
        %v535 = vadd.f32 %v319, %v534
        %v536 = vpop.f32.mrf.mxu0
        %537 = vmatprep.mubr.f32.mxu0 0.0
        %538 = vmatmul.mubr.f32.gmra.mxu0 %v356
        %v539 = vpop.f32.mrf.mxu0
        %v540 = vadd.f32 %v319, %v539
        %v541 = vpop.f32.mrf.mxu0
        %542 = vmatprep.mubr.f32.mxu0 0.0
        %543 = vmatmul.mubr.f32.gmra.mxu0 %v359
        %v544 = vpop.f32.mrf.mxu0
        %v545 = vadd.f32 %v319, %v544
        %v546 = vpop.f32.mrf.mxu0
        %547 = vmatprep.mubr.f32.mxu0 0.0
        %548 = vmatmul.mubr.f32.gmra.mxu0 %v362
        %v549 = vpop.f32.mrf.mxu0
        %v550 = vadd.f32 %v319, %v549
        %v551 = vpop.f32.mrf.mxu0
        %552 = vmatprep.mubr.f32.mxu0 0.0
        %553 = vmatmul.mubr.f32.gmra.mxu0 %v365
        %v554 = vpop.f32.mrf.mxu0
        %v555 = vadd.f32 %v319, %v554
        %v556 = vpop.f32.mrf.mxu0
        %557 = vmatprep.mubr.f32.mxu0 0.0
        %558 = vmatmul.mubr.f32.gmra.mxu0 %v368
        %v559 = vpop.f32.mrf.mxu0
        %v560 = vadd.f32 %v319, %v559
        %v561 = vpop.f32.mrf.mxu0
        %562 = vmatprep.mubr.f32.mxu0 0.0
        %563 = vmatmul.mubr.f32.gmra.mxu0 %v371
        %v564 = vpop.f32.mrf.mxu0
        %v565 = vadd.f32 %v319, %v564
        %v566 = vpop.f32.mrf.mxu0
        %567 = vmatprep.mubr.f32.mxu0 0.0
        %568 = vmatmul.mubr.f32.gmra.mxu0 %v374
        %v569 = vpop.f32.mrf.mxu0
        %v570 = vadd.f32 %v319, %v569
        %v571 = vpop.f32.mrf.mxu0
        %572 = vmatprep.mubr.f32.mxu0 0.0
        %573 = vmatmul.mubr.f32.gmra.mxu0 %v377
        %v574 = vpop.f32.mrf.mxu0
        %v575 = vadd.f32 %v319, %v574
        %v576 = vpop.f32.mrf.mxu0
        %577 = vmatprep.mubr.f32.mxu0 0.0
        %578 = vmatmul.mubr.f32.gmra.mxu0 %v380
        %v579 = vpop.f32.mrf.mxu0
        %v580 = vadd.f32 %v319, %v579
        %v581 = vpop.f32.mrf.mxu0
        %582 = vmatprep.mubr.f32.mxu0 0.0
        %583 = vmatmul.mubr.f32.gmra.mxu0 %v383
        %v584 = vpop.f32.mrf.mxu0
        %v585 = vadd.f32 %v319, %v584
        %v586 = vpop.f32.mrf.mxu0
        %587 = vmatprep.mubr.f32.mxu0 0.0
        %588 = vmatmul.mubr.f32.gmra.mxu0 %v386
        %v589 = vpop.f32.mrf.mxu0
        %v590 = vadd.f32 %v319, %v589
        %v591 = vpop.f32.mrf.mxu0
        %592 = vmatprep.mubr.f32.mxu0 0.0
        %593 = vmatmul.mubr.f32.gmra.mxu0 %v389
        %v594 = vpop.f32.mrf.mxu0
        %v595 = vadd.f32 %v319, %v594
        %v596 = vpop.f32.mrf.mxu0
        %597 = vmatprep.mubr.f32.mxu0 0.0
        %598 = vmatmul.mubr.f32.gmra.mxu0 %v392
        %v599 = vpop.f32.mrf.mxu0
        %v600 = vadd.f32 %v319, %v599
        %v601 = vpop.f32.mrf.mxu0
        %602 = vmatprep.mubr.f32.mxu0 0.0
        %603 = vmatmul.mubr.f32.gmra.mxu0 %v395
        %v604 = vpop.f32.mrf.mxu0
        %v605 = vadd.f32 %v319, %v604
        %v606 = vpop.f32.mrf.mxu0
        %607 = vmatprep.mubr.f32.mxu0 0.0
        %608 = vmatmul.mubr.f32.gmra.mxu0 %v398
        %v609 = vpop.f32.mrf.mxu0
        %v610 = vadd.f32 %v319, %v609
        %v611 = vpop.f32.mrf.mxu0
        %612 = vmatprep.mubr.f32.mxu0 0.0
        %613 = vmatmul.mubr.f32.gmra.mxu0 %v401
        %v614 = vpop.f32.mrf.mxu0
        %v615 = vadd.f32 %v319, %v614
        %v616 = vpop.f32.mrf.mxu0
        %617 = vmatprep.mubr.f32.mxu0 0.0
        %618 = vmatmul.mubr.f32.gmra.mxu0 %v404
        %v619 = vpop.f32.mrf.mxu0
        %v620 = vadd.f32 %v319, %v619
        %v621 = vpop.f32.mrf.mxu0
        %622 = vmatprep.mubr.f32.mxu0 0.0
        %623 = vmatmul.mubr.f32.gmra.mxu0 %v407
        %v624 = vpop.f32.mrf.mxu0
        %v625 = vadd.f32 %v319, %v624
        %v626 = vpop.f32.mrf.mxu0
        %627 = vmatprep.mubr.f32.mxu0 0.0
        %628 = vmatmul.mubr.f32.gmra.mxu0 %v410
        %v629 = vpop.f32.mrf.mxu0
        %v630 = vadd.f32 %v319, %v629
        %v631 = vpop.f32.mrf.mxu0
        %632 = vmatprep.mubr.f32.mxu0 0.0
        %633 = vmatmul.mubr.f32.gmra.mxu0 %v413
        %v634 = vpop.f32.mrf.mxu0
        %v635 = vadd.f32 %v319, %v634
        %v636 = vpop.f32.mrf.mxu0
        %637 = vmatprep.mubr.f32.mxu0 0.0
        %638 = vmatmul.mubr.f32.gmra.mxu0 %v416
        %v639 = vpop.f32.mrf.mxu0
        %v640 = vadd.f32 %v319, %v639
        %v641 = vpop.f32.mrf.mxu0
        %642 = vdwg.mxu0
        %v643 = vtanh.pop %v485
        %v644 = vtanh.pop %v490
        %v645 = vtanh.pop %v495
        %v646 = vtanh.pop %v500
        %v647 = vtanh.pop %v505
        %v648 = vtanh.pop %v510
        %v649 = vtanh.pop %v515
        %v650 = vtanh.pop %v520
        %v651 = vtanh.pop %v525
        %v652 = vtanh.pop %v530
        %v653 = vtanh.pop %v535
        %v654 = vtanh.pop %v540
        %v655 = vtanh.pop %v545
        %v656 = vtanh.pop %v550
        %v657 = vtanh.pop %v555
        %v658 = vtanh.pop %v560
        %v659 = vtanh.pop %v565
        %v660 = vtanh.pop %v570
        %v661 = vtanh.pop %v575
        %v662 = vtanh.pop %v580
        %v663 = vtanh.pop %v585
        %v664 = vtanh.pop %v590
        %v665 = vtanh.pop %v595
        %v666 = vtanh.pop %v600
        %v667 = vtanh.pop %v605
        %v668 = vtanh.pop %v610
        %v669 = vtanh.pop %v615
        %v670 = vtanh.pop %v620
        %v671 = vtanh.pop %v625
        %v672 = vtanh.pop %v630
        %v673 = vtanh.pop %v635
        %v674 = vtanh.pop %v640
        %v675 = vld [vmem:[%s3] sm:$0x1]
        %v677 = vlaneseq
        %v678 = vshrl.u32 %v677, 7
        %v679 = vsub.s32 0, %v678
        %v680 = vrot.slane %v675, %v679
        %v682 = vmul.f32 %v643, %v680
        %v683 = vmul.f32 %v644, %v680
        %v684 = vmul.f32 %v645, %v680
        %v685 = vmul.f32 %v646, %v680
        %v686 = vmul.f32 %v647, %v680
        %v687 = vmul.f32 %v648, %v680
        %v688 = vmul.f32 %v649, %v680
        %v689 = vmul.f32 %v650, %v680
        %v690 = vmul.f32 %v651, %v680
        %v691 = vmul.f32 %v652, %v680
        %v692 = vmul.f32 %v653, %v680
        %v693 = vmul.f32 %v654, %v680
        %v694 = vmul.f32 %v655, %v680
        %v695 = vmul.f32 %v656, %v680
        %v696 = vmul.f32 %v657, %v680
        %v697 = vmul.f32 %v658, %v680
        %v698 = vmul.f32 %v659, %v680
        %v699 = vmul.f32 %v660, %v680
        %v700 = vmul.f32 %v661, %v680
        %v701 = vmul.f32 %v662, %v680
        %v702 = vmul.f32 %v663, %v680
        %v703 = vmul.f32 %v664, %v680
        %v704 = vmul.f32 %v665, %v680
        %v705 = vmul.f32 %v666, %v680
        %v706 = vmul.f32 %v667, %v680
        %v707 = vmul.f32 %v668, %v680
        %v708 = vmul.f32 %v669, %v680
        %v709 = vmul.f32 %v670, %v680
        %v710 = vmul.f32 %v671, %v680
        %v711 = vmul.f32 %v672, %v680
        %v712 = vmul.f32 %v673, %v680
        %v713 = vmul.f32 %v674, %v680
        %v714 = vsel %vm321, %v682, 0.0
        %715 = vadd.xlane.f32.xlu0 %v714
        %v716 = vpop.xlane.xlu0 %715
        %v717 = vsel %vm321, %v683, 0.0
        %718 = vadd.xlane.f32.xlu0 %v717
        %v719 = vpop.xlane.xlu0 %718
        %v720 = vsel %vm321, %v684, 0.0
        %721 = vadd.xlane.f32.xlu0 %v720
        %v722 = vpop.xlane.xlu0 %721
        %v723 = vsel %vm321, %v685, 0.0
        %724 = vadd.xlane.f32.xlu0 %v723
        %v725 = vpop.xlane.xlu0 %724
        %v726 = vsel %vm321, %v686, 0.0
        %727 = vadd.xlane.f32.xlu0 %v726
        %v728 = vpop.xlane.xlu0 %727
        %v729 = vsel %vm321, %v687, 0.0
        %730 = vadd.xlane.f32.xlu0 %v729
        %v731 = vpop.xlane.xlu0 %730
        %v732 = vsel %vm321, %v688, 0.0
        %733 = vadd.xlane.f32.xlu0 %v732
        %v734 = vpop.xlane.xlu0 %733
        %v735 = vsel %vm321, %v689, 0.0
        %736 = vadd.xlane.f32.xlu0 %v735
        %v737 = vpop.xlane.xlu0 %736
        %v738 = vsel %vm321, %v690, 0.0
        %739 = vadd.xlane.f32.xlu0 %v738
        %v740 = vpop.xlane.xlu0 %739
        %v741 = vsel %vm321, %v691, 0.0
        %742 = vadd.xlane.f32.xlu0 %v741
        %v743 = vpop.xlane.xlu0 %742
        %v744 = vsel %vm321, %v692, 0.0
        %745 = vadd.xlane.f32.xlu0 %v744
        %v746 = vpop.xlane.xlu0 %745
        %v747 = vsel %vm321, %v693, 0.0
        %748 = vadd.xlane.f32.xlu0 %v747
        %v749 = vpop.xlane.xlu0 %748
        %v750 = vsel %vm321, %v694, 0.0
        %751 = vadd.xlane.f32.xlu0 %v750
        %v752 = vpop.xlane.xlu0 %751
        %v753 = vsel %vm321, %v695, 0.0
        %754 = vadd.xlane.f32.xlu0 %v753
        %v755 = vpop.xlane.xlu0 %754
        %v756 = vsel %vm321, %v696, 0.0
        %757 = vadd.xlane.f32.xlu0 %v756
        %v758 = vpop.xlane.xlu0 %757
        %v759 = vsel %vm321, %v697, 0.0
        %760 = vadd.xlane.f32.xlu0 %v759
        %v761 = vpop.xlane.xlu0 %760
        %v762 = vsel %vm321, %v698, 0.0
        %763 = vadd.xlane.f32.xlu0 %v762
        %v764 = vpop.xlane.xlu0 %763
        %v765 = vsel %vm321, %v699, 0.0
        %766 = vadd.xlane.f32.xlu0 %v765
        %v767 = vpop.xlane.xlu0 %766
        %v768 = vsel %vm321, %v700, 0.0
        %769 = vadd.xlane.f32.xlu0 %v768
        %v770 = vpop.xlane.xlu0 %769
        %v771 = vsel %vm321, %v701, 0.0
        %772 = vadd.xlane.f32.xlu0 %v771
        %v773 = vpop.xlane.xlu0 %772
        %v774 = vsel %vm321, %v702, 0.0
        %775 = vadd.xlane.f32.xlu0 %v774
        %v776 = vpop.xlane.xlu0 %775
        %v777 = vsel %vm321, %v703, 0.0
        %778 = vadd.xlane.f32.xlu0 %v777
        %v779 = vpop.xlane.xlu0 %778
        %v780 = vsel %vm321, %v704, 0.0
        %781 = vadd.xlane.f32.xlu0 %v780
        %v782 = vpop.xlane.xlu0 %781
        %v783 = vsel %vm321, %v705, 0.0
        %784 = vadd.xlane.f32.xlu0 %v783
        %v785 = vpop.xlane.xlu0 %784
        %v786 = vsel %vm321, %v706, 0.0
        %787 = vadd.xlane.f32.xlu0 %v786
        %v788 = vpop.xlane.xlu0 %787
        %v789 = vsel %vm321, %v707, 0.0
        %790 = vadd.xlane.f32.xlu0 %v789
        %v791 = vpop.xlane.xlu0 %790
        %v792 = vsel %vm321, %v708, 0.0
        %793 = vadd.xlane.f32.xlu0 %v792
        %v794 = vpop.xlane.xlu0 %793
        %v795 = vsel %vm321, %v709, 0.0
        %796 = vadd.xlane.f32.xlu0 %v795
        %v797 = vpop.xlane.xlu0 %796
        %v798 = vsel %vm321, %v710, 0.0
        %799 = vadd.xlane.f32.xlu0 %v798
        %v800 = vpop.xlane.xlu0 %799
        %v801 = vsel %vm321, %v711, 0.0
        %802 = vadd.xlane.f32.xlu0 %v801
        %v803 = vpop.xlane.xlu0 %802
        %v804 = vsel %vm321, %v712, 0.0
        %805 = vadd.xlane.f32.xlu0 %v804
        %v806 = vpop.xlane.xlu0 %805
        %v807 = vsel %vm321, %v713, 0.0
        %808 = vadd.xlane.f32.xlu0 %v807
        %v809 = vpop.xlane.xlu0 %808
        %v842 = vlaneseq
        %v843 = vand.u32 %v842, 127
        %v844 = vlaneseq
        %v845 = vshrl.u32 %v844, 7
        %v846 = vsub.s32 %v843, %v845
        %v847 = vrot.slane %v716, %v846
        %v848 = vlaneseq
        %v849 = vshrl.u32 %v848, 7
        %v850 = vsub.s32 %v843, %v849
        %v851 = vrot.slane %v719, %v850
        %v852 = vlaneseq
        %v853 = vshrl.u32 %v852, 7
        %v854 = vsub.s32 %v843, %v853
        %v855 = vrot.slane %v722, %v854
        %v856 = vlaneseq
        %v857 = vshrl.u32 %v856, 7
        %v858 = vsub.s32 %v843, %v857
        %v859 = vrot.slane %v725, %v858
        %v860 = vlaneseq
        %v861 = vshrl.u32 %v860, 7
        %v862 = vsub.s32 %v843, %v861
        %v863 = vrot.slane %v728, %v862
        %v864 = vlaneseq
        %v865 = vshrl.u32 %v864, 7
        %v866 = vsub.s32 %v843, %v865
        %v867 = vrot.slane %v731, %v866
        %v868 = vlaneseq
        %v869 = vshrl.u32 %v868, 7
        %v870 = vsub.s32 %v843, %v869
        %v871 = vrot.slane %v734, %v870
        %v872 = vlaneseq
        %v873 = vshrl.u32 %v872, 7
        %v874 = vsub.s32 %v843, %v873
        %v875 = vrot.slane %v737, %v874
        %v876 = vlaneseq
        %v877 = vshrl.u32 %v876, 7
        %v878 = vsub.s32 %v843, %v877
        %v879 = vrot.slane %v740, %v878
        %v880 = vlaneseq
        %v881 = vshrl.u32 %v880, 7
        %v882 = vsub.s32 %v843, %v881
        %v883 = vrot.slane %v743, %v882
        %v884 = vlaneseq
        %v885 = vshrl.u32 %v884, 7
        %v886 = vsub.s32 %v843, %v885
        %v887 = vrot.slane %v746, %v886
        %v888 = vlaneseq
        %v889 = vshrl.u32 %v888, 7
        %v890 = vsub.s32 %v843, %v889
        %v891 = vrot.slane %v749, %v890
        %v892 = vlaneseq
        %v893 = vshrl.u32 %v892, 7
        %v894 = vsub.s32 %v843, %v893
        %v895 = vrot.slane %v752, %v894
        %v896 = vlaneseq
        %v897 = vshrl.u32 %v896, 7
        %v898 = vsub.s32 %v843, %v897
        %v899 = vrot.slane %v755, %v898
        %v900 = vlaneseq
        %v901 = vshrl.u32 %v900, 7
        %v902 = vsub.s32 %v843, %v901
        %v903 = vrot.slane %v758, %v902
        %v904 = vlaneseq
        %v905 = vshrl.u32 %v904, 7
        %v906 = vsub.s32 %v843, %v905
        %v907 = vrot.slane %v761, %v906
        %v908 = vlaneseq
        %v909 = vshrl.u32 %v908, 7
        %v910 = vsub.s32 %v843, %v909
        %v911 = vrot.slane %v764, %v910
        %v912 = vlaneseq
        %v913 = vshrl.u32 %v912, 7
        %v914 = vsub.s32 %v843, %v913
        %v915 = vrot.slane %v767, %v914
        %v916 = vlaneseq
        %v917 = vshrl.u32 %v916, 7
        %v918 = vsub.s32 %v843, %v917
        %v919 = vrot.slane %v770, %v918
        %v920 = vlaneseq
        %v921 = vshrl.u32 %v920, 7
        %v922 = vsub.s32 %v843, %v921
        %v923 = vrot.slane %v773, %v922
        %v924 = vlaneseq
        %v925 = vshrl.u32 %v924, 7
        %v926 = vsub.s32 %v843, %v925
        %v927 = vrot.slane %v776, %v926
        %v928 = vlaneseq
        %v929 = vshrl.u32 %v928, 7
        %v930 = vsub.s32 %v843, %v929
        %v931 = vrot.slane %v779, %v930
        %v932 = vlaneseq
        %v933 = vshrl.u32 %v932, 7
        %v934 = vsub.s32 %v843, %v933
        %v935 = vrot.slane %v782, %v934
        %v936 = vlaneseq
        %v937 = vshrl.u32 %v936, 7
        %v938 = vsub.s32 %v843, %v937
        %v939 = vrot.slane %v785, %v938
        %v940 = vlaneseq
        %v941 = vshrl.u32 %v940, 7
        %v942 = vsub.s32 %v843, %v941
        %v943 = vrot.slane %v788, %v942
        %v944 = vlaneseq
        %v945 = vshrl.u32 %v944, 7
        %v946 = vsub.s32 %v843, %v945
        %v947 = vrot.slane %v791, %v946
        %v948 = vlaneseq
        %v949 = vshrl.u32 %v948, 7
        %v950 = vsub.s32 %v843, %v949
        %v951 = vrot.slane %v794, %v950
        %v952 = vlaneseq
        %v953 = vshrl.u32 %v952, 7
        %v954 = vsub.s32 %v843, %v953
        %v955 = vrot.slane %v797, %v954
        %v956 = vlaneseq
        %v957 = vshrl.u32 %v956, 7
        %v958 = vsub.s32 %v843, %v957
        %v959 = vrot.slane %v800, %v958
        %v960 = vlaneseq
        %v961 = vshrl.u32 %v960, 7
        %v962 = vsub.s32 %v843, %v961
        %v963 = vrot.slane %v803, %v962
        %v964 = vlaneseq
        %v965 = vshrl.u32 %v964, 7
        %v966 = vsub.s32 %v843, %v965
        %v967 = vrot.slane %v806, %v966
        %v968 = vlaneseq
        %v969 = vshrl.u32 %v968, 7
        %v970 = vsub.s32 %v843, %v969
        %v971 = vrot.slane %v809, %v970
        %vm972 = vcmask 1041409
        %v973 = vsel %vm972, %v851, %v847
        %vm974 = vcmask 1042434
        %v975 = vsel %vm974, %v855, %v973
        %vm976 = vcmask 1043459
        %v977 = vsel %vm976, %v859, %v975
        %vm978 = vcmask 1044484
        %v979 = vsel %vm978, %v863, %v977
        %vm980 = vcmask 1045509
        %v981 = vsel %vm980, %v867, %v979
        %vm982 = vcmask 1046534
        %v983 = vsel %vm982, %v871, %v981
        %vm984 = vcmask 1047559
        %v985 = vsel %vm984, %v875, %v983
        %v986 = vsel %vm972, %v883, %v879
        %v987 = vsel %vm974, %v887, %v986
        %v988 = vsel %vm976, %v891, %v987
        %v989 = vsel %vm978, %v895, %v988
        %v990 = vsel %vm980, %v899, %v989
        %v991 = vsel %vm982, %v903, %v990
        %v992 = vsel %vm984, %v907, %v991
        %v993 = vsel %vm972, %v915, %v911
        %v994 = vsel %vm974, %v919, %v993
        %v995 = vsel %vm976, %v923, %v994
        %v996 = vsel %vm978, %v927, %v995
        %v997 = vsel %vm980, %v931, %v996
        %v998 = vsel %vm982, %v935, %v997
        %v999 = vsel %vm984, %v939, %v998
        %v1000 = vsel %vm972, %v947, %v943
        %v1001 = vsel %vm974, %v951, %v1000
        %v1002 = vsel %vm976, %v955, %v1001
        %v1003 = vsel %vm978, %v959, %v1002
        %v1004 = vsel %vm980, %v963, %v1003
        %v1005 = vsel %vm982, %v967, %v1004
        %v1006 = vsel %vm984, %v971, %v1005
        %vm1011 = vcmask 64512
        %v1012 = vsel %vm1011, %v985, -inf
        %1013 = vmax.xlane.f32.xlu0 %v1012
        %v1014 = vpop.xlane.xlu0 %1013
        %v1015 = vsel %vm1011, %v992, -inf
        %1016 = vmax.xlane.f32.xlu0 %v1015
        %v1017 = vpop.xlane.xlu0 %1016
        %v1018 = vsel %vm1011, %v999, -inf
        %1019 = vmax.xlane.f32.xlu0 %v1018
        %v1020 = vpop.xlane.xlu0 %1019
        %v1021 = vsel %vm1011, %v1006, -inf
        %1022 = vmax.xlane.f32.xlu0 %v1021
        %v1023 = vpop.xlane.xlu0 %1022
        %v1028 = vlaneseq
        %v1029 = vshrl.u32 %v1028, 7
        %v1030 = vsub.s32 0, %v1029
        %v1031 = vrot.slane %v1014, %v1030
        %v1032 = vlaneseq
        %v1033 = vshrl.u32 %v1032, 7
        %v1034 = vsub.s32 1, %v1033
        %v1035 = vrot.slane %v1014, %v1034
        %v1036 = vlaneseq
        %v1037 = vshrl.u32 %v1036, 7
        %v1038 = vsub.s32 2, %v1037
        %v1039 = vrot.slane %v1014, %v1038
        %v1040 = vlaneseq
        %v1041 = vshrl.u32 %v1040, 7
        %v1042 = vsub.s32 3, %v1041
        %v1043 = vrot.slane %v1014, %v1042
        %v1044 = vlaneseq
        %v1045 = vshrl.u32 %v1044, 7
        %v1046 = vsub.s32 4, %v1045
        %v1047 = vrot.slane %v1014, %v1046
        %v1048 = vlaneseq
        %v1049 = vshrl.u32 %v1048, 7
        %v1050 = vsub.s32 5, %v1049
        %v1051 = vrot.slane %v1014, %v1050
        %v1052 = vlaneseq
        %v1053 = vshrl.u32 %v1052, 7
        %v1054 = vsub.s32 6, %v1053
        %v1055 = vrot.slane %v1014, %v1054
        %v1056 = vlaneseq
        %v1057 = vshrl.u32 %v1056, 7
        %v1058 = vsub.s32 7, %v1057
        %v1059 = vrot.slane %v1014, %v1058
        %v1060 = vlaneseq
        %v1061 = vshrl.u32 %v1060, 7
        %v1062 = vsub.s32 0, %v1061
        %v1063 = vrot.slane %v1017, %v1062
        %v1064 = vlaneseq
        %v1065 = vshrl.u32 %v1064, 7
        %v1066 = vsub.s32 1, %v1065
        %v1067 = vrot.slane %v1017, %v1066
        %v1068 = vlaneseq
        %v1069 = vshrl.u32 %v1068, 7
        %v1070 = vsub.s32 2, %v1069
        %v1071 = vrot.slane %v1017, %v1070
        %v1072 = vlaneseq
        %v1073 = vshrl.u32 %v1072, 7
        %v1074 = vsub.s32 3, %v1073
        %v1075 = vrot.slane %v1017, %v1074
        %v1076 = vlaneseq
        %v1077 = vshrl.u32 %v1076, 7
        %v1078 = vsub.s32 4, %v1077
        %v1079 = vrot.slane %v1017, %v1078
        %v1080 = vlaneseq
        %v1081 = vshrl.u32 %v1080, 7
        %v1082 = vsub.s32 5, %v1081
        %v1083 = vrot.slane %v1017, %v1082
        %v1084 = vlaneseq
        %v1085 = vshrl.u32 %v1084, 7
        %v1086 = vsub.s32 6, %v1085
        %v1087 = vrot.slane %v1017, %v1086
        %v1088 = vlaneseq
        %v1089 = vshrl.u32 %v1088, 7
        %v1090 = vsub.s32 7, %v1089
        %v1091 = vrot.slane %v1017, %v1090
        %v1092 = vlaneseq
        %v1093 = vshrl.u32 %v1092, 7
        %v1094 = vsub.s32 0, %v1093
        %v1095 = vrot.slane %v1020, %v1094
        %v1096 = vlaneseq
        %v1097 = vshrl.u32 %v1096, 7
        %v1098 = vsub.s32 1, %v1097
        %v1099 = vrot.slane %v1020, %v1098
        %v1100 = vlaneseq
        %v1101 = vshrl.u32 %v1100, 7
        %v1102 = vsub.s32 2, %v1101
        %v1103 = vrot.slane %v1020, %v1102
        %v1104 = vlaneseq
        %v1105 = vshrl.u32 %v1104, 7
        %v1106 = vsub.s32 3, %v1105
        %v1107 = vrot.slane %v1020, %v1106
        %v1108 = vlaneseq
        %v1109 = vshrl.u32 %v1108, 7
        %v1110 = vsub.s32 4, %v1109
        %v1111 = vrot.slane %v1020, %v1110
        %v1112 = vlaneseq
        %v1113 = vshrl.u32 %v1112, 7
        %v1114 = vsub.s32 5, %v1113
        %v1115 = vrot.slane %v1020, %v1114
        %v1116 = vlaneseq
        %v1117 = vshrl.u32 %v1116, 7
        %v1118 = vsub.s32 6, %v1117
        %v1119 = vrot.slane %v1020, %v1118
        %v1120 = vlaneseq
        %v1121 = vshrl.u32 %v1120, 7
        %v1122 = vsub.s32 7, %v1121
        %v1123 = vrot.slane %v1020, %v1122
        %v1124 = vlaneseq
        %v1125 = vshrl.u32 %v1124, 7
        %v1126 = vsub.s32 0, %v1125
        %v1127 = vrot.slane %v1023, %v1126
        %v1128 = vlaneseq
        %v1129 = vshrl.u32 %v1128, 7
        %v1130 = vsub.s32 1, %v1129
        %v1131 = vrot.slane %v1023, %v1130
        %v1132 = vlaneseq
        %v1133 = vshrl.u32 %v1132, 7
        %v1134 = vsub.s32 2, %v1133
        %v1135 = vrot.slane %v1023, %v1134
        %v1136 = vlaneseq
        %v1137 = vshrl.u32 %v1136, 7
        %v1138 = vsub.s32 3, %v1137
        %v1139 = vrot.slane %v1023, %v1138
        %v1140 = vlaneseq
        %v1141 = vshrl.u32 %v1140, 7
        %v1142 = vsub.s32 4, %v1141
        %v1143 = vrot.slane %v1023, %v1142
        %v1144 = vlaneseq
        %v1145 = vshrl.u32 %v1144, 7
        %v1146 = vsub.s32 5, %v1145
        %v1147 = vrot.slane %v1023, %v1146
        %v1148 = vlaneseq
        %v1149 = vshrl.u32 %v1148, 7
        %v1150 = vsub.s32 6, %v1149
        %v1151 = vrot.slane %v1023, %v1150
        %v1152 = vlaneseq
        %v1153 = vshrl.u32 %v1152, 7
        %v1154 = vsub.s32 7, %v1153
        %v1155 = vrot.slane %v1023, %v1154
        %v1188 = vsub.f32 %v716, %v1031
        %v1189 = vsub.f32 %v719, %v1035
        %v1190 = vsub.f32 %v722, %v1039
        %v1191 = vsub.f32 %v725, %v1043
        %v1192 = vsub.f32 %v728, %v1047
        %v1193 = vsub.f32 %v731, %v1051
        %v1194 = vsub.f32 %v734, %v1055
        %v1195 = vsub.f32 %v737, %v1059
        %v1196 = vsub.f32 %v740, %v1063
        %v1197 = vsub.f32 %v743, %v1067
        %v1198 = vsub.f32 %v746, %v1071
        %v1199 = vsub.f32 %v749, %v1075
        %v1200 = vsub.f32 %v752, %v1079
        %v1201 = vsub.f32 %v755, %v1083
        %v1202 = vsub.f32 %v758, %v1087
        %v1203 = vsub.f32 %v761, %v1091
        %v1204 = vsub.f32 %v764, %v1095
        %v1205 = vsub.f32 %v767, %v1099
        %v1206 = vsub.f32 %v770, %v1103
        %v1207 = vsub.f32 %v773, %v1107
        %v1208 = vsub.f32 %v776, %v1111
        %v1209 = vsub.f32 %v779, %v1115
        %v1210 = vsub.f32 %v782, %v1119
        %v1211 = vsub.f32 %v785, %v1123
        %v1212 = vsub.f32 %v788, %v1127
        %v1213 = vsub.f32 %v791, %v1131
        %v1214 = vsub.f32 %v794, %v1135
        %v1215 = vsub.f32 %v797, %v1139
        %v1216 = vsub.f32 %v800, %v1143
        %v1217 = vsub.f32 %v803, %v1147
        %v1218 = vsub.f32 %v806, %v1151
        %v1219 = vsub.f32 %v809, %v1155
        %v1220 = vmul.f32 %v1188, 1.442695
        %v1221 = vpow.pop %v1220
        %v1222 = vmul.f32 %v1189, 1.442695
        %v1223 = vpow.pop %v1222
        %v1224 = vmul.f32 %v1190, 1.442695
        %v1225 = vpow.pop %v1224
        %v1226 = vmul.f32 %v1191, 1.442695
        %v1227 = vpow.pop %v1226
        %v1228 = vmul.f32 %v1192, 1.442695
        %v1229 = vpow.pop %v1228
        %v1230 = vmul.f32 %v1193, 1.442695
        %v1231 = vpow.pop %v1230
        %v1232 = vmul.f32 %v1194, 1.442695
        %v1233 = vpow.pop %v1232
        %v1234 = vmul.f32 %v1195, 1.442695
        %v1235 = vpow.pop %v1234
        %v1236 = vmul.f32 %v1196, 1.442695
        %v1237 = vpow.pop %v1236
        %v1238 = vmul.f32 %v1197, 1.442695
        %v1239 = vpow.pop %v1238
        %v1240 = vmul.f32 %v1198, 1.442695
        %v1241 = vpow.pop %v1240
        %v1242 = vmul.f32 %v1199, 1.442695
        %v1243 = vpow.pop %v1242
        %v1244 = vmul.f32 %v1200, 1.442695
        %v1245 = vpow.pop %v1244
        %v1246 = vmul.f32 %v1201, 1.442695
        %v1247 = vpow.pop %v1246
        %v1248 = vmul.f32 %v1202, 1.442695
        %v1249 = vpow.pop %v1248
        %v1250 = vmul.f32 %v1203, 1.442695
        %v1251 = vpow.pop %v1250
        %v1252 = vmul.f32 %v1204, 1.442695
        %v1253 = vpow.pop %v1252
        %v1254 = vmul.f32 %v1205, 1.442695
        %v1255 = vpow.pop %v1254
        %v1256 = vmul.f32 %v1206, 1.442695
        %v1257 = vpow.pop %v1256
        %v1258 = vmul.f32 %v1207, 1.442695
        %v1259 = vpow.pop %v1258
        %v1260 = vmul.f32 %v1208, 1.442695
        %v1261 = vpow.pop %v1260
        %v1262 = vmul.f32 %v1209, 1.442695
        %v1263 = vpow.pop %v1262
        %v1264 = vmul.f32 %v1210, 1.442695
        %v1265 = vpow.pop %v1264
        %v1266 = vmul.f32 %v1211, 1.442695
        %v1267 = vpow.pop %v1266
        %v1268 = vmul.f32 %v1212, 1.442695
        %v1269 = vpow.pop %v1268
        %v1270 = vmul.f32 %v1213, 1.442695
        %v1271 = vpow.pop %v1270
        %v1272 = vmul.f32 %v1214, 1.442695
        %v1273 = vpow.pop %v1272
        %v1274 = vmul.f32 %v1215, 1.442695
        %v1275 = vpow.pop %v1274
        %v1276 = vmul.f32 %v1216, 1.442695
        %v1277 = vpow.pop %v1276
        %v1278 = vmul.f32 %v1217, 1.442695
        %v1279 = vpow.pop %v1278
        %v1280 = vmul.f32 %v1218, 1.442695
        %v1281 = vpow.pop %v1280
        %v1282 = vmul.f32 %v1219, 1.442695
        %v1283 = vpow.pop %v1282
        %1316 = vset.pattern.permute.xlu0 0
        %1317 = vperm.xlu0 %1316, %v1221
        %v1318 = vpop.permute.xlu0 %1317
        %1319 = vset.pattern.permute.xlu0 0
        %1320 = vperm.xlu0 %1319, %v1223
        %v1321 = vpop.permute.xlu0 %1320
        %1322 = vset.pattern.permute.xlu0 0
        %1323 = vperm.xlu0 %1322, %v1225
        %v1324 = vpop.permute.xlu0 %1323
        %1325 = vset.pattern.permute.xlu0 0
        %1326 = vperm.xlu0 %1325, %v1227
        %v1327 = vpop.permute.xlu0 %1326
        %1328 = vset.pattern.permute.xlu0 0
        %1329 = vperm.xlu0 %1328, %v1229
        %v1330 = vpop.permute.xlu0 %1329
        %1331 = vset.pattern.permute.xlu0 0
        %1332 = vperm.xlu0 %1331, %v1231
        %v1333 = vpop.permute.xlu0 %1332
        %1334 = vset.pattern.permute.xlu0 0
        %1335 = vperm.xlu0 %1334, %v1233
        %v1336 = vpop.permute.xlu0 %1335
        %1337 = vset.pattern.permute.xlu0 0
        %1338 = vperm.xlu0 %1337, %v1235
        %v1339 = vpop.permute.xlu0 %1338
        %1340 = vset.pattern.permute.xlu0 0
        %1341 = vperm.xlu0 %1340, %v1237
        %v1342 = vpop.permute.xlu0 %1341
        %1343 = vset.pattern.permute.xlu0 0
        %1344 = vperm.xlu0 %1343, %v1239
        %v1345 = vpop.permute.xlu0 %1344
        %1346 = vset.pattern.permute.xlu0 0
        %1347 = vperm.xlu0 %1346, %v1241
        %v1348 = vpop.permute.xlu0 %1347
        %1349 = vset.pattern.permute.xlu0 0
        %1350 = vperm.xlu0 %1349, %v1243
        %v1351 = vpop.permute.xlu0 %1350
        %1352 = vset.pattern.permute.xlu0 0
        %1353 = vperm.xlu0 %1352, %v1245
        %v1354 = vpop.permute.xlu0 %1353
        %1355 = vset.pattern.permute.xlu0 0
        %1356 = vperm.xlu0 %1355, %v1247
        %v1357 = vpop.permute.xlu0 %1356
        %1358 = vset.pattern.permute.xlu0 0
        %1359 = vperm.xlu0 %1358, %v1249
        %v1360 = vpop.permute.xlu0 %1359
        %1361 = vset.pattern.permute.xlu0 0
        %1362 = vperm.xlu0 %1361, %v1251
        %v1363 = vpop.permute.xlu0 %1362
        %1364 = vset.pattern.permute.xlu0 0
        %1365 = vperm.xlu0 %1364, %v1253
        %v1366 = vpop.permute.xlu0 %1365
        %1367 = vset.pattern.permute.xlu0 0
        %1368 = vperm.xlu0 %1367, %v1255
        %v1369 = vpop.permute.xlu0 %1368
        %1370 = vset.pattern.permute.xlu0 0
        %1371 = vperm.xlu0 %1370, %v1257
        %v1372 = vpop.permute.xlu0 %1371
        %1373 = vset.pattern.permute.xlu0 0
        %1374 = vperm.xlu0 %1373, %v1259
        %v1375 = vpop.permute.xlu0 %1374
        %1376 = vset.pattern.permute.xlu0 0
        %1377 = vperm.xlu0 %1376, %v1261
        %v1378 = vpop.permute.xlu0 %1377
        %1379 = vset.pattern.permute.xlu0 0
        %1380 = vperm.xlu0 %1379, %v1263
        %v1381 = vpop.permute.xlu0 %1380
        %1382 = vset.pattern.permute.xlu0 0
        %1383 = vperm.xlu0 %1382, %v1265
        %v1384 = vpop.permute.xlu0 %1383
        %1385 = vset.pattern.permute.xlu0 0
        %1386 = vperm.xlu0 %1385, %v1267
        %v1387 = vpop.permute.xlu0 %1386
        %1388 = vset.pattern.permute.xlu0 0
        %1389 = vperm.xlu0 %1388, %v1269
        %v1390 = vpop.permute.xlu0 %1389
        %1391 = vset.pattern.permute.xlu0 0
        %1392 = vperm.xlu0 %1391, %v1271
        %v1393 = vpop.permute.xlu0 %1392
        %1394 = vset.pattern.permute.xlu0 0
        %1395 = vperm.xlu0 %1394, %v1273
        %v1396 = vpop.permute.xlu0 %1395
        %1397 = vset.pattern.permute.xlu0 0
        %1398 = vperm.xlu0 %1397, %v1275
        %v1399 = vpop.permute.xlu0 %1398
        %1400 = vset.pattern.permute.xlu0 0
        %1401 = vperm.xlu0 %1400, %v1277
        %v1402 = vpop.permute.xlu0 %1401
        %1403 = vset.pattern.permute.xlu0 0
        %1404 = vperm.xlu0 %1403, %v1279
        %v1405 = vpop.permute.xlu0 %1404
        %1406 = vset.pattern.permute.xlu0 0
        %1407 = vperm.xlu0 %1406, %v1281
        %v1408 = vpop.permute.xlu0 %1407
        %1409 = vset.pattern.permute.xlu0 0
        %1410 = vperm.xlu0 %1409, %v1283
        %v1411 = vpop.permute.xlu0 %1410
        %v1412 = vlaneseq
        %v1413 = vshrl.u32 %v1412, 7
        %v1414 = vsub.s32 %v843, %v1413
        %v1415 = vrot.slane %v1318, %v1414
        %v1416 = vlaneseq
        %v1417 = vshrl.u32 %v1416, 7
        %v1418 = vsub.s32 %v843, %v1417
        %v1419 = vrot.slane %v1321, %v1418
        %v1420 = vlaneseq
        %v1421 = vshrl.u32 %v1420, 7
        %v1422 = vsub.s32 %v843, %v1421
        %v1423 = vrot.slane %v1324, %v1422
        %v1424 = vlaneseq
        %v1425 = vshrl.u32 %v1424, 7
        %v1426 = vsub.s32 %v843, %v1425
        %v1427 = vrot.slane %v1327, %v1426
        %v1428 = vlaneseq
        %v1429 = vshrl.u32 %v1428, 7
        %v1430 = vsub.s32 %v843, %v1429
        %v1431 = vrot.slane %v1330, %v1430
        %v1432 = vlaneseq
        %v1433 = vshrl.u32 %v1432, 7
        %v1434 = vsub.s32 %v843, %v1433
        %v1435 = vrot.slane %v1333, %v1434
        %v1436 = vlaneseq
        %v1437 = vshrl.u32 %v1436, 7
        %v1438 = vsub.s32 %v843, %v1437
        %v1439 = vrot.slane %v1336, %v1438
        %v1440 = vlaneseq
        %v1441 = vshrl.u32 %v1440, 7
        %v1442 = vsub.s32 %v843, %v1441
        %v1443 = vrot.slane %v1339, %v1442
        %v1444 = vlaneseq
        %v1445 = vshrl.u32 %v1444, 7
        %v1446 = vsub.s32 %v843, %v1445
        %v1447 = vrot.slane %v1342, %v1446
        %v1448 = vlaneseq
        %v1449 = vshrl.u32 %v1448, 7
        %v1450 = vsub.s32 %v843, %v1449
        %v1451 = vrot.slane %v1345, %v1450
        %v1452 = vlaneseq
        %v1453 = vshrl.u32 %v1452, 7
        %v1454 = vsub.s32 %v843, %v1453
        %v1455 = vrot.slane %v1348, %v1454
        %v1456 = vlaneseq
        %v1457 = vshrl.u32 %v1456, 7
        %v1458 = vsub.s32 %v843, %v1457
        %v1459 = vrot.slane %v1351, %v1458
        %v1460 = vlaneseq
        %v1461 = vshrl.u32 %v1460, 7
        %v1462 = vsub.s32 %v843, %v1461
        %v1463 = vrot.slane %v1354, %v1462
        %v1464 = vlaneseq
        %v1465 = vshrl.u32 %v1464, 7
        %v1466 = vsub.s32 %v843, %v1465
        %v1467 = vrot.slane %v1357, %v1466
        %v1468 = vlaneseq
        %v1469 = vshrl.u32 %v1468, 7
        %v1470 = vsub.s32 %v843, %v1469
        %v1471 = vrot.slane %v1360, %v1470
        %v1472 = vlaneseq
        %v1473 = vshrl.u32 %v1472, 7
        %v1474 = vsub.s32 %v843, %v1473
        %v1475 = vrot.slane %v1363, %v1474
        %v1476 = vlaneseq
        %v1477 = vshrl.u32 %v1476, 7
        %v1478 = vsub.s32 %v843, %v1477
        %v1479 = vrot.slane %v1366, %v1478
        %v1480 = vlaneseq
        %v1481 = vshrl.u32 %v1480, 7
        %v1482 = vsub.s32 %v843, %v1481
        %v1483 = vrot.slane %v1369, %v1482
        %v1484 = vlaneseq
        %v1485 = vshrl.u32 %v1484, 7
        %v1486 = vsub.s32 %v843, %v1485
        %v1487 = vrot.slane %v1372, %v1486
        %v1488 = vlaneseq
        %v1489 = vshrl.u32 %v1488, 7
        %v1490 = vsub.s32 %v843, %v1489
        %v1491 = vrot.slane %v1375, %v1490
        %v1492 = vlaneseq
        %v1493 = vshrl.u32 %v1492, 7
        %v1494 = vsub.s32 %v843, %v1493
        %v1495 = vrot.slane %v1378, %v1494
        %v1496 = vlaneseq
        %v1497 = vshrl.u32 %v1496, 7
        %v1498 = vsub.s32 %v843, %v1497
        %v1499 = vrot.slane %v1381, %v1498
        %v1500 = vlaneseq
        %v1501 = vshrl.u32 %v1500, 7
        %v1502 = vsub.s32 %v843, %v1501
        %v1503 = vrot.slane %v1384, %v1502
        %v1504 = vlaneseq
        %v1505 = vshrl.u32 %v1504, 7
        %v1506 = vsub.s32 %v843, %v1505
        %v1507 = vrot.slane %v1387, %v1506
        %v1508 = vlaneseq
        %v1509 = vshrl.u32 %v1508, 7
        %v1510 = vsub.s32 %v843, %v1509
        %v1511 = vrot.slane %v1390, %v1510
        %v1512 = vlaneseq
        %v1513 = vshrl.u32 %v1512, 7
        %v1514 = vsub.s32 %v843, %v1513
        %v1515 = vrot.slane %v1393, %v1514
        %v1516 = vlaneseq
        %v1517 = vshrl.u32 %v1516, 7
        %v1518 = vsub.s32 %v843, %v1517
        %v1519 = vrot.slane %v1396, %v1518
        %v1520 = vlaneseq
        %v1521 = vshrl.u32 %v1520, 7
        %v1522 = vsub.s32 %v843, %v1521
        %v1523 = vrot.slane %v1399, %v1522
        %v1524 = vlaneseq
        %v1525 = vshrl.u32 %v1524, 7
        %v1526 = vsub.s32 %v843, %v1525
        %v1527 = vrot.slane %v1402, %v1526
        %v1528 = vlaneseq
        %v1529 = vshrl.u32 %v1528, 7
        %v1530 = vsub.s32 %v843, %v1529
        %v1531 = vrot.slane %v1405, %v1530
        %v1532 = vlaneseq
        %v1533 = vshrl.u32 %v1532, 7
        %v1534 = vsub.s32 %v843, %v1533
        %v1535 = vrot.slane %v1408, %v1534
        %v1536 = vlaneseq
        %v1537 = vshrl.u32 %v1536, 7
        %v1538 = vsub.s32 %v843, %v1537
        %v1539 = vrot.slane %v1411, %v1538
        %v1540 = vsel %vm972, %v1419, %v1415
        %v1541 = vsel %vm974, %v1423, %v1540
        %v1542 = vsel %vm976, %v1427, %v1541
        %v1543 = vsel %vm978, %v1431, %v1542
        %v1544 = vsel %vm980, %v1435, %v1543
        %v1545 = vsel %vm982, %v1439, %v1544
        %v1546 = vsel %vm984, %v1443, %v1545
        %v1547 = vsel %vm972, %v1451, %v1447
        %v1548 = vsel %vm974, %v1455, %v1547
        %v1549 = vsel %vm976, %v1459, %v1548
        %v1550 = vsel %vm978, %v1463, %v1549
        %v1551 = vsel %vm980, %v1467, %v1550
        %v1552 = vsel %vm982, %v1471, %v1551
        %v1553 = vsel %vm984, %v1475, %v1552
        %v1554 = vsel %vm972, %v1483, %v1479
        %v1555 = vsel %vm974, %v1487, %v1554
        %v1556 = vsel %vm976, %v1491, %v1555
        %v1557 = vsel %vm978, %v1495, %v1556
        %v1558 = vsel %vm980, %v1499, %v1557
        %v1559 = vsel %vm982, %v1503, %v1558
        %v1560 = vsel %vm984, %v1507, %v1559
        %v1561 = vsel %vm972, %v1515, %v1511
        %v1562 = vsel %vm974, %v1519, %v1561
        %v1563 = vsel %vm976, %v1523, %v1562
        %v1564 = vsel %vm978, %v1527, %v1563
        %v1565 = vsel %vm980, %v1531, %v1564
        %v1566 = vsel %vm982, %v1535, %v1565
        %v1567 = vsel %vm984, %v1539, %v1566
        %v1572 = vsel %vm1011, %v1546, 0.0
        %1573 = vadd.xlane.f32.xlu0 %v1572
        %v1574 = vpop.xlane.xlu0 %1573
        %v1575 = vsel %vm1011, %v1553, 0.0
        %1576 = vadd.xlane.f32.xlu0 %v1575
        %v1577 = vpop.xlane.xlu0 %1576
        %v1578 = vsel %vm1011, %v1560, 0.0
        %1579 = vadd.xlane.f32.xlu0 %v1578
        %v1580 = vpop.xlane.xlu0 %1579
        %v1581 = vsel %vm1011, %v1567, 0.0
        %1582 = vadd.xlane.f32.xlu0 %v1581
        %v1583 = vpop.xlane.xlu0 %1582
        %v1584 = vrcp.pop %v1574
        %v1585 = vrcp.pop %v1577
        %v1586 = vrcp.pop %v1580
        %v1587 = vrcp.pop %v1583
        %v1592 = vlaneseq
        %v1593 = vshrl.u32 %v1592, 7
        %v1594 = vsub.s32 0, %v1593
        %v1595 = vrot.slane %v1584, %v1594
        %v1596 = vlaneseq
        %v1597 = vshrl.u32 %v1596, 7
        %v1598 = vsub.s32 1, %v1597
        %v1599 = vrot.slane %v1584, %v1598
        %v1600 = vlaneseq
        %v1601 = vshrl.u32 %v1600, 7
        %v1602 = vsub.s32 2, %v1601
        %v1603 = vrot.slane %v1584, %v1602
        %v1604 = vlaneseq
        %v1605 = vshrl.u32 %v1604, 7
        %v1606 = vsub.s32 3, %v1605
        %v1607 = vrot.slane %v1584, %v1606
        %v1608 = vlaneseq
        %v1609 = vshrl.u32 %v1608, 7
        %v1610 = vsub.s32 4, %v1609
        %v1611 = vrot.slane %v1584, %v1610
        %v1612 = vlaneseq
        %v1613 = vshrl.u32 %v1612, 7
        %v1614 = vsub.s32 5, %v1613
        %v1615 = vrot.slane %v1584, %v1614
        %v1616 = vlaneseq
        %v1617 = vshrl.u32 %v1616, 7
        %v1618 = vsub.s32 6, %v1617
        %v1619 = vrot.slane %v1584, %v1618
        %v1620 = vlaneseq
        %v1621 = vshrl.u32 %v1620, 7
        %v1622 = vsub.s32 7, %v1621
        %v1623 = vrot.slane %v1584, %v1622
        %v1624 = vlaneseq
        %v1625 = vshrl.u32 %v1624, 7
        %v1626 = vsub.s32 0, %v1625
        %v1627 = vrot.slane %v1585, %v1626
        %v1628 = vlaneseq
        %v1629 = vshrl.u32 %v1628, 7
        %v1630 = vsub.s32 1, %v1629
        %v1631 = vrot.slane %v1585, %v1630
        %v1632 = vlaneseq
        %v1633 = vshrl.u32 %v1632, 7
        %v1634 = vsub.s32 2, %v1633
        %v1635 = vrot.slane %v1585, %v1634
        %v1636 = vlaneseq
        %v1637 = vshrl.u32 %v1636, 7
        %v1638 = vsub.s32 3, %v1637
        %v1639 = vrot.slane %v1585, %v1638
        %v1640 = vlaneseq
        %v1641 = vshrl.u32 %v1640, 7
        %v1642 = vsub.s32 4, %v1641
        %v1643 = vrot.slane %v1585, %v1642
        %v1644 = vlaneseq
        %v1645 = vshrl.u32 %v1644, 7
        %v1646 = vsub.s32 5, %v1645
        %v1647 = vrot.slane %v1585, %v1646
        %v1648 = vlaneseq
        %v1649 = vshrl.u32 %v1648, 7
        %v1650 = vsub.s32 6, %v1649
        %v1651 = vrot.slane %v1585, %v1650
        %v1652 = vlaneseq
        %v1653 = vshrl.u32 %v1652, 7
        %v1654 = vsub.s32 7, %v1653
        %v1655 = vrot.slane %v1585, %v1654
        %v1656 = vlaneseq
        %v1657 = vshrl.u32 %v1656, 7
        %v1658 = vsub.s32 0, %v1657
        %v1659 = vrot.slane %v1586, %v1658
        %v1660 = vlaneseq
        %v1661 = vshrl.u32 %v1660, 7
        %v1662 = vsub.s32 1, %v1661
        %v1663 = vrot.slane %v1586, %v1662
        %v1664 = vlaneseq
        %v1665 = vshrl.u32 %v1664, 7
        %v1666 = vsub.s32 2, %v1665
        %v1667 = vrot.slane %v1586, %v1666
        %v1668 = vlaneseq
        %v1669 = vshrl.u32 %v1668, 7
        %v1670 = vsub.s32 3, %v1669
        %v1671 = vrot.slane %v1586, %v1670
        %v1672 = vlaneseq
        %v1673 = vshrl.u32 %v1672, 7
        %v1674 = vsub.s32 4, %v1673
        %v1675 = vrot.slane %v1586, %v1674
        %v1676 = vlaneseq
        %v1677 = vshrl.u32 %v1676, 7
        %v1678 = vsub.s32 5, %v1677
        %v1679 = vrot.slane %v1586, %v1678
        %v1680 = vlaneseq
        %v1681 = vshrl.u32 %v1680, 7
        %v1682 = vsub.s32 6, %v1681
        %v1683 = vrot.slane %v1586, %v1682
        %v1684 = vlaneseq
        %v1685 = vshrl.u32 %v1684, 7
        %v1686 = vsub.s32 7, %v1685
        %v1687 = vrot.slane %v1586, %v1686
        %v1688 = vlaneseq
        %v1689 = vshrl.u32 %v1688, 7
        %v1690 = vsub.s32 0, %v1689
        %v1691 = vrot.slane %v1587, %v1690
        %v1692 = vlaneseq
        %v1693 = vshrl.u32 %v1692, 7
        %v1694 = vsub.s32 1, %v1693
        %v1695 = vrot.slane %v1587, %v1694
        %v1696 = vlaneseq
        %v1697 = vshrl.u32 %v1696, 7
        %v1698 = vsub.s32 2, %v1697
        %v1699 = vrot.slane %v1587, %v1698
        %v1700 = vlaneseq
        %v1701 = vshrl.u32 %v1700, 7
        %v1702 = vsub.s32 3, %v1701
        %v1703 = vrot.slane %v1587, %v1702
        %v1704 = vlaneseq
        %v1705 = vshrl.u32 %v1704, 7
        %v1706 = vsub.s32 4, %v1705
        %v1707 = vrot.slane %v1587, %v1706
        %v1708 = vlaneseq
        %v1709 = vshrl.u32 %v1708, 7
        %v1710 = vsub.s32 5, %v1709
        %v1711 = vrot.slane %v1587, %v1710
        %v1712 = vlaneseq
        %v1713 = vshrl.u32 %v1712, 7
        %v1714 = vsub.s32 6, %v1713
        %v1715 = vrot.slane %v1587, %v1714
        %v1716 = vlaneseq
        %v1717 = vshrl.u32 %v1716, 7
        %v1718 = vsub.s32 7, %v1717
        %v1719 = vrot.slane %v1587, %v1718
        %v1752 = vmul.f32 %v1221, %v1595
        %v1753 = vmul.f32 %v1223, %v1599
        %v1754 = vmul.f32 %v1225, %v1603
        %v1755 = vmul.f32 %v1227, %v1607
        %v1756 = vmul.f32 %v1229, %v1611
        %v1757 = vmul.f32 %v1231, %v1615
        %v1758 = vmul.f32 %v1233, %v1619
        %v1759 = vmul.f32 %v1235, %v1623
        %v1760 = vmul.f32 %v1237, %v1627
        %v1761 = vmul.f32 %v1239, %v1631
        %v1762 = vmul.f32 %v1241, %v1635
        %v1763 = vmul.f32 %v1243, %v1639
        %v1764 = vmul.f32 %v1245, %v1643
        %v1765 = vmul.f32 %v1247, %v1647
        %v1766 = vmul.f32 %v1249, %v1651
        %v1767 = vmul.f32 %v1251, %v1655
        %v1768 = vmul.f32 %v1253, %v1659
        %v1769 = vmul.f32 %v1255, %v1663
        %v1770 = vmul.f32 %v1257, %v1667
        %v1771 = vmul.f32 %v1259, %v1671
        %v1772 = vmul.f32 %v1261, %v1675
        %v1773 = vmul.f32 %v1263, %v1679
        %v1774 = vmul.f32 %v1265, %v1683
        %v1775 = vmul.f32 %v1267, %v1687
        %v1776 = vmul.f32 %v1269, %v1691
        %v1777 = vmul.f32 %v1271, %v1695
        %v1778 = vmul.f32 %v1273, %v1699
        %v1779 = vmul.f32 %v1275, %v1703
        %v1780 = vmul.f32 %v1277, %v1707
        %v1781 = vmul.f32 %v1279, %v1711
        %v1782 = vmul.f32 %v1281, %v1715
        %v1783 = vmul.f32 %v1283, %v1719
        %1816 = vset.pattern.permute.xlu0 0
        %1817 = vperm.xlu0 %1816, %v1752
        %v1818 = vpop.permute.xlu0 %1817
        %1819 = vset.pattern.permute.xlu0 0
        %1820 = vperm.xlu0 %1819, %v1753
        %v1821 = vpop.permute.xlu0 %1820
        %1822 = vset.pattern.permute.xlu0 0
        %1823 = vperm.xlu0 %1822, %v1754
        %v1824 = vpop.permute.xlu0 %1823
        %1825 = vset.pattern.permute.xlu0 0
        %1826 = vperm.xlu0 %1825, %v1755
        %v1827 = vpop.permute.xlu0 %1826
        %1828 = vset.pattern.permute.xlu0 0
        %1829 = vperm.xlu0 %1828, %v1756
        %v1830 = vpop.permute.xlu0 %1829
        %1831 = vset.pattern.permute.xlu0 0
        %1832 = vperm.xlu0 %1831, %v1757
        %v1833 = vpop.permute.xlu0 %1832
        %1834 = vset.pattern.permute.xlu0 0
        %1835 = vperm.xlu0 %1834, %v1758
        %v1836 = vpop.permute.xlu0 %1835
        %1837 = vset.pattern.permute.xlu0 0
        %1838 = vperm.xlu0 %1837, %v1759
        %v1839 = vpop.permute.xlu0 %1838
        %1840 = vset.pattern.permute.xlu0 0
        %1841 = vperm.xlu0 %1840, %v1760
        %v1842 = vpop.permute.xlu0 %1841
        %1843 = vset.pattern.permute.xlu0 0
        %1844 = vperm.xlu0 %1843, %v1761
        %v1845 = vpop.permute.xlu0 %1844
        %1846 = vset.pattern.permute.xlu0 0
        %1847 = vperm.xlu0 %1846, %v1762
        %v1848 = vpop.permute.xlu0 %1847
        %1849 = vset.pattern.permute.xlu0 0
        %1850 = vperm.xlu0 %1849, %v1763
        %v1851 = vpop.permute.xlu0 %1850
        %1852 = vset.pattern.permute.xlu0 0
        %1853 = vperm.xlu0 %1852, %v1764
        %v1854 = vpop.permute.xlu0 %1853
        %1855 = vset.pattern.permute.xlu0 0
        %1856 = vperm.xlu0 %1855, %v1765
        %v1857 = vpop.permute.xlu0 %1856
        %1858 = vset.pattern.permute.xlu0 0
        %1859 = vperm.xlu0 %1858, %v1766
        %v1860 = vpop.permute.xlu0 %1859
        %1861 = vset.pattern.permute.xlu0 0
        %1862 = vperm.xlu0 %1861, %v1767
        %v1863 = vpop.permute.xlu0 %1862
        %1864 = vset.pattern.permute.xlu0 0
        %1865 = vperm.xlu0 %1864, %v1768
        %v1866 = vpop.permute.xlu0 %1865
        %1867 = vset.pattern.permute.xlu0 0
        %1868 = vperm.xlu0 %1867, %v1769
        %v1869 = vpop.permute.xlu0 %1868
        %1870 = vset.pattern.permute.xlu0 0
        %1871 = vperm.xlu0 %1870, %v1770
        %v1872 = vpop.permute.xlu0 %1871
        %1873 = vset.pattern.permute.xlu0 0
        %1874 = vperm.xlu0 %1873, %v1771
        %v1875 = vpop.permute.xlu0 %1874
        %1876 = vset.pattern.permute.xlu0 0
        %1877 = vperm.xlu0 %1876, %v1772
        %v1878 = vpop.permute.xlu0 %1877
        %1879 = vset.pattern.permute.xlu0 0
        %1880 = vperm.xlu0 %1879, %v1773
        %v1881 = vpop.permute.xlu0 %1880
        %1882 = vset.pattern.permute.xlu0 0
        %1883 = vperm.xlu0 %1882, %v1774
        %v1884 = vpop.permute.xlu0 %1883
        %1885 = vset.pattern.permute.xlu0 0
        %1886 = vperm.xlu0 %1885, %v1775
        %v1887 = vpop.permute.xlu0 %1886
        %1888 = vset.pattern.permute.xlu0 0
        %1889 = vperm.xlu0 %1888, %v1776
        %v1890 = vpop.permute.xlu0 %1889
        %1891 = vset.pattern.permute.xlu0 0
        %1892 = vperm.xlu0 %1891, %v1777
        %v1893 = vpop.permute.xlu0 %1892
        %1894 = vset.pattern.permute.xlu0 0
        %1895 = vperm.xlu0 %1894, %v1778
        %v1896 = vpop.permute.xlu0 %1895
        %1897 = vset.pattern.permute.xlu0 0
        %1898 = vperm.xlu0 %1897, %v1779
        %v1899 = vpop.permute.xlu0 %1898
        %1900 = vset.pattern.permute.xlu0 0
        %1901 = vperm.xlu0 %1900, %v1780
        %v1902 = vpop.permute.xlu0 %1901
        %1903 = vset.pattern.permute.xlu0 0
        %1904 = vperm.xlu0 %1903, %v1781
        %v1905 = vpop.permute.xlu0 %1904
        %1906 = vset.pattern.permute.xlu0 0
        %1907 = vperm.xlu0 %1906, %v1782
        %v1908 = vpop.permute.xlu0 %1907
        %1909 = vset.pattern.permute.xlu0 0
        %1910 = vperm.xlu0 %1909, %v1783
        %v1911 = vpop.permute.xlu0 %1910
        %v1912 = vlaneseq
        %v1913 = vshrl.u32 %v1912, 7
        %v1914 = vsub.s32 %v843, %v1913
        %v1915 = vrot.slane %v1818, %v1914
        %v1916 = vlaneseq
        %v1917 = vshrl.u32 %v1916, 7
        %v1918 = vsub.s32 %v843, %v1917
        %v1919 = vrot.slane %v1821, %v1918
        %v1920 = vlaneseq
        %v1921 = vshrl.u32 %v1920, 7
        %v1922 = vsub.s32 %v843, %v1921
        %v1923 = vrot.slane %v1824, %v1922
        %v1924 = vlaneseq
        %v1925 = vshrl.u32 %v1924, 7
        %v1926 = vsub.s32 %v843, %v1925
        %v1927 = vrot.slane %v1827, %v1926
        %v1928 = vlaneseq
        %v1929 = vshrl.u32 %v1928, 7
        %v1930 = vsub.s32 %v843, %v1929
        %v1931 = vrot.slane %v1830, %v1930
        %v1932 = vlaneseq
        %v1933 = vshrl.u32 %v1932, 7
        %v1934 = vsub.s32 %v843, %v1933
        %v1935 = vrot.slane %v1833, %v1934
        %v1936 = vlaneseq
        %v1937 = vshrl.u32 %v1936, 7
        %v1938 = vsub.s32 %v843, %v1937
        %v1939 = vrot.slane %v1836, %v1938
        %v1940 = vlaneseq
        %v1941 = vshrl.u32 %v1940, 7
        %v1942 = vsub.s32 %v843, %v1941
        %v1943 = vrot.slane %v1839, %v1942
        %v1944 = vlaneseq
        %v1945 = vshrl.u32 %v1944, 7
        %v1946 = vsub.s32 %v843, %v1945
        %v1947 = vrot.slane %v1842, %v1946
        %v1948 = vlaneseq
        %v1949 = vshrl.u32 %v1948, 7
        %v1950 = vsub.s32 %v843, %v1949
        %v1951 = vrot.slane %v1845, %v1950
        %v1952 = vlaneseq
        %v1953 = vshrl.u32 %v1952, 7
        %v1954 = vsub.s32 %v843, %v1953
        %v1955 = vrot.slane %v1848, %v1954
        %v1956 = vlaneseq
        %v1957 = vshrl.u32 %v1956, 7
        %v1958 = vsub.s32 %v843, %v1957
        %v1959 = vrot.slane %v1851, %v1958
        %v1960 = vlaneseq
        %v1961 = vshrl.u32 %v1960, 7
        %v1962 = vsub.s32 %v843, %v1961
        %v1963 = vrot.slane %v1854, %v1962
        %v1964 = vlaneseq
        %v1965 = vshrl.u32 %v1964, 7
        %v1966 = vsub.s32 %v843, %v1965
        %v1967 = vrot.slane %v1857, %v1966
        %v1968 = vlaneseq
        %v1969 = vshrl.u32 %v1968, 7
        %v1970 = vsub.s32 %v843, %v1969
        %v1971 = vrot.slane %v1860, %v1970
        %v1972 = vlaneseq
        %v1973 = vshrl.u32 %v1972, 7
        %v1974 = vsub.s32 %v843, %v1973
        %v1975 = vrot.slane %v1863, %v1974
        %v1976 = vlaneseq
        %v1977 = vshrl.u32 %v1976, 7
        %v1978 = vsub.s32 %v843, %v1977
        %v1979 = vrot.slane %v1866, %v1978
        %v1980 = vlaneseq
        %v1981 = vshrl.u32 %v1980, 7
        %v1982 = vsub.s32 %v843, %v1981
        %v1983 = vrot.slane %v1869, %v1982
        %v1984 = vlaneseq
        %v1985 = vshrl.u32 %v1984, 7
        %v1986 = vsub.s32 %v843, %v1985
        %v1987 = vrot.slane %v1872, %v1986
        %v1988 = vlaneseq
        %v1989 = vshrl.u32 %v1988, 7
        %v1990 = vsub.s32 %v843, %v1989
        %v1991 = vrot.slane %v1875, %v1990
        %v1992 = vlaneseq
        %v1993 = vshrl.u32 %v1992, 7
        %v1994 = vsub.s32 %v843, %v1993
        %v1995 = vrot.slane %v1878, %v1994
        %v1996 = vlaneseq
        %v1997 = vshrl.u32 %v1996, 7
        %v1998 = vsub.s32 %v843, %v1997
        %v1999 = vrot.slane %v1881, %v1998
        %v2000 = vlaneseq
        %v2001 = vshrl.u32 %v2000, 7
        %v2002 = vsub.s32 %v843, %v2001
        %v2003 = vrot.slane %v1884, %v2002
        %v2004 = vlaneseq
        %v2005 = vshrl.u32 %v2004, 7
        %v2006 = vsub.s32 %v843, %v2005
        %v2007 = vrot.slane %v1887, %v2006
        %v2008 = vlaneseq
        %v2009 = vshrl.u32 %v2008, 7
        %v2010 = vsub.s32 %v843, %v2009
        %v2011 = vrot.slane %v1890, %v2010
        %v2012 = vlaneseq
        %v2013 = vshrl.u32 %v2012, 7
        %v2014 = vsub.s32 %v843, %v2013
        %v2015 = vrot.slane %v1893, %v2014
        %v2016 = vlaneseq
        %v2017 = vshrl.u32 %v2016, 7
        %v2018 = vsub.s32 %v843, %v2017
        %v2019 = vrot.slane %v1896, %v2018
        %v2020 = vlaneseq
        %v2021 = vshrl.u32 %v2020, 7
        %v2022 = vsub.s32 %v843, %v2021
        %v2023 = vrot.slane %v1899, %v2022
        %v2024 = vlaneseq
        %v2025 = vshrl.u32 %v2024, 7
        %v2026 = vsub.s32 %v843, %v2025
        %v2027 = vrot.slane %v1902, %v2026
        %v2028 = vlaneseq
        %v2029 = vshrl.u32 %v2028, 7
        %v2030 = vsub.s32 %v843, %v2029
        %v2031 = vrot.slane %v1905, %v2030
        %v2032 = vlaneseq
        %v2033 = vshrl.u32 %v2032, 7
        %v2034 = vsub.s32 %v843, %v2033
        %v2035 = vrot.slane %v1908, %v2034
        %v2036 = vlaneseq
        %v2037 = vshrl.u32 %v2036, 7
        %v2038 = vsub.s32 %v843, %v2037
        %v2039 = vrot.slane %v1911, %v2038
        %v2040 = vsel %vm972, %v1919, %v1915
        %v2041 = vsel %vm974, %v1923, %v2040
        %v2042 = vsel %vm976, %v1927, %v2041
        %v2043 = vsel %vm978, %v1931, %v2042
        %v2044 = vsel %vm980, %v1935, %v2043
        %v2045 = vsel %vm982, %v1939, %v2044
        %v2046 = vsel %vm984, %v1943, %v2045
        %v2047 = vsel %vm972, %v1951, %v1947
        %v2048 = vsel %vm974, %v1955, %v2047
        %v2049 = vsel %vm976, %v1959, %v2048
        %v2050 = vsel %vm978, %v1963, %v2049
        %v2051 = vsel %vm980, %v1967, %v2050
        %v2052 = vsel %vm982, %v1971, %v2051
        %v2053 = vsel %vm984, %v1975, %v2052
        %v2054 = vsel %vm972, %v1983, %v1979
        %v2055 = vsel %vm974, %v1987, %v2054
        %v2056 = vsel %vm976, %v1991, %v2055
        %v2057 = vsel %vm978, %v1995, %v2056
        %v2058 = vsel %vm980, %v1999, %v2057
        %v2059 = vsel %vm982, %v2003, %v2058
        %v2060 = vsel %vm984, %v2007, %v2059
        %v2061 = vsel %vm972, %v2015, %v2011
        %v2062 = vsel %vm974, %v2019, %v2061
        %v2063 = vsel %vm976, %v2023, %v2062
        %v2064 = vsel %vm978, %v2027, %v2063
        %v2065 = vsel %vm980, %v2031, %v2064
        %v2066 = vsel %vm982, %v2035, %v2065
        %v2067 = vsel %vm984, %v2039, %v2066
        %2072 = vst.msk [vmem:[%s272] sm:$0xff] %vm1011, %v2046
        %2073 = vst.msk [vmem:[%s272 + $0x8] sm:$0xff] %vm1011, %v2053
        %2074 = vst.msk [vmem:[%s272 + $0x10] sm:$0xff] %vm1011, %v2060
        %2075 = vst.msk [vmem:[%s272 + $0x18] sm:$0xff] %vm1011, %v2067
        %v2076 = vsel %vm1011, %v1915, 0
        %2078 = vmatprep.subr.mxu0 0.0
        %2079 = vmatpush1.msra.mxu0 0.0
        %2080 = vmatprep.subr.mxu0 0.0
        %2081 = vmatpush1.msra.mxu0 0.0
        %2082 = vmatprep.subr.mxu0 0.0
        %2083 = vmatpush1.msra.mxu0 0.0
        %2084 = vmatprep.subr.mxu0 0.0
        %2085 = vmatpush1.msra.mxu0 0.0
        %2086 = vmatprep.subr.mxu0 0.0
        %2087 = vmatpush1.msra.mxu0 0.0
        %2088 = vmatprep.subr.mxu0 0.0
        %2089 = vmatpush1.msra.mxu0 0.0
        %2090 = vmatprep.subr.mxu0 0.0
        %2091 = vmatpush1.msra.mxu0 0.0
        %2092 = vmatprep.subr.mxu0 0.0
        %2093 = vmatpush1.msra.mxu0 0.0
        %2094 = vmatprep.subr.mxu0 0.0
        %2095 = vmatpush1.msra.mxu0 0.0
        %2096 = vmatprep.subr.mxu0 0.0
        %2097 = vmatpush1.msra.mxu0 0.0
        %2098 = vmatprep.subr.mxu0 0.0
        %2099 = vmatpush1.msra.mxu0 0.0
        %2100 = vmatprep.subr.mxu0 0.0
        %2101 = vmatpush1.msra.mxu0 0.0
        %2102 = vmatprep.subr.mxu0 0.0
        %2103 = vmatpush1.msra.mxu0 0.0
        %2104 = vmatprep.subr.mxu0 0.0
        %2105 = vmatpush1.msra.mxu0 0.0
        %2106 = vmatprep.subr.mxu0 0.0
        %2107 = vmatpush1.msra.mxu0 0.0
        %2108 = vmatprep.subr.mxu0 0.0
        %2109 = vmatpush1.msra.mxu0 %v274
        %2110 = vmatprep.subr.mxu0 0.0
        %2111 = vmatpush2.msra.mxu0 0.0
        %2112 = vmatprep.subr.mxu0 0.0
        %2113 = vmatpush2.msra.mxu0 0.0
        %2114 = vmatprep.subr.mxu0 0.0
        %2115 = vmatpush2.msra.mxu0 0.0
        %2116 = vmatprep.subr.mxu0 0.0
        %2117 = vmatpush2.msra.mxu0 0.0
        %2118 = vmatprep.subr.mxu0 0.0
        %2119 = vmatpush2.msra.mxu0 0.0
        %2120 = vmatprep.subr.mxu0 0.0
        %2121 = vmatpush2.msra.mxu0 0.0
        %2122 = vmatprep.subr.mxu0 0.0
        %2123 = vmatpush2.msra.mxu0 0.0
        %2124 = vmatprep.subr.mxu0 0.0
        %2125 = vmatpush2.msra.mxu0 0.0
        %2126 = vmatprep.subr.mxu0 0.0
        %2127 = vmatpush2.msra.mxu0 0.0
        %2128 = vmatprep.subr.mxu0 0.0
        %2129 = vmatpush2.msra.mxu0 0.0
        %2130 = vmatprep.subr.mxu0 0.0
        %2131 = vmatpush2.msra.mxu0 0.0
        %2132 = vmatprep.subr.mxu0 0.0
        %2133 = vmatpush2.msra.mxu0 0.0
        %2134 = vmatprep.subr.mxu0 0.0
        %2135 = vmatpush2.msra.mxu0 0.0
        %2136 = vmatprep.subr.mxu0 0.0
        %2137 = vmatpush2.msra.mxu0 0.0
        %2138 = vmatprep.subr.mxu0 0.0
        %2139 = vmatpush2.msra.mxu0 0.0
        %2140 = vmatprep.subr.mxu0 0.0
        %2141 = vmatpush2.msra.mxu0 0.0
        %2142 = vmatprep.mubr.f32.mxu0 0.0
        %2143 = vmatmul.mubr.f32.gmra.mxu0 %v2076
        %v2144 = vpop.f32.mrf.mxu0
        %v2145 = vadd.f32 0.0, %v2144
        %v2146 = vpop.f32.mrf.mxu0
        %2147 = vdwg.mxu0
        %v2148 = vsel %vm1011, %v1919, 0
        %2150 = vmatprep.subr.mxu0 0.0
        %2151 = vmatpush1.msra.mxu0 0.0
        %2152 = vmatprep.subr.mxu0 0.0
        %2153 = vmatpush1.msra.mxu0 0.0
        %2154 = vmatprep.subr.mxu0 0.0
        %2155 = vmatpush1.msra.mxu0 0.0
        %2156 = vmatprep.subr.mxu0 0.0
        %2157 = vmatpush1.msra.mxu0 0.0
        %2158 = vmatprep.subr.mxu0 0.0
        %2159 = vmatpush1.msra.mxu0 0.0
        %2160 = vmatprep.subr.mxu0 0.0
        %2161 = vmatpush1.msra.mxu0 0.0
        %2162 = vmatprep.subr.mxu0 0.0
        %2163 = vmatpush1.msra.mxu0 0.0
        %2164 = vmatprep.subr.mxu0 0.0
        %2165 = vmatpush1.msra.mxu0 0.0
        %2166 = vmatprep.subr.mxu0 0.0
        %2167 = vmatpush1.msra.mxu0 0.0
        %2168 = vmatprep.subr.mxu0 0.0
        %2169 = vmatpush1.msra.mxu0 0.0
        %2170 = vmatprep.subr.mxu0 0.0
        %2171 = vmatpush1.msra.mxu0 0.0
        %2172 = vmatprep.subr.mxu0 0.0
        %2173 = vmatpush1.msra.mxu0 0.0
        %2174 = vmatprep.subr.mxu0 0.0
        %2175 = vmatpush1.msra.mxu0 0.0
        %2176 = vmatprep.subr.mxu0 0.0
        %2177 = vmatpush1.msra.mxu0 0.0
        %2178 = vmatprep.subr.mxu0 0.0
        %2179 = vmatpush1.msra.mxu0 0.0
        %2180 = vmatprep.subr.mxu0 0.0
        %2181 = vmatpush1.msra.mxu0 %v275
        %2182 = vmatprep.subr.mxu0 0.0
        %2183 = vmatpush2.msra.mxu0 0.0
        %2184 = vmatprep.subr.mxu0 0.0
        %2185 = vmatpush2.msra.mxu0 0.0
        %2186 = vmatprep.subr.mxu0 0.0
        %2187 = vmatpush2.msra.mxu0 0.0
        %2188 = vmatprep.subr.mxu0 0.0
        %2189 = vmatpush2.msra.mxu0 0.0
        %2190 = vmatprep.subr.mxu0 0.0
        %2191 = vmatpush2.msra.mxu0 0.0
        %2192 = vmatprep.subr.mxu0 0.0
        %2193 = vmatpush2.msra.mxu0 0.0
        %2194 = vmatprep.subr.mxu0 0.0
        %2195 = vmatpush2.msra.mxu0 0.0
        %2196 = vmatprep.subr.mxu0 0.0
        %2197 = vmatpush2.msra.mxu0 0.0
        %2198 = vmatprep.subr.mxu0 0.0
        %2199 = vmatpush2.msra.mxu0 0.0
        %2200 = vmatprep.subr.mxu0 0.0
        %2201 = vmatpush2.msra.mxu0 0.0
        %2202 = vmatprep.subr.mxu0 0.0
        %2203 = vmatpush2.msra.mxu0 0.0
        %2204 = vmatprep.subr.mxu0 0.0
        %2205 = vmatpush2.msra.mxu0 0.0
        %2206 = vmatprep.subr.mxu0 0.0
        %2207 = vmatpush2.msra.mxu0 0.0
        %2208 = vmatprep.subr.mxu0 0.0
        %2209 = vmatpush2.msra.mxu0 0.0
        %2210 = vmatprep.subr.mxu0 0.0
        %2211 = vmatpush2.msra.mxu0 0.0
        %2212 = vmatprep.subr.mxu0 0.0
        %2213 = vmatpush2.msra.mxu0 0.0
        %2214 = vmatprep.mubr.f32.mxu0 0.0
        %2215 = vmatmul.mubr.f32.gmra.mxu0 %v2148
        %v2216 = vpop.f32.mrf.mxu0
        %v2217 = vadd.f32 0.0, %v2216
        %v2218 = vpop.f32.mrf.mxu0
        %2219 = vdwg.mxu0
        %v2220 = vsel %vm1011, %v1923, 0
        %2222 = vmatprep.subr.mxu0 0.0
        %2223 = vmatpush1.msra.mxu0 0.0
        %2224 = vmatprep.subr.mxu0 0.0
        %2225 = vmatpush1.msra.mxu0 0.0
        %2226 = vmatprep.subr.mxu0 0.0
        %2227 = vmatpush1.msra.mxu0 0.0
        %2228 = vmatprep.subr.mxu0 0.0
        %2229 = vmatpush1.msra.mxu0 0.0
        %2230 = vmatprep.subr.mxu0 0.0
        %2231 = vmatpush1.msra.mxu0 0.0
        %2232 = vmatprep.subr.mxu0 0.0
        %2233 = vmatpush1.msra.mxu0 0.0
        %2234 = vmatprep.subr.mxu0 0.0
        %2235 = vmatpush1.msra.mxu0 0.0
        %2236 = vmatprep.subr.mxu0 0.0
        %2237 = vmatpush1.msra.mxu0 0.0
        %2238 = vmatprep.subr.mxu0 0.0
        %2239 = vmatpush1.msra.mxu0 0.0
        %2240 = vmatprep.subr.mxu0 0.0
        %2241 = vmatpush1.msra.mxu0 0.0
        %2242 = vmatprep.subr.mxu0 0.0
        %2243 = vmatpush1.msra.mxu0 0.0
        %2244 = vmatprep.subr.mxu0 0.0
        %2245 = vmatpush1.msra.mxu0 0.0
        %2246 = vmatprep.subr.mxu0 0.0
        %2247 = vmatpush1.msra.mxu0 0.0
        %2248 = vmatprep.subr.mxu0 0.0
        %2249 = vmatpush1.msra.mxu0 0.0
        %2250 = vmatprep.subr.mxu0 0.0
        %2251 = vmatpush1.msra.mxu0 0.0
        %2252 = vmatprep.subr.mxu0 0.0
        %2253 = vmatpush1.msra.mxu0 %v276
        %2254 = vmatprep.subr.mxu0 0.0
        %2255 = vmatpush2.msra.mxu0 0.0
        %2256 = vmatprep.subr.mxu0 0.0
        %2257 = vmatpush2.msra.mxu0 0.0
        %2258 = vmatprep.subr.mxu0 0.0
        %2259 = vmatpush2.msra.mxu0 0.0
        %2260 = vmatprep.subr.mxu0 0.0
        %2261 = vmatpush2.msra.mxu0 0.0
        %2262 = vmatprep.subr.mxu0 0.0
        %2263 = vmatpush2.msra.mxu0 0.0
        %2264 = vmatprep.subr.mxu0 0.0
        %2265 = vmatpush2.msra.mxu0 0.0
        %2266 = vmatprep.subr.mxu0 0.0
        %2267 = vmatpush2.msra.mxu0 0.0
        %2268 = vmatprep.subr.mxu0 0.0
        %2269 = vmatpush2.msra.mxu0 0.0
        %2270 = vmatprep.subr.mxu0 0.0
        %2271 = vmatpush2.msra.mxu0 0.0
        %2272 = vmatprep.subr.mxu0 0.0
        %2273 = vmatpush2.msra.mxu0 0.0
        %2274 = vmatprep.subr.mxu0 0.0
        %2275 = vmatpush2.msra.mxu0 0.0
        %2276 = vmatprep.subr.mxu0 0.0
        %2277 = vmatpush2.msra.mxu0 0.0
        %2278 = vmatprep.subr.mxu0 0.0
        %2279 = vmatpush2.msra.mxu0 0.0
        %2280 = vmatprep.subr.mxu0 0.0
        %2281 = vmatpush2.msra.mxu0 0.0
        %2282 = vmatprep.subr.mxu0 0.0
        %2283 = vmatpush2.msra.mxu0 0.0
        %2284 = vmatprep.subr.mxu0 0.0
        %2285 = vmatpush2.msra.mxu0 0.0
        %2286 = vmatprep.mubr.f32.mxu0 0.0
        %2287 = vmatmul.mubr.f32.gmra.mxu0 %v2220
        %v2288 = vpop.f32.mrf.mxu0
        %v2289 = vadd.f32 0.0, %v2288
        %v2290 = vpop.f32.mrf.mxu0
        %2291 = vdwg.mxu0
        %v2292 = vsel %vm1011, %v1927, 0
        %2294 = vmatprep.subr.mxu0 0.0
        %2295 = vmatpush1.msra.mxu0 0.0
        %2296 = vmatprep.subr.mxu0 0.0
        %2297 = vmatpush1.msra.mxu0 0.0
        %2298 = vmatprep.subr.mxu0 0.0
        %2299 = vmatpush1.msra.mxu0 0.0
        %2300 = vmatprep.subr.mxu0 0.0
        %2301 = vmatpush1.msra.mxu0 0.0
        %2302 = vmatprep.subr.mxu0 0.0
        %2303 = vmatpush1.msra.mxu0 0.0
        %2304 = vmatprep.subr.mxu0 0.0
        %2305 = vmatpush1.msra.mxu0 0.0
        %2306 = vmatprep.subr.mxu0 0.0
        %2307 = vmatpush1.msra.mxu0 0.0
        %2308 = vmatprep.subr.mxu0 0.0
        %2309 = vmatpush1.msra.mxu0 0.0
        %2310 = vmatprep.subr.mxu0 0.0
        %2311 = vmatpush1.msra.mxu0 0.0
        %2312 = vmatprep.subr.mxu0 0.0
        %2313 = vmatpush1.msra.mxu0 0.0
        %2314 = vmatprep.subr.mxu0 0.0
        %2315 = vmatpush1.msra.mxu0 0.0
        %2316 = vmatprep.subr.mxu0 0.0
        %2317 = vmatpush1.msra.mxu0 0.0
        %2318 = vmatprep.subr.mxu0 0.0
        %2319 = vmatpush1.msra.mxu0 0.0
        %2320 = vmatprep.subr.mxu0 0.0
        %2321 = vmatpush1.msra.mxu0 0.0
        %2322 = vmatprep.subr.mxu0 0.0
        %2323 = vmatpush1.msra.mxu0 0.0
        %2324 = vmatprep.subr.mxu0 0.0
        %2325 = vmatpush1.msra.mxu0 %v277
        %2326 = vmatprep.subr.mxu0 0.0
        %2327 = vmatpush2.msra.mxu0 0.0
        %2328 = vmatprep.subr.mxu0 0.0
        %2329 = vmatpush2.msra.mxu0 0.0
        %2330 = vmatprep.subr.mxu0 0.0
        %2331 = vmatpush2.msra.mxu0 0.0
        %2332 = vmatprep.subr.mxu0 0.0
        %2333 = vmatpush2.msra.mxu0 0.0
        %2334 = vmatprep.subr.mxu0 0.0
        %2335 = vmatpush2.msra.mxu0 0.0
        %2336 = vmatprep.subr.mxu0 0.0
        %2337 = vmatpush2.msra.mxu0 0.0
        %2338 = vmatprep.subr.mxu0 0.0
        %2339 = vmatpush2.msra.mxu0 0.0
        %2340 = vmatprep.subr.mxu0 0.0
        %2341 = vmatpush2.msra.mxu0 0.0
        %2342 = vmatprep.subr.mxu0 0.0
        %2343 = vmatpush2.msra.mxu0 0.0
        %2344 = vmatprep.subr.mxu0 0.0
        %2345 = vmatpush2.msra.mxu0 0.0
        %2346 = vmatprep.subr.mxu0 0.0
        %2347 = vmatpush2.msra.mxu0 0.0
        %2348 = vmatprep.subr.mxu0 0.0
        %2349 = vmatpush2.msra.mxu0 0.0
        %2350 = vmatprep.subr.mxu0 0.0
        %2351 = vmatpush2.msra.mxu0 0.0
        %2352 = vmatprep.subr.mxu0 0.0
        %2353 = vmatpush2.msra.mxu0 0.0
        %2354 = vmatprep.subr.mxu0 0.0
        %2355 = vmatpush2.msra.mxu0 0.0
        %2356 = vmatprep.subr.mxu0 0.0
        %2357 = vmatpush2.msra.mxu0 0.0
        %2358 = vmatprep.mubr.f32.mxu0 0.0
        %2359 = vmatmul.mubr.f32.gmra.mxu0 %v2292
        %v2360 = vpop.f32.mrf.mxu0
        %v2361 = vadd.f32 0.0, %v2360
        %v2362 = vpop.f32.mrf.mxu0
        %2363 = vdwg.mxu0
        %v2364 = vsel %vm1011, %v1931, 0
        %2366 = vmatprep.subr.mxu0 0.0
        %2367 = vmatpush1.msra.mxu0 0.0
        %2368 = vmatprep.subr.mxu0 0.0
        %2369 = vmatpush1.msra.mxu0 0.0
        %2370 = vmatprep.subr.mxu0 0.0
        %2371 = vmatpush1.msra.mxu0 0.0
        %2372 = vmatprep.subr.mxu0 0.0
        %2373 = vmatpush1.msra.mxu0 0.0
        %2374 = vmatprep.subr.mxu0 0.0
        %2375 = vmatpush1.msra.mxu0 0.0
        %2376 = vmatprep.subr.mxu0 0.0
        %2377 = vmatpush1.msra.mxu0 0.0
        %2378 = vmatprep.subr.mxu0 0.0
        %2379 = vmatpush1.msra.mxu0 0.0
        %2380 = vmatprep.subr.mxu0 0.0
        %2381 = vmatpush1.msra.mxu0 0.0
        %2382 = vmatprep.subr.mxu0 0.0
        %2383 = vmatpush1.msra.mxu0 0.0
        %2384 = vmatprep.subr.mxu0 0.0
        %2385 = vmatpush1.msra.mxu0 0.0
        %2386 = vmatprep.subr.mxu0 0.0
        %2387 = vmatpush1.msra.mxu0 0.0
        %2388 = vmatprep.subr.mxu0 0.0
        %2389 = vmatpush1.msra.mxu0 0.0
        %2390 = vmatprep.subr.mxu0 0.0
        %2391 = vmatpush1.msra.mxu0 0.0
        %2392 = vmatprep.subr.mxu0 0.0
        %2393 = vmatpush1.msra.mxu0 0.0
        %2394 = vmatprep.subr.mxu0 0.0
        %2395 = vmatpush1.msra.mxu0 0.0
        %2396 = vmatprep.subr.mxu0 0.0
        %2397 = vmatpush1.msra.mxu0 %v278
        %2398 = vmatprep.subr.mxu0 0.0
        %2399 = vmatpush2.msra.mxu0 0.0
        %2400 = vmatprep.subr.mxu0 0.0
        %2401 = vmatpush2.msra.mxu0 0.0
        %2402 = vmatprep.subr.mxu0 0.0
        %2403 = vmatpush2.msra.mxu0 0.0
        %2404 = vmatprep.subr.mxu0 0.0
        %2405 = vmatpush2.msra.mxu0 0.0
        %2406 = vmatprep.subr.mxu0 0.0
        %2407 = vmatpush2.msra.mxu0 0.0
        %2408 = vmatprep.subr.mxu0 0.0
        %2409 = vmatpush2.msra.mxu0 0.0
        %2410 = vmatprep.subr.mxu0 0.0
        %2411 = vmatpush2.msra.mxu0 0.0
        %2412 = vmatprep.subr.mxu0 0.0
        %2413 = vmatpush2.msra.mxu0 0.0
        %2414 = vmatprep.subr.mxu0 0.0
        %2415 = vmatpush2.msra.mxu0 0.0
        %2416 = vmatprep.subr.mxu0 0.0
        %2417 = vmatpush2.msra.mxu0 0.0
        %2418 = vmatprep.subr.mxu0 0.0
        %2419 = vmatpush2.msra.mxu0 0.0
        %2420 = vmatprep.subr.mxu0 0.0
        %2421 = vmatpush2.msra.mxu0 0.0
        %2422 = vmatprep.subr.mxu0 0.0
        %2423 = vmatpush2.msra.mxu0 0.0
        %2424 = vmatprep.subr.mxu0 0.0
        %2425 = vmatpush2.msra.mxu0 0.0
        %2426 = vmatprep.subr.mxu0 0.0
        %2427 = vmatpush2.msra.mxu0 0.0
        %2428 = vmatprep.subr.mxu0 0.0
        %2429 = vmatpush2.msra.mxu0 0.0
        %2430 = vmatprep.mubr.f32.mxu0 0.0
        %2431 = vmatmul.mubr.f32.gmra.mxu0 %v2364
        %v2432 = vpop.f32.mrf.mxu0
        %v2433 = vadd.f32 0.0, %v2432
        %v2434 = vpop.f32.mrf.mxu0
        %2435 = vdwg.mxu0
        %v2436 = vsel %vm1011, %v1935, 0
        %2438 = vmatprep.subr.mxu0 0.0
        %2439 = vmatpush1.msra.mxu0 0.0
        %2440 = vmatprep.subr.mxu0 0.0
        %2441 = vmatpush1.msra.mxu0 0.0
        %2442 = vmatprep.subr.mxu0 0.0
        %2443 = vmatpush1.msra.mxu0 0.0
        %2444 = vmatprep.subr.mxu0 0.0
        %2445 = vmatpush1.msra.mxu0 0.0
        %2446 = vmatprep.subr.mxu0 0.0
        %2447 = vmatpush1.msra.mxu0 0.0
        %2448 = vmatprep.subr.mxu0 0.0
        %2449 = vmatpush1.msra.mxu0 0.0
        %2450 = vmatprep.subr.mxu0 0.0
        %2451 = vmatpush1.msra.mxu0 0.0
        %2452 = vmatprep.subr.mxu0 0.0
        %2453 = vmatpush1.msra.mxu0 0.0
        %2454 = vmatprep.subr.mxu0 0.0
        %2455 = vmatpush1.msra.mxu0 0.0
        %2456 = vmatprep.subr.mxu0 0.0
        %2457 = vmatpush1.msra.mxu0 0.0
        %2458 = vmatprep.subr.mxu0 0.0
        %2459 = vmatpush1.msra.mxu0 0.0
        %2460 = vmatprep.subr.mxu0 0.0
        %2461 = vmatpush1.msra.mxu0 0.0
        %2462 = vmatprep.subr.mxu0 0.0
        %2463 = vmatpush1.msra.mxu0 0.0
        %2464 = vmatprep.subr.mxu0 0.0
        %2465 = vmatpush1.msra.mxu0 0.0
        %2466 = vmatprep.subr.mxu0 0.0
        %2467 = vmatpush1.msra.mxu0 0.0
        %2468 = vmatprep.subr.mxu0 0.0
        %2469 = vmatpush1.msra.mxu0 %v279
        %2470 = vmatprep.subr.mxu0 0.0
        %2471 = vmatpush2.msra.mxu0 0.0
        %2472 = vmatprep.subr.mxu0 0.0
        %2473 = vmatpush2.msra.mxu0 0.0
        %2474 = vmatprep.subr.mxu0 0.0
        %2475 = vmatpush2.msra.mxu0 0.0
        %2476 = vmatprep.subr.mxu0 0.0
        %2477 = vmatpush2.msra.mxu0 0.0
        %2478 = vmatprep.subr.mxu0 0.0
        %2479 = vmatpush2.msra.mxu0 0.0
        %2480 = vmatprep.subr.mxu0 0.0
        %2481 = vmatpush2.msra.mxu0 0.0
        %2482 = vmatprep.subr.mxu0 0.0
        %2483 = vmatpush2.msra.mxu0 0.0
        %2484 = vmatprep.subr.mxu0 0.0
        %2485 = vmatpush2.msra.mxu0 0.0
        %2486 = vmatprep.subr.mxu0 0.0
        %2487 = vmatpush2.msra.mxu0 0.0
        %2488 = vmatprep.subr.mxu0 0.0
        %2489 = vmatpush2.msra.mxu0 0.0
        %2490 = vmatprep.subr.mxu0 0.0
        %2491 = vmatpush2.msra.mxu0 0.0
        %2492 = vmatprep.subr.mxu0 0.0
        %2493 = vmatpush2.msra.mxu0 0.0
        %2494 = vmatprep.subr.mxu0 0.0
        %2495 = vmatpush2.msra.mxu0 0.0
        %2496 = vmatprep.subr.mxu0 0.0
        %2497 = vmatpush2.msra.mxu0 0.0
        %2498 = vmatprep.subr.mxu0 0.0
        %2499 = vmatpush2.msra.mxu0 0.0
        %2500 = vmatprep.subr.mxu0 0.0
        %2501 = vmatpush2.msra.mxu0 0.0
        %2502 = vmatprep.mubr.f32.mxu0 0.0
        %2503 = vmatmul.mubr.f32.gmra.mxu0 %v2436
        %v2504 = vpop.f32.mrf.mxu0
        %v2505 = vadd.f32 0.0, %v2504
        %v2506 = vpop.f32.mrf.mxu0
        %2507 = vdwg.mxu0
        %v2508 = vsel %vm1011, %v1939, 0
        %2510 = vmatprep.subr.mxu0 0.0
        %2511 = vmatpush1.msra.mxu0 0.0
        %2512 = vmatprep.subr.mxu0 0.0
        %2513 = vmatpush1.msra.mxu0 0.0
        %2514 = vmatprep.subr.mxu0 0.0
        %2515 = vmatpush1.msra.mxu0 0.0
        %2516 = vmatprep.subr.mxu0 0.0
        %2517 = vmatpush1.msra.mxu0 0.0
        %2518 = vmatprep.subr.mxu0 0.0
        %2519 = vmatpush1.msra.mxu0 0.0
        %2520 = vmatprep.subr.mxu0 0.0
        %2521 = vmatpush1.msra.mxu0 0.0
        %2522 = vmatprep.subr.mxu0 0.0
        %2523 = vmatpush1.msra.mxu0 0.0
        %2524 = vmatprep.subr.mxu0 0.0
        %2525 = vmatpush1.msra.mxu0 0.0
        %2526 = vmatprep.subr.mxu0 0.0
        %2527 = vmatpush1.msra.mxu0 0.0
        %2528 = vmatprep.subr.mxu0 0.0
        %2529 = vmatpush1.msra.mxu0 0.0
        %2530 = vmatprep.subr.mxu0 0.0
        %2531 = vmatpush1.msra.mxu0 0.0
        %2532 = vmatprep.subr.mxu0 0.0
        %2533 = vmatpush1.msra.mxu0 0.0
        %2534 = vmatprep.subr.mxu0 0.0
        %2535 = vmatpush1.msra.mxu0 0.0
        %2536 = vmatprep.subr.mxu0 0.0
        %2537 = vmatpush1.msra.mxu0 0.0
        %2538 = vmatprep.subr.mxu0 0.0
        %2539 = vmatpush1.msra.mxu0 0.0
        %2540 = vmatprep.subr.mxu0 0.0
        %2541 = vmatpush1.msra.mxu0 %v280
        %2542 = vmatprep.subr.mxu0 0.0
        %2543 = vmatpush2.msra.mxu0 0.0
        %2544 = vmatprep.subr.mxu0 0.0
        %2545 = vmatpush2.msra.mxu0 0.0
        %2546 = vmatprep.subr.mxu0 0.0
        %2547 = vmatpush2.msra.mxu0 0.0
        %2548 = vmatprep.subr.mxu0 0.0
        %2549 = vmatpush2.msra.mxu0 0.0
        %2550 = vmatprep.subr.mxu0 0.0
        %2551 = vmatpush2.msra.mxu0 0.0
        %2552 = vmatprep.subr.mxu0 0.0
        %2553 = vmatpush2.msra.mxu0 0.0
        %2554 = vmatprep.subr.mxu0 0.0
        %2555 = vmatpush2.msra.mxu0 0.0
        %2556 = vmatprep.subr.mxu0 0.0
        %2557 = vmatpush2.msra.mxu0 0.0
        %2558 = vmatprep.subr.mxu0 0.0
        %2559 = vmatpush2.msra.mxu0 0.0
        %2560 = vmatprep.subr.mxu0 0.0
        %2561 = vmatpush2.msra.mxu0 0.0
        %2562 = vmatprep.subr.mxu0 0.0
        %2563 = vmatpush2.msra.mxu0 0.0
        %2564 = vmatprep.subr.mxu0 0.0
        %2565 = vmatpush2.msra.mxu0 0.0
        %2566 = vmatprep.subr.mxu0 0.0
        %2567 = vmatpush2.msra.mxu0 0.0
        %2568 = vmatprep.subr.mxu0 0.0
        %2569 = vmatpush2.msra.mxu0 0.0
        %2570 = vmatprep.subr.mxu0 0.0
        %2571 = vmatpush2.msra.mxu0 0.0
        %2572 = vmatprep.subr.mxu0 0.0
        %2573 = vmatpush2.msra.mxu0 0.0
        %2574 = vmatprep.mubr.f32.mxu0 0.0
        %2575 = vmatmul.mubr.f32.gmra.mxu0 %v2508
        %v2576 = vpop.f32.mrf.mxu0
        %v2577 = vadd.f32 0.0, %v2576
        %v2578 = vpop.f32.mrf.mxu0
        %2579 = vdwg.mxu0
        %v2580 = vsel %vm1011, %v1943, 0
        %2582 = vmatprep.subr.mxu0 0.0
        %2583 = vmatpush1.msra.mxu0 0.0
        %2584 = vmatprep.subr.mxu0 0.0
        %2585 = vmatpush1.msra.mxu0 0.0
        %2586 = vmatprep.subr.mxu0 0.0
        %2587 = vmatpush1.msra.mxu0 0.0
        %2588 = vmatprep.subr.mxu0 0.0
        %2589 = vmatpush1.msra.mxu0 0.0
        %2590 = vmatprep.subr.mxu0 0.0
        %2591 = vmatpush1.msra.mxu0 0.0
        %2592 = vmatprep.subr.mxu0 0.0
        %2593 = vmatpush1.msra.mxu0 0.0
        %2594 = vmatprep.subr.mxu0 0.0
        %2595 = vmatpush1.msra.mxu0 0.0
        %2596 = vmatprep.subr.mxu0 0.0
        %2597 = vmatpush1.msra.mxu0 0.0
        %2598 = vmatprep.subr.mxu0 0.0
        %2599 = vmatpush1.msra.mxu0 0.0
        %2600 = vmatprep.subr.mxu0 0.0
        %2601 = vmatpush1.msra.mxu0 0.0
        %2602 = vmatprep.subr.mxu0 0.0
        %2603 = vmatpush1.msra.mxu0 0.0
        %2604 = vmatprep.subr.mxu0 0.0
        %2605 = vmatpush1.msra.mxu0 0.0
        %2606 = vmatprep.subr.mxu0 0.0
        %2607 = vmatpush1.msra.mxu0 0.0
        %2608 = vmatprep.subr.mxu0 0.0
        %2609 = vmatpush1.msra.mxu0 0.0
        %2610 = vmatprep.subr.mxu0 0.0
        %2611 = vmatpush1.msra.mxu0 0.0
        %2612 = vmatprep.subr.mxu0 0.0
        %2613 = vmatpush1.msra.mxu0 %v281
        %2614 = vmatprep.subr.mxu0 0.0
        %2615 = vmatpush2.msra.mxu0 0.0
        %2616 = vmatprep.subr.mxu0 0.0
        %2617 = vmatpush2.msra.mxu0 0.0
        %2618 = vmatprep.subr.mxu0 0.0
        %2619 = vmatpush2.msra.mxu0 0.0
        %2620 = vmatprep.subr.mxu0 0.0
        %2621 = vmatpush2.msra.mxu0 0.0
        %2622 = vmatprep.subr.mxu0 0.0
        %2623 = vmatpush2.msra.mxu0 0.0
        %2624 = vmatprep.subr.mxu0 0.0
        %2625 = vmatpush2.msra.mxu0 0.0
        %2626 = vmatprep.subr.mxu0 0.0
        %2627 = vmatpush2.msra.mxu0 0.0
        %2628 = vmatprep.subr.mxu0 0.0
        %2629 = vmatpush2.msra.mxu0 0.0
        %2630 = vmatprep.subr.mxu0 0.0
        %2631 = vmatpush2.msra.mxu0 0.0
        %2632 = vmatprep.subr.mxu0 0.0
        %2633 = vmatpush2.msra.mxu0 0.0
        %2634 = vmatprep.subr.mxu0 0.0
        %2635 = vmatpush2.msra.mxu0 0.0
        %2636 = vmatprep.subr.mxu0 0.0
        %2637 = vmatpush2.msra.mxu0 0.0
        %2638 = vmatprep.subr.mxu0 0.0
        %2639 = vmatpush2.msra.mxu0 0.0
        %2640 = vmatprep.subr.mxu0 0.0
        %2641 = vmatpush2.msra.mxu0 0.0
        %2642 = vmatprep.subr.mxu0 0.0
        %2643 = vmatpush2.msra.mxu0 0.0
        %2644 = vmatprep.subr.mxu0 0.0
        %2645 = vmatpush2.msra.mxu0 0.0
        %2646 = vmatprep.mubr.f32.mxu0 0.0
        %2647 = vmatmul.mubr.f32.gmra.mxu0 %v2580
        %v2648 = vpop.f32.mrf.mxu0
        %v2649 = vadd.f32 0.0, %v2648
        %v2650 = vpop.f32.mrf.mxu0
        %2651 = vdwg.mxu0
        %v2652 = vsel %vm1011, %v1947, 0
        %2654 = vmatprep.subr.mxu0 0.0
        %2655 = vmatpush1.msra.mxu0 0.0
        %2656 = vmatprep.subr.mxu0 0.0
        %2657 = vmatpush1.msra.mxu0 0.0
        %2658 = vmatprep.subr.mxu0 0.0
        %2659 = vmatpush1.msra.mxu0 0.0
        %2660 = vmatprep.subr.mxu0 0.0
        %2661 = vmatpush1.msra.mxu0 0.0
        %2662 = vmatprep.subr.mxu0 0.0
        %2663 = vmatpush1.msra.mxu0 0.0
        %2664 = vmatprep.subr.mxu0 0.0
        %2665 = vmatpush1.msra.mxu0 0.0
        %2666 = vmatprep.subr.mxu0 0.0
        %2667 = vmatpush1.msra.mxu0 0.0
        %2668 = vmatprep.subr.mxu0 0.0
        %2669 = vmatpush1.msra.mxu0 0.0
        %2670 = vmatprep.subr.mxu0 0.0
        %2671 = vmatpush1.msra.mxu0 0.0
        %2672 = vmatprep.subr.mxu0 0.0
        %2673 = vmatpush1.msra.mxu0 0.0
        %2674 = vmatprep.subr.mxu0 0.0
        %2675 = vmatpush1.msra.mxu0 0.0
        %2676 = vmatprep.subr.mxu0 0.0
        %2677 = vmatpush1.msra.mxu0 0.0
        %2678 = vmatprep.subr.mxu0 0.0
        %2679 = vmatpush1.msra.mxu0 0.0
        %2680 = vmatprep.subr.mxu0 0.0
        %2681 = vmatpush1.msra.mxu0 0.0
        %2682 = vmatprep.subr.mxu0 0.0
        %2683 = vmatpush1.msra.mxu0 0.0
        %2684 = vmatprep.subr.mxu0 0.0
        %2685 = vmatpush1.msra.mxu0 %v282
        %2686 = vmatprep.subr.mxu0 0.0
        %2687 = vmatpush2.msra.mxu0 0.0
        %2688 = vmatprep.subr.mxu0 0.0
        %2689 = vmatpush2.msra.mxu0 0.0
        %2690 = vmatprep.subr.mxu0 0.0
        %2691 = vmatpush2.msra.mxu0 0.0
        %2692 = vmatprep.subr.mxu0 0.0
        %2693 = vmatpush2.msra.mxu0 0.0
        %2694 = vmatprep.subr.mxu0 0.0
        %2695 = vmatpush2.msra.mxu0 0.0
        %2696 = vmatprep.subr.mxu0 0.0
        %2697 = vmatpush2.msra.mxu0 0.0
        %2698 = vmatprep.subr.mxu0 0.0
        %2699 = vmatpush2.msra.mxu0 0.0
        %2700 = vmatprep.subr.mxu0 0.0
        %2701 = vmatpush2.msra.mxu0 0.0
        %2702 = vmatprep.subr.mxu0 0.0
        %2703 = vmatpush2.msra.mxu0 0.0
        %2704 = vmatprep.subr.mxu0 0.0
        %2705 = vmatpush2.msra.mxu0 0.0
        %2706 = vmatprep.subr.mxu0 0.0
        %2707 = vmatpush2.msra.mxu0 0.0
        %2708 = vmatprep.subr.mxu0 0.0
        %2709 = vmatpush2.msra.mxu0 0.0
        %2710 = vmatprep.subr.mxu0 0.0
        %2711 = vmatpush2.msra.mxu0 0.0
        %2712 = vmatprep.subr.mxu0 0.0
        %2713 = vmatpush2.msra.mxu0 0.0
        %2714 = vmatprep.subr.mxu0 0.0
        %2715 = vmatpush2.msra.mxu0 0.0
        %2716 = vmatprep.subr.mxu0 0.0
        %2717 = vmatpush2.msra.mxu0 0.0
        %2718 = vmatprep.mubr.f32.mxu0 0.0
        %2719 = vmatmul.mubr.f32.gmra.mxu0 %v2652
        %v2720 = vpop.f32.mrf.mxu0
        %v2721 = vadd.f32 0.0, %v2720
        %v2722 = vpop.f32.mrf.mxu0
        %2723 = vdwg.mxu0
        %v2724 = vsel %vm1011, %v1951, 0
        %2726 = vmatprep.subr.mxu0 0.0
        %2727 = vmatpush1.msra.mxu0 0.0
        %2728 = vmatprep.subr.mxu0 0.0
        %2729 = vmatpush1.msra.mxu0 0.0
        %2730 = vmatprep.subr.mxu0 0.0
        %2731 = vmatpush1.msra.mxu0 0.0
        %2732 = vmatprep.subr.mxu0 0.0
        %2733 = vmatpush1.msra.mxu0 0.0
        %2734 = vmatprep.subr.mxu0 0.0
        %2735 = vmatpush1.msra.mxu0 0.0
        %2736 = vmatprep.subr.mxu0 0.0
        %2737 = vmatpush1.msra.mxu0 0.0
        %2738 = vmatprep.subr.mxu0 0.0
        %2739 = vmatpush1.msra.mxu0 0.0
        %2740 = vmatprep.subr.mxu0 0.0
        %2741 = vmatpush1.msra.mxu0 0.0
        %2742 = vmatprep.subr.mxu0 0.0
        %2743 = vmatpush1.msra.mxu0 0.0
        %2744 = vmatprep.subr.mxu0 0.0
        %2745 = vmatpush1.msra.mxu0 0.0
        %2746 = vmatprep.subr.mxu0 0.0
        %2747 = vmatpush1.msra.mxu0 0.0
        %2748 = vmatprep.subr.mxu0 0.0
        %2749 = vmatpush1.msra.mxu0 0.0
        %2750 = vmatprep.subr.mxu0 0.0
        %2751 = vmatpush1.msra.mxu0 0.0
        %2752 = vmatprep.subr.mxu0 0.0
        %2753 = vmatpush1.msra.mxu0 0.0
        %2754 = vmatprep.subr.mxu0 0.0
        %2755 = vmatpush1.msra.mxu0 0.0
        %2756 = vmatprep.subr.mxu0 0.0
        %2757 = vmatpush1.msra.mxu0 %v283
        %2758 = vmatprep.subr.mxu0 0.0
        %2759 = vmatpush2.msra.mxu0 0.0
        %2760 = vmatprep.subr.mxu0 0.0
        %2761 = vmatpush2.msra.mxu0 0.0
        %2762 = vmatprep.subr.mxu0 0.0
        %2763 = vmatpush2.msra.mxu0 0.0
        %2764 = vmatprep.subr.mxu0 0.0
        %2765 = vmatpush2.msra.mxu0 0.0
        %2766 = vmatprep.subr.mxu0 0.0
        %2767 = vmatpush2.msra.mxu0 0.0
        %2768 = vmatprep.subr.mxu0 0.0
        %2769 = vmatpush2.msra.mxu0 0.0
        %2770 = vmatprep.subr.mxu0 0.0
        %2771 = vmatpush2.msra.mxu0 0.0
        %2772 = vmatprep.subr.mxu0 0.0
        %2773 = vmatpush2.msra.mxu0 0.0
        %2774 = vmatprep.subr.mxu0 0.0
        %2775 = vmatpush2.msra.mxu0 0.0
        %2776 = vmatprep.subr.mxu0 0.0
        %2777 = vmatpush2.msra.mxu0 0.0
        %2778 = vmatprep.subr.mxu0 0.0
        %2779 = vmatpush2.msra.mxu0 0.0
        %2780 = vmatprep.subr.mxu0 0.0
        %2781 = vmatpush2.msra.mxu0 0.0
        %2782 = vmatprep.subr.mxu0 0.0
        %2783 = vmatpush2.msra.mxu0 0.0
        %2784 = vmatprep.subr.mxu0 0.0
        %2785 = vmatpush2.msra.mxu0 0.0
        %2786 = vmatprep.subr.mxu0 0.0
        %2787 = vmatpush2.msra.mxu0 0.0
        %2788 = vmatprep.subr.mxu0 0.0
        %2789 = vmatpush2.msra.mxu0 0.0
        %2790 = vmatprep.mubr.f32.mxu0 0.0
        %2791 = vmatmul.mubr.f32.gmra.mxu0 %v2724
        %v2792 = vpop.f32.mrf.mxu0
        %v2793 = vadd.f32 0.0, %v2792
        %v2794 = vpop.f32.mrf.mxu0
        %2795 = vdwg.mxu0
        %v2796 = vsel %vm1011, %v1955, 0
        %2798 = vmatprep.subr.mxu0 0.0
        %2799 = vmatpush1.msra.mxu0 0.0
        %2800 = vmatprep.subr.mxu0 0.0
        %2801 = vmatpush1.msra.mxu0 0.0
        %2802 = vmatprep.subr.mxu0 0.0
        %2803 = vmatpush1.msra.mxu0 0.0
        %2804 = vmatprep.subr.mxu0 0.0
        %2805 = vmatpush1.msra.mxu0 0.0
        %2806 = vmatprep.subr.mxu0 0.0
        %2807 = vmatpush1.msra.mxu0 0.0
        %2808 = vmatprep.subr.mxu0 0.0
        %2809 = vmatpush1.msra.mxu0 0.0
        %2810 = vmatprep.subr.mxu0 0.0
        %2811 = vmatpush1.msra.mxu0 0.0
        %2812 = vmatprep.subr.mxu0 0.0
        %2813 = vmatpush1.msra.mxu0 0.0
        %2814 = vmatprep.subr.mxu0 0.0
        %2815 = vmatpush1.msra.mxu0 0.0
        %2816 = vmatprep.subr.mxu0 0.0
        %2817 = vmatpush1.msra.mxu0 0.0
        %2818 = vmatprep.subr.mxu0 0.0
        %2819 = vmatpush1.msra.mxu0 0.0
        %2820 = vmatprep.subr.mxu0 0.0
        %2821 = vmatpush1.msra.mxu0 0.0
        %2822 = vmatprep.subr.mxu0 0.0
        %2823 = vmatpush1.msra.mxu0 0.0
        %2824 = vmatprep.subr.mxu0 0.0
        %2825 = vmatpush1.msra.mxu0 0.0
        %2826 = vmatprep.subr.mxu0 0.0
        %2827 = vmatpush1.msra.mxu0 0.0
        %2828 = vmatprep.subr.mxu0 0.0
        %2829 = vmatpush1.msra.mxu0 %v284
        %2830 = vmatprep.subr.mxu0 0.0
        %2831 = vmatpush2.msra.mxu0 0.0
        %2832 = vmatprep.subr.mxu0 0.0
        %2833 = vmatpush2.msra.mxu0 0.0
        %2834 = vmatprep.subr.mxu0 0.0
        %2835 = vmatpush2.msra.mxu0 0.0
        %2836 = vmatprep.subr.mxu0 0.0
        %2837 = vmatpush2.msra.mxu0 0.0
        %2838 = vmatprep.subr.mxu0 0.0
        %2839 = vmatpush2.msra.mxu0 0.0
        %2840 = vmatprep.subr.mxu0 0.0
        %2841 = vmatpush2.msra.mxu0 0.0
        %2842 = vmatprep.subr.mxu0 0.0
        %2843 = vmatpush2.msra.mxu0 0.0
        %2844 = vmatprep.subr.mxu0 0.0
        %2845 = vmatpush2.msra.mxu0 0.0
        %2846 = vmatprep.subr.mxu0 0.0
        %2847 = vmatpush2.msra.mxu0 0.0
        %2848 = vmatprep.subr.mxu0 0.0
        %2849 = vmatpush2.msra.mxu0 0.0
        %2850 = vmatprep.subr.mxu0 0.0
        %2851 = vmatpush2.msra.mxu0 0.0
        %2852 = vmatprep.subr.mxu0 0.0
        %2853 = vmatpush2.msra.mxu0 0.0
        %2854 = vmatprep.subr.mxu0 0.0
        %2855 = vmatpush2.msra.mxu0 0.0
        %2856 = vmatprep.subr.mxu0 0.0
        %2857 = vmatpush2.msra.mxu0 0.0
        %2858 = vmatprep.subr.mxu0 0.0
        %2859 = vmatpush2.msra.mxu0 0.0
        %2860 = vmatprep.subr.mxu0 0.0
        %2861 = vmatpush2.msra.mxu0 0.0
        %2862 = vmatprep.mubr.f32.mxu0 0.0
        %2863 = vmatmul.mubr.f32.gmra.mxu0 %v2796
        %v2864 = vpop.f32.mrf.mxu0
        %v2865 = vadd.f32 0.0, %v2864
        %v2866 = vpop.f32.mrf.mxu0
        %2867 = vdwg.mxu0
        %v2868 = vsel %vm1011, %v1959, 0
        %2870 = vmatprep.subr.mxu0 0.0
        %2871 = vmatpush1.msra.mxu0 0.0
        %2872 = vmatprep.subr.mxu0 0.0
        %2873 = vmatpush1.msra.mxu0 0.0
        %2874 = vmatprep.subr.mxu0 0.0
        %2875 = vmatpush1.msra.mxu0 0.0
        %2876 = vmatprep.subr.mxu0 0.0
        %2877 = vmatpush1.msra.mxu0 0.0
        %2878 = vmatprep.subr.mxu0 0.0
        %2879 = vmatpush1.msra.mxu0 0.0
        %2880 = vmatprep.subr.mxu0 0.0
        %2881 = vmatpush1.msra.mxu0 0.0
        %2882 = vmatprep.subr.mxu0 0.0
        %2883 = vmatpush1.msra.mxu0 0.0
        %2884 = vmatprep.subr.mxu0 0.0
        %2885 = vmatpush1.msra.mxu0 0.0
        %2886 = vmatprep.subr.mxu0 0.0
        %2887 = vmatpush1.msra.mxu0 0.0
        %2888 = vmatprep.subr.mxu0 0.0
        %2889 = vmatpush1.msra.mxu0 0.0
        %2890 = vmatprep.subr.mxu0 0.0
        %2891 = vmatpush1.msra.mxu0 0.0
        %2892 = vmatprep.subr.mxu0 0.0
        %2893 = vmatpush1.msra.mxu0 0.0
        %2894 = vmatprep.subr.mxu0 0.0
        %2895 = vmatpush1.msra.mxu0 0.0
        %2896 = vmatprep.subr.mxu0 0.0
        %2897 = vmatpush1.msra.mxu0 0.0
        %2898 = vmatprep.subr.mxu0 0.0
        %2899 = vmatpush1.msra.mxu0 0.0
        %2900 = vmatprep.subr.mxu0 0.0
        %2901 = vmatpush1.msra.mxu0 %v285
        %2902 = vmatprep.subr.mxu0 0.0
        %2903 = vmatpush2.msra.mxu0 0.0
        %2904 = vmatprep.subr.mxu0 0.0
        %2905 = vmatpush2.msra.mxu0 0.0
        %2906 = vmatprep.subr.mxu0 0.0
        %2907 = vmatpush2.msra.mxu0 0.0
        %2908 = vmatprep.subr.mxu0 0.0
        %2909 = vmatpush2.msra.mxu0 0.0
        %2910 = vmatprep.subr.mxu0 0.0
        %2911 = vmatpush2.msra.mxu0 0.0
        %2912 = vmatprep.subr.mxu0 0.0
        %2913 = vmatpush2.msra.mxu0 0.0
        %2914 = vmatprep.subr.mxu0 0.0
        %2915 = vmatpush2.msra.mxu0 0.0
        %2916 = vmatprep.subr.mxu0 0.0
        %2917 = vmatpush2.msra.mxu0 0.0
        %2918 = vmatprep.subr.mxu0 0.0
        %2919 = vmatpush2.msra.mxu0 0.0
        %2920 = vmatprep.subr.mxu0 0.0
        %2921 = vmatpush2.msra.mxu0 0.0
        %2922 = vmatprep.subr.mxu0 0.0
        %2923 = vmatpush2.msra.mxu0 0.0
        %2924 = vmatprep.subr.mxu0 0.0
        %2925 = vmatpush2.msra.mxu0 0.0
        %2926 = vmatprep.subr.mxu0 0.0
        %2927 = vmatpush2.msra.mxu0 0.0
        %2928 = vmatprep.subr.mxu0 0.0
        %2929 = vmatpush2.msra.mxu0 0.0
        %2930 = vmatprep.subr.mxu0 0.0
        %2931 = vmatpush2.msra.mxu0 0.0
        %2932 = vmatprep.subr.mxu0 0.0
        %2933 = vmatpush2.msra.mxu0 0.0
        %2934 = vmatprep.mubr.f32.mxu0 0.0
        %2935 = vmatmul.mubr.f32.gmra.mxu0 %v2868
        %v2936 = vpop.f32.mrf.mxu0
        %v2937 = vadd.f32 0.0, %v2936
        %v2938 = vpop.f32.mrf.mxu0
        %2939 = vdwg.mxu0
        %v2940 = vsel %vm1011, %v1963, 0
        %2942 = vmatprep.subr.mxu0 0.0
        %2943 = vmatpush1.msra.mxu0 0.0
        %2944 = vmatprep.subr.mxu0 0.0
        %2945 = vmatpush1.msra.mxu0 0.0
        %2946 = vmatprep.subr.mxu0 0.0
        %2947 = vmatpush1.msra.mxu0 0.0
        %2948 = vmatprep.subr.mxu0 0.0
        %2949 = vmatpush1.msra.mxu0 0.0
        %2950 = vmatprep.subr.mxu0 0.0
        %2951 = vmatpush1.msra.mxu0 0.0
        %2952 = vmatprep.subr.mxu0 0.0
        %2953 = vmatpush1.msra.mxu0 0.0
        %2954 = vmatprep.subr.mxu0 0.0
        %2955 = vmatpush1.msra.mxu0 0.0
        %2956 = vmatprep.subr.mxu0 0.0
        %2957 = vmatpush1.msra.mxu0 0.0
        %2958 = vmatprep.subr.mxu0 0.0
        %2959 = vmatpush1.msra.mxu0 0.0
        %2960 = vmatprep.subr.mxu0 0.0
        %2961 = vmatpush1.msra.mxu0 0.0
        %2962 = vmatprep.subr.mxu0 0.0
        %2963 = vmatpush1.msra.mxu0 0.0
        %2964 = vmatprep.subr.mxu0 0.0
        %2965 = vmatpush1.msra.mxu0 0.0
        %2966 = vmatprep.subr.mxu0 0.0
        %2967 = vmatpush1.msra.mxu0 0.0
        %2968 = vmatprep.subr.mxu0 0.0
        %2969 = vmatpush1.msra.mxu0 0.0
        %2970 = vmatprep.subr.mxu0 0.0
        %2971 = vmatpush1.msra.mxu0 0.0
        %2972 = vmatprep.subr.mxu0 0.0
        %2973 = vmatpush1.msra.mxu0 %v286
        %2974 = vmatprep.subr.mxu0 0.0
        %2975 = vmatpush2.msra.mxu0 0.0
        %2976 = vmatprep.subr.mxu0 0.0
        %2977 = vmatpush2.msra.mxu0 0.0
        %2978 = vmatprep.subr.mxu0 0.0
        %2979 = vmatpush2.msra.mxu0 0.0
        %2980 = vmatprep.subr.mxu0 0.0
        %2981 = vmatpush2.msra.mxu0 0.0
        %2982 = vmatprep.subr.mxu0 0.0
        %2983 = vmatpush2.msra.mxu0 0.0
        %2984 = vmatprep.subr.mxu0 0.0
        %2985 = vmatpush2.msra.mxu0 0.0
        %2986 = vmatprep.subr.mxu0 0.0
        %2987 = vmatpush2.msra.mxu0 0.0
        %2988 = vmatprep.subr.mxu0 0.0
        %2989 = vmatpush2.msra.mxu0 0.0
        %2990 = vmatprep.subr.mxu0 0.0
        %2991 = vmatpush2.msra.mxu0 0.0
        %2992 = vmatprep.subr.mxu0 0.0
        %2993 = vmatpush2.msra.mxu0 0.0
        %2994 = vmatprep.subr.mxu0 0.0
        %2995 = vmatpush2.msra.mxu0 0.0
        %2996 = vmatprep.subr.mxu0 0.0
        %2997 = vmatpush2.msra.mxu0 0.0
        %2998 = vmatprep.subr.mxu0 0.0
        %2999 = vmatpush2.msra.mxu0 0.0
        %3000 = vmatprep.subr.mxu0 0.0
        %3001 = vmatpush2.msra.mxu0 0.0
        %3002 = vmatprep.subr.mxu0 0.0
        %3003 = vmatpush2.msra.mxu0 0.0
        %3004 = vmatprep.subr.mxu0 0.0
        %3005 = vmatpush2.msra.mxu0 0.0
        %3006 = vmatprep.mubr.f32.mxu0 0.0
        %3007 = vmatmul.mubr.f32.gmra.mxu0 %v2940
        %v3008 = vpop.f32.mrf.mxu0
        %v3009 = vadd.f32 0.0, %v3008
        %v3010 = vpop.f32.mrf.mxu0
        %3011 = vdwg.mxu0
        %v3012 = vsel %vm1011, %v1967, 0
        %3014 = vmatprep.subr.mxu0 0.0
        %3015 = vmatpush1.msra.mxu0 0.0
        %3016 = vmatprep.subr.mxu0 0.0
        %3017 = vmatpush1.msra.mxu0 0.0
        %3018 = vmatprep.subr.mxu0 0.0
        %3019 = vmatpush1.msra.mxu0 0.0
        %3020 = vmatprep.subr.mxu0 0.0
        %3021 = vmatpush1.msra.mxu0 0.0
        %3022 = vmatprep.subr.mxu0 0.0
        %3023 = vmatpush1.msra.mxu0 0.0
        %3024 = vmatprep.subr.mxu0 0.0
        %3025 = vmatpush1.msra.mxu0 0.0
        %3026 = vmatprep.subr.mxu0 0.0
        %3027 = vmatpush1.msra.mxu0 0.0
        %3028 = vmatprep.subr.mxu0 0.0
        %3029 = vmatpush1.msra.mxu0 0.0
        %3030 = vmatprep.subr.mxu0 0.0
        %3031 = vmatpush1.msra.mxu0 0.0
        %3032 = vmatprep.subr.mxu0 0.0
        %3033 = vmatpush1.msra.mxu0 0.0
        %3034 = vmatprep.subr.mxu0 0.0
        %3035 = vmatpush1.msra.mxu0 0.0
        %3036 = vmatprep.subr.mxu0 0.0
        %3037 = vmatpush1.msra.mxu0 0.0
        %3038 = vmatprep.subr.mxu0 0.0
        %3039 = vmatpush1.msra.mxu0 0.0
        %3040 = vmatprep.subr.mxu0 0.0
        %3041 = vmatpush1.msra.mxu0 0.0
        %3042 = vmatprep.subr.mxu0 0.0
        %3043 = vmatpush1.msra.mxu0 0.0
        %3044 = vmatprep.subr.mxu0 0.0
        %3045 = vmatpush1.msra.mxu0 %v287
        %3046 = vmatprep.subr.mxu0 0.0
        %3047 = vmatpush2.msra.mxu0 0.0
        %3048 = vmatprep.subr.mxu0 0.0
        %3049 = vmatpush2.msra.mxu0 0.0
        %3050 = vmatprep.subr.mxu0 0.0
        %3051 = vmatpush2.msra.mxu0 0.0
        %3052 = vmatprep.subr.mxu0 0.0
        %3053 = vmatpush2.msra.mxu0 0.0
        %3054 = vmatprep.subr.mxu0 0.0
        %3055 = vmatpush2.msra.mxu0 0.0
        %3056 = vmatprep.subr.mxu0 0.0
        %3057 = vmatpush2.msra.mxu0 0.0
        %3058 = vmatprep.subr.mxu0 0.0
        %3059 = vmatpush2.msra.mxu0 0.0
        %3060 = vmatprep.subr.mxu0 0.0
        %3061 = vmatpush2.msra.mxu0 0.0
        %3062 = vmatprep.subr.mxu0 0.0
        %3063 = vmatpush2.msra.mxu0 0.0
        %3064 = vmatprep.subr.mxu0 0.0
        %3065 = vmatpush2.msra.mxu0 0.0
        %3066 = vmatprep.subr.mxu0 0.0
        %3067 = vmatpush2.msra.mxu0 0.0
        %3068 = vmatprep.subr.mxu0 0.0
        %3069 = vmatpush2.msra.mxu0 0.0
        %3070 = vmatprep.subr.mxu0 0.0
        %3071 = vmatpush2.msra.mxu0 0.0
        %3072 = vmatprep.subr.mxu0 0.0
        %3073 = vmatpush2.msra.mxu0 0.0
        %3074 = vmatprep.subr.mxu0 0.0
        %3075 = vmatpush2.msra.mxu0 0.0
        %3076 = vmatprep.subr.mxu0 0.0
        %3077 = vmatpush2.msra.mxu0 0.0
        %3078 = vmatprep.mubr.f32.mxu0 0.0
        %3079 = vmatmul.mubr.f32.gmra.mxu0 %v3012
        %v3080 = vpop.f32.mrf.mxu0
        %v3081 = vadd.f32 0.0, %v3080
        %v3082 = vpop.f32.mrf.mxu0
        %3083 = vdwg.mxu0
        %v3084 = vsel %vm1011, %v1971, 0
        %3086 = vmatprep.subr.mxu0 0.0
        %3087 = vmatpush1.msra.mxu0 0.0
        %3088 = vmatprep.subr.mxu0 0.0
        %3089 = vmatpush1.msra.mxu0 0.0
        %3090 = vmatprep.subr.mxu0 0.0
        %3091 = vmatpush1.msra.mxu0 0.0
        %3092 = vmatprep.subr.mxu0 0.0
        %3093 = vmatpush1.msra.mxu0 0.0
        %3094 = vmatprep.subr.mxu0 0.0
        %3095 = vmatpush1.msra.mxu0 0.0
        %3096 = vmatprep.subr.mxu0 0.0
        %3097 = vmatpush1.msra.mxu0 0.0
        %3098 = vmatprep.subr.mxu0 0.0
        %3099 = vmatpush1.msra.mxu0 0.0
        %3100 = vmatprep.subr.mxu0 0.0
        %3101 = vmatpush1.msra.mxu0 0.0
        %3102 = vmatprep.subr.mxu0 0.0
        %3103 = vmatpush1.msra.mxu0 0.0
        %3104 = vmatprep.subr.mxu0 0.0
        %3105 = vmatpush1.msra.mxu0 0.0
        %3106 = vmatprep.subr.mxu0 0.0
        %3107 = vmatpush1.msra.mxu0 0.0
        %3108 = vmatprep.subr.mxu0 0.0
        %3109 = vmatpush1.msra.mxu0 0.0
        %3110 = vmatprep.subr.mxu0 0.0
        %3111 = vmatpush1.msra.mxu0 0.0
        %3112 = vmatprep.subr.mxu0 0.0
        %3113 = vmatpush1.msra.mxu0 0.0
        %3114 = vmatprep.subr.mxu0 0.0
        %3115 = vmatpush1.msra.mxu0 0.0
        %3116 = vmatprep.subr.mxu0 0.0
        %3117 = vmatpush1.msra.mxu0 %v288
        %3118 = vmatprep.subr.mxu0 0.0
        %3119 = vmatpush2.msra.mxu0 0.0
        %3120 = vmatprep.subr.mxu0 0.0
        %3121 = vmatpush2.msra.mxu0 0.0
        %3122 = vmatprep.subr.mxu0 0.0
        %3123 = vmatpush2.msra.mxu0 0.0
        %3124 = vmatprep.subr.mxu0 0.0
        %3125 = vmatpush2.msra.mxu0 0.0
        %3126 = vmatprep.subr.mxu0 0.0
        %3127 = vmatpush2.msra.mxu0 0.0
        %3128 = vmatprep.subr.mxu0 0.0
        %3129 = vmatpush2.msra.mxu0 0.0
        %3130 = vmatprep.subr.mxu0 0.0
        %3131 = vmatpush2.msra.mxu0 0.0
        %3132 = vmatprep.subr.mxu0 0.0
        %3133 = vmatpush2.msra.mxu0 0.0
        %3134 = vmatprep.subr.mxu0 0.0
        %3135 = vmatpush2.msra.mxu0 0.0
        %3136 = vmatprep.subr.mxu0 0.0
        %3137 = vmatpush2.msra.mxu0 0.0
        %3138 = vmatprep.subr.mxu0 0.0
        %3139 = vmatpush2.msra.mxu0 0.0
        %3140 = vmatprep.subr.mxu0 0.0
        %3141 = vmatpush2.msra.mxu0 0.0
        %3142 = vmatprep.subr.mxu0 0.0
        %3143 = vmatpush2.msra.mxu0 0.0
        %3144 = vmatprep.subr.mxu0 0.0
        %3145 = vmatpush2.msra.mxu0 0.0
        %3146 = vmatprep.subr.mxu0 0.0
        %3147 = vmatpush2.msra.mxu0 0.0
        %3148 = vmatprep.subr.mxu0 0.0
        %3149 = vmatpush2.msra.mxu0 0.0
        %3150 = vmatprep.mubr.f32.mxu0 0.0
        %3151 = vmatmul.mubr.f32.gmra.mxu0 %v3084
        %v3152 = vpop.f32.mrf.mxu0
        %v3153 = vadd.f32 0.0, %v3152
        %v3154 = vpop.f32.mrf.mxu0
        %3155 = vdwg.mxu0
        %v3156 = vsel %vm1011, %v1975, 0
        %3158 = vmatprep.subr.mxu0 0.0
        %3159 = vmatpush1.msra.mxu0 0.0
        %3160 = vmatprep.subr.mxu0 0.0
        %3161 = vmatpush1.msra.mxu0 0.0
        %3162 = vmatprep.subr.mxu0 0.0
        %3163 = vmatpush1.msra.mxu0 0.0
        %3164 = vmatprep.subr.mxu0 0.0
        %3165 = vmatpush1.msra.mxu0 0.0
        %3166 = vmatprep.subr.mxu0 0.0
        %3167 = vmatpush1.msra.mxu0 0.0
        %3168 = vmatprep.subr.mxu0 0.0
        %3169 = vmatpush1.msra.mxu0 0.0
        %3170 = vmatprep.subr.mxu0 0.0
        %3171 = vmatpush1.msra.mxu0 0.0
        %3172 = vmatprep.subr.mxu0 0.0
        %3173 = vmatpush1.msra.mxu0 0.0
        %3174 = vmatprep.subr.mxu0 0.0
        %3175 = vmatpush1.msra.mxu0 0.0
        %3176 = vmatprep.subr.mxu0 0.0
        %3177 = vmatpush1.msra.mxu0 0.0
        %3178 = vmatprep.subr.mxu0 0.0
        %3179 = vmatpush1.msra.mxu0 0.0
        %3180 = vmatprep.subr.mxu0 0.0
        %3181 = vmatpush1.msra.mxu0 0.0
        %3182 = vmatprep.subr.mxu0 0.0
        %3183 = vmatpush1.msra.mxu0 0.0
        %3184 = vmatprep.subr.mxu0 0.0
        %3185 = vmatpush1.msra.mxu0 0.0
        %3186 = vmatprep.subr.mxu0 0.0
        %3187 = vmatpush1.msra.mxu0 0.0
        %3188 = vmatprep.subr.mxu0 0.0
        %3189 = vmatpush1.msra.mxu0 %v289
        %3190 = vmatprep.subr.mxu0 0.0
        %3191 = vmatpush2.msra.mxu0 0.0
        %3192 = vmatprep.subr.mxu0 0.0
        %3193 = vmatpush2.msra.mxu0 0.0
        %3194 = vmatprep.subr.mxu0 0.0
        %3195 = vmatpush2.msra.mxu0 0.0
        %3196 = vmatprep.subr.mxu0 0.0
        %3197 = vmatpush2.msra.mxu0 0.0
        %3198 = vmatprep.subr.mxu0 0.0
        %3199 = vmatpush2.msra.mxu0 0.0
        %3200 = vmatprep.subr.mxu0 0.0
        %3201 = vmatpush2.msra.mxu0 0.0
        %3202 = vmatprep.subr.mxu0 0.0
        %3203 = vmatpush2.msra.mxu0 0.0
        %3204 = vmatprep.subr.mxu0 0.0
        %3205 = vmatpush2.msra.mxu0 0.0
        %3206 = vmatprep.subr.mxu0 0.0
        %3207 = vmatpush2.msra.mxu0 0.0
        %3208 = vmatprep.subr.mxu0 0.0
        %3209 = vmatpush2.msra.mxu0 0.0
        %3210 = vmatprep.subr.mxu0 0.0
        %3211 = vmatpush2.msra.mxu0 0.0
        %3212 = vmatprep.subr.mxu0 0.0
        %3213 = vmatpush2.msra.mxu0 0.0
        %3214 = vmatprep.subr.mxu0 0.0
        %3215 = vmatpush2.msra.mxu0 0.0
        %3216 = vmatprep.subr.mxu0 0.0
        %3217 = vmatpush2.msra.mxu0 0.0
        %3218 = vmatprep.subr.mxu0 0.0
        %3219 = vmatpush2.msra.mxu0 0.0
        %3220 = vmatprep.subr.mxu0 0.0
        %3221 = vmatpush2.msra.mxu0 0.0
        %3222 = vmatprep.mubr.f32.mxu0 0.0
        %3223 = vmatmul.mubr.f32.gmra.mxu0 %v3156
        %v3224 = vpop.f32.mrf.mxu0
        %v3225 = vadd.f32 0.0, %v3224
        %v3226 = vpop.f32.mrf.mxu0
        %3227 = vdwg.mxu0
        %v3228 = vsel %vm1011, %v1979, 0
        %3230 = vmatprep.subr.mxu0 0.0
        %3231 = vmatpush1.msra.mxu0 0.0
        %3232 = vmatprep.subr.mxu0 0.0
        %3233 = vmatpush1.msra.mxu0 0.0
        %3234 = vmatprep.subr.mxu0 0.0
        %3235 = vmatpush1.msra.mxu0 0.0
        %3236 = vmatprep.subr.mxu0 0.0
        %3237 = vmatpush1.msra.mxu0 0.0
        %3238 = vmatprep.subr.mxu0 0.0
        %3239 = vmatpush1.msra.mxu0 0.0
        %3240 = vmatprep.subr.mxu0 0.0
        %3241 = vmatpush1.msra.mxu0 0.0
        %3242 = vmatprep.subr.mxu0 0.0
        %3243 = vmatpush1.msra.mxu0 0.0
        %3244 = vmatprep.subr.mxu0 0.0
        %3245 = vmatpush1.msra.mxu0 0.0
        %3246 = vmatprep.subr.mxu0 0.0
        %3247 = vmatpush1.msra.mxu0 0.0
        %3248 = vmatprep.subr.mxu0 0.0
        %3249 = vmatpush1.msra.mxu0 0.0
        %3250 = vmatprep.subr.mxu0 0.0
        %3251 = vmatpush1.msra.mxu0 0.0
        %3252 = vmatprep.subr.mxu0 0.0
        %3253 = vmatpush1.msra.mxu0 0.0
        %3254 = vmatprep.subr.mxu0 0.0
        %3255 = vmatpush1.msra.mxu0 0.0
        %3256 = vmatprep.subr.mxu0 0.0
        %3257 = vmatpush1.msra.mxu0 0.0
        %3258 = vmatprep.subr.mxu0 0.0
        %3259 = vmatpush1.msra.mxu0 0.0
        %3260 = vmatprep.subr.mxu0 0.0
        %3261 = vmatpush1.msra.mxu0 %v290
        %3262 = vmatprep.subr.mxu0 0.0
        %3263 = vmatpush2.msra.mxu0 0.0
        %3264 = vmatprep.subr.mxu0 0.0
        %3265 = vmatpush2.msra.mxu0 0.0
        %3266 = vmatprep.subr.mxu0 0.0
        %3267 = vmatpush2.msra.mxu0 0.0
        %3268 = vmatprep.subr.mxu0 0.0
        %3269 = vmatpush2.msra.mxu0 0.0
        %3270 = vmatprep.subr.mxu0 0.0
        %3271 = vmatpush2.msra.mxu0 0.0
        %3272 = vmatprep.subr.mxu0 0.0
        %3273 = vmatpush2.msra.mxu0 0.0
        %3274 = vmatprep.subr.mxu0 0.0
        %3275 = vmatpush2.msra.mxu0 0.0
        %3276 = vmatprep.subr.mxu0 0.0
        %3277 = vmatpush2.msra.mxu0 0.0
        %3278 = vmatprep.subr.mxu0 0.0
        %3279 = vmatpush2.msra.mxu0 0.0
        %3280 = vmatprep.subr.mxu0 0.0
        %3281 = vmatpush2.msra.mxu0 0.0
        %3282 = vmatprep.subr.mxu0 0.0
        %3283 = vmatpush2.msra.mxu0 0.0
        %3284 = vmatprep.subr.mxu0 0.0
        %3285 = vmatpush2.msra.mxu0 0.0
        %3286 = vmatprep.subr.mxu0 0.0
        %3287 = vmatpush2.msra.mxu0 0.0
        %3288 = vmatprep.subr.mxu0 0.0
        %3289 = vmatpush2.msra.mxu0 0.0
        %3290 = vmatprep.subr.mxu0 0.0
        %3291 = vmatpush2.msra.mxu0 0.0
        %3292 = vmatprep.subr.mxu0 0.0
        %3293 = vmatpush2.msra.mxu0 0.0
        %3294 = vmatprep.mubr.f32.mxu0 0.0
        %3295 = vmatmul.mubr.f32.gmra.mxu0 %v3228
        %v3296 = vpop.f32.mrf.mxu0
        %v3297 = vadd.f32 0.0, %v3296
        %v3298 = vpop.f32.mrf.mxu0
        %3299 = vdwg.mxu0
        %v3300 = vsel %vm1011, %v1983, 0
        %3302 = vmatprep.subr.mxu0 0.0
        %3303 = vmatpush1.msra.mxu0 0.0
        %3304 = vmatprep.subr.mxu0 0.0
        %3305 = vmatpush1.msra.mxu0 0.0
        %3306 = vmatprep.subr.mxu0 0.0
        %3307 = vmatpush1.msra.mxu0 0.0
        %3308 = vmatprep.subr.mxu0 0.0
        %3309 = vmatpush1.msra.mxu0 0.0
        %3310 = vmatprep.subr.mxu0 0.0
        %3311 = vmatpush1.msra.mxu0 0.0
        %3312 = vmatprep.subr.mxu0 0.0
        %3313 = vmatpush1.msra.mxu0 0.0
        %3314 = vmatprep.subr.mxu0 0.0
        %3315 = vmatpush1.msra.mxu0 0.0
        %3316 = vmatprep.subr.mxu0 0.0
        %3317 = vmatpush1.msra.mxu0 0.0
        %3318 = vmatprep.subr.mxu0 0.0
        %3319 = vmatpush1.msra.mxu0 0.0
        %3320 = vmatprep.subr.mxu0 0.0
        %3321 = vmatpush1.msra.mxu0 0.0
        %3322 = vmatprep.subr.mxu0 0.0
        %3323 = vmatpush1.msra.mxu0 0.0
        %3324 = vmatprep.subr.mxu0 0.0
        %3325 = vmatpush1.msra.mxu0 0.0
        %3326 = vmatprep.subr.mxu0 0.0
        %3327 = vmatpush1.msra.mxu0 0.0
        %3328 = vmatprep.subr.mxu0 0.0
        %3329 = vmatpush1.msra.mxu0 0.0
        %3330 = vmatprep.subr.mxu0 0.0
        %3331 = vmatpush1.msra.mxu0 0.0
        %3332 = vmatprep.subr.mxu0 0.0
        %3333 = vmatpush1.msra.mxu0 %v291
        %3334 = vmatprep.subr.mxu0 0.0
        %3335 = vmatpush2.msra.mxu0 0.0
        %3336 = vmatprep.subr.mxu0 0.0
        %3337 = vmatpush2.msra.mxu0 0.0
        %3338 = vmatprep.subr.mxu0 0.0
        %3339 = vmatpush2.msra.mxu0 0.0
        %3340 = vmatprep.subr.mxu0 0.0
        %3341 = vmatpush2.msra.mxu0 0.0
        %3342 = vmatprep.subr.mxu0 0.0
        %3343 = vmatpush2.msra.mxu0 0.0
        %3344 = vmatprep.subr.mxu0 0.0
        %3345 = vmatpush2.msra.mxu0 0.0
        %3346 = vmatprep.subr.mxu0 0.0
        %3347 = vmatpush2.msra.mxu0 0.0
        %3348 = vmatprep.subr.mxu0 0.0
        %3349 = vmatpush2.msra.mxu0 0.0
        %3350 = vmatprep.subr.mxu0 0.0
        %3351 = vmatpush2.msra.mxu0 0.0
        %3352 = vmatprep.subr.mxu0 0.0
        %3353 = vmatpush2.msra.mxu0 0.0
        %3354 = vmatprep.subr.mxu0 0.0
        %3355 = vmatpush2.msra.mxu0 0.0
        %3356 = vmatprep.subr.mxu0 0.0
        %3357 = vmatpush2.msra.mxu0 0.0
        %3358 = vmatprep.subr.mxu0 0.0
        %3359 = vmatpush2.msra.mxu0 0.0
        %3360 = vmatprep.subr.mxu0 0.0
        %3361 = vmatpush2.msra.mxu0 0.0
        %3362 = vmatprep.subr.mxu0 0.0
        %3363 = vmatpush2.msra.mxu0 0.0
        %3364 = vmatprep.subr.mxu0 0.0
        %3365 = vmatpush2.msra.mxu0 0.0
        %3366 = vmatprep.mubr.f32.mxu0 0.0
        %3367 = vmatmul.mubr.f32.gmra.mxu0 %v3300
        %v3368 = vpop.f32.mrf.mxu0
        %v3369 = vadd.f32 0.0, %v3368
        %v3370 = vpop.f32.mrf.mxu0
        %3371 = vdwg.mxu0
        %v3372 = vsel %vm1011, %v1987, 0
        %3374 = vmatprep.subr.mxu0 0.0
        %3375 = vmatpush1.msra.mxu0 0.0
        %3376 = vmatprep.subr.mxu0 0.0
        %3377 = vmatpush1.msra.mxu0 0.0
        %3378 = vmatprep.subr.mxu0 0.0
        %3379 = vmatpush1.msra.mxu0 0.0
        %3380 = vmatprep.subr.mxu0 0.0
        %3381 = vmatpush1.msra.mxu0 0.0
        %3382 = vmatprep.subr.mxu0 0.0
        %3383 = vmatpush1.msra.mxu0 0.0
        %3384 = vmatprep.subr.mxu0 0.0
        %3385 = vmatpush1.msra.mxu0 0.0
        %3386 = vmatprep.subr.mxu0 0.0
        %3387 = vmatpush1.msra.mxu0 0.0
        %3388 = vmatprep.subr.mxu0 0.0
        %3389 = vmatpush1.msra.mxu0 0.0
        %3390 = vmatprep.subr.mxu0 0.0
        %3391 = vmatpush1.msra.mxu0 0.0
        %3392 = vmatprep.subr.mxu0 0.0
        %3393 = vmatpush1.msra.mxu0 0.0
        %3394 = vmatprep.subr.mxu0 0.0
        %3395 = vmatpush1.msra.mxu0 0.0
        %3396 = vmatprep.subr.mxu0 0.0
        %3397 = vmatpush1.msra.mxu0 0.0
        %3398 = vmatprep.subr.mxu0 0.0
        %3399 = vmatpush1.msra.mxu0 0.0
        %3400 = vmatprep.subr.mxu0 0.0
        %3401 = vmatpush1.msra.mxu0 0.0
        %3402 = vmatprep.subr.mxu0 0.0
        %3403 = vmatpush1.msra.mxu0 0.0
        %3404 = vmatprep.subr.mxu0 0.0
        %3405 = vmatpush1.msra.mxu0 %v292
        %3406 = vmatprep.subr.mxu0 0.0
        %3407 = vmatpush2.msra.mxu0 0.0
        %3408 = vmatprep.subr.mxu0 0.0
        %3409 = vmatpush2.msra.mxu0 0.0
        %3410 = vmatprep.subr.mxu0 0.0
        %3411 = vmatpush2.msra.mxu0 0.0
        %3412 = vmatprep.subr.mxu0 0.0
        %3413 = vmatpush2.msra.mxu0 0.0
        %3414 = vmatprep.subr.mxu0 0.0
        %3415 = vmatpush2.msra.mxu0 0.0
        %3416 = vmatprep.subr.mxu0 0.0
        %3417 = vmatpush2.msra.mxu0 0.0
        %3418 = vmatprep.subr.mxu0 0.0
        %3419 = vmatpush2.msra.mxu0 0.0
        %3420 = vmatprep.subr.mxu0 0.0
        %3421 = vmatpush2.msra.mxu0 0.0
        %3422 = vmatprep.subr.mxu0 0.0
        %3423 = vmatpush2.msra.mxu0 0.0
        %3424 = vmatprep.subr.mxu0 0.0
        %3425 = vmatpush2.msra.mxu0 0.0
        %3426 = vmatprep.subr.mxu0 0.0
        %3427 = vmatpush2.msra.mxu0 0.0
        %3428 = vmatprep.subr.mxu0 0.0
        %3429 = vmatpush2.msra.mxu0 0.0
        %3430 = vmatprep.subr.mxu0 0.0
        %3431 = vmatpush2.msra.mxu0 0.0
        %3432 = vmatprep.subr.mxu0 0.0
        %3433 = vmatpush2.msra.mxu0 0.0
        %3434 = vmatprep.subr.mxu0 0.0
        %3435 = vmatpush2.msra.mxu0 0.0
        %3436 = vmatprep.subr.mxu0 0.0
        %3437 = vmatpush2.msra.mxu0 0.0
        %3438 = vmatprep.mubr.f32.mxu0 0.0
        %3439 = vmatmul.mubr.f32.gmra.mxu0 %v3372
        %v3440 = vpop.f32.mrf.mxu0
        %v3441 = vadd.f32 0.0, %v3440
        %v3442 = vpop.f32.mrf.mxu0
        %3443 = vdwg.mxu0
        %v3444 = vsel %vm1011, %v1991, 0
        %3446 = vmatprep.subr.mxu0 0.0
        %3447 = vmatpush1.msra.mxu0 0.0
        %3448 = vmatprep.subr.mxu0 0.0
        %3449 = vmatpush1.msra.mxu0 0.0
        %3450 = vmatprep.subr.mxu0 0.0
        %3451 = vmatpush1.msra.mxu0 0.0
        %3452 = vmatprep.subr.mxu0 0.0
        %3453 = vmatpush1.msra.mxu0 0.0
        %3454 = vmatprep.subr.mxu0 0.0
        %3455 = vmatpush1.msra.mxu0 0.0
        %3456 = vmatprep.subr.mxu0 0.0
        %3457 = vmatpush1.msra.mxu0 0.0
        %3458 = vmatprep.subr.mxu0 0.0
        %3459 = vmatpush1.msra.mxu0 0.0
        %3460 = vmatprep.subr.mxu0 0.0
        %3461 = vmatpush1.msra.mxu0 0.0
        %3462 = vmatprep.subr.mxu0 0.0
        %3463 = vmatpush1.msra.mxu0 0.0
        %3464 = vmatprep.subr.mxu0 0.0
        %3465 = vmatpush1.msra.mxu0 0.0
        %3466 = vmatprep.subr.mxu0 0.0
        %3467 = vmatpush1.msra.mxu0 0.0
        %3468 = vmatprep.subr.mxu0 0.0
        %3469 = vmatpush1.msra.mxu0 0.0
        %3470 = vmatprep.subr.mxu0 0.0
        %3471 = vmatpush1.msra.mxu0 0.0
        %3472 = vmatprep.subr.mxu0 0.0
        %3473 = vmatpush1.msra.mxu0 0.0
        %3474 = vmatprep.subr.mxu0 0.0
        %3475 = vmatpush1.msra.mxu0 0.0
        %3476 = vmatprep.subr.mxu0 0.0
        %3477 = vmatpush1.msra.mxu0 %v293
        %3478 = vmatprep.subr.mxu0 0.0
        %3479 = vmatpush2.msra.mxu0 0.0
        %3480 = vmatprep.subr.mxu0 0.0
        %3481 = vmatpush2.msra.mxu0 0.0
        %3482 = vmatprep.subr.mxu0 0.0
        %3483 = vmatpush2.msra.mxu0 0.0
        %3484 = vmatprep.subr.mxu0 0.0
        %3485 = vmatpush2.msra.mxu0 0.0
        %3486 = vmatprep.subr.mxu0 0.0
        %3487 = vmatpush2.msra.mxu0 0.0
        %3488 = vmatprep.subr.mxu0 0.0
        %3489 = vmatpush2.msra.mxu0 0.0
        %3490 = vmatprep.subr.mxu0 0.0
        %3491 = vmatpush2.msra.mxu0 0.0
        %3492 = vmatprep.subr.mxu0 0.0
        %3493 = vmatpush2.msra.mxu0 0.0
        %3494 = vmatprep.subr.mxu0 0.0
        %3495 = vmatpush2.msra.mxu0 0.0
        %3496 = vmatprep.subr.mxu0 0.0
        %3497 = vmatpush2.msra.mxu0 0.0
        %3498 = vmatprep.subr.mxu0 0.0
        %3499 = vmatpush2.msra.mxu0 0.0
        %3500 = vmatprep.subr.mxu0 0.0
        %3501 = vmatpush2.msra.mxu0 0.0
        %3502 = vmatprep.subr.mxu0 0.0
        %3503 = vmatpush2.msra.mxu0 0.0
        %3504 = vmatprep.subr.mxu0 0.0
        %3505 = vmatpush2.msra.mxu0 0.0
        %3506 = vmatprep.subr.mxu0 0.0
        %3507 = vmatpush2.msra.mxu0 0.0
        %3508 = vmatprep.subr.mxu0 0.0
        %3509 = vmatpush2.msra.mxu0 0.0
        %3510 = vmatprep.mubr.f32.mxu0 0.0
        %3511 = vmatmul.mubr.f32.gmra.mxu0 %v3444
        %v3512 = vpop.f32.mrf.mxu0
        %v3513 = vadd.f32 0.0, %v3512
        %v3514 = vpop.f32.mrf.mxu0
        %3515 = vdwg.mxu0
        %v3516 = vsel %vm1011, %v1995, 0
        %3518 = vmatprep.subr.mxu0 0.0
        %3519 = vmatpush1.msra.mxu0 0.0
        %3520 = vmatprep.subr.mxu0 0.0
        %3521 = vmatpush1.msra.mxu0 0.0
        %3522 = vmatprep.subr.mxu0 0.0
        %3523 = vmatpush1.msra.mxu0 0.0
        %3524 = vmatprep.subr.mxu0 0.0
        %3525 = vmatpush1.msra.mxu0 0.0
        %3526 = vmatprep.subr.mxu0 0.0
        %3527 = vmatpush1.msra.mxu0 0.0
        %3528 = vmatprep.subr.mxu0 0.0
        %3529 = vmatpush1.msra.mxu0 0.0
        %3530 = vmatprep.subr.mxu0 0.0
        %3531 = vmatpush1.msra.mxu0 0.0
        %3532 = vmatprep.subr.mxu0 0.0
        %3533 = vmatpush1.msra.mxu0 0.0
        %3534 = vmatprep.subr.mxu0 0.0
        %3535 = vmatpush1.msra.mxu0 0.0
        %3536 = vmatprep.subr.mxu0 0.0
        %3537 = vmatpush1.msra.mxu0 0.0
        %3538 = vmatprep.subr.mxu0 0.0
        %3539 = vmatpush1.msra.mxu0 0.0
        %3540 = vmatprep.subr.mxu0 0.0
        %3541 = vmatpush1.msra.mxu0 0.0
        %3542 = vmatprep.subr.mxu0 0.0
        %3543 = vmatpush1.msra.mxu0 0.0
        %3544 = vmatprep.subr.mxu0 0.0
        %3545 = vmatpush1.msra.mxu0 0.0
        %3546 = vmatprep.subr.mxu0 0.0
        %3547 = vmatpush1.msra.mxu0 0.0
        %3548 = vmatprep.subr.mxu0 0.0
        %3549 = vmatpush1.msra.mxu0 %v294
        %3550 = vmatprep.subr.mxu0 0.0
        %3551 = vmatpush2.msra.mxu0 0.0
        %3552 = vmatprep.subr.mxu0 0.0
        %3553 = vmatpush2.msra.mxu0 0.0
        %3554 = vmatprep.subr.mxu0 0.0
        %3555 = vmatpush2.msra.mxu0 0.0
        %3556 = vmatprep.subr.mxu0 0.0
        %3557 = vmatpush2.msra.mxu0 0.0
        %3558 = vmatprep.subr.mxu0 0.0
        %3559 = vmatpush2.msra.mxu0 0.0
        %3560 = vmatprep.subr.mxu0 0.0
        %3561 = vmatpush2.msra.mxu0 0.0
        %3562 = vmatprep.subr.mxu0 0.0
        %3563 = vmatpush2.msra.mxu0 0.0
        %3564 = vmatprep.subr.mxu0 0.0
        %3565 = vmatpush2.msra.mxu0 0.0
        %3566 = vmatprep.subr.mxu0 0.0
        %3567 = vmatpush2.msra.mxu0 0.0
        %3568 = vmatprep.subr.mxu0 0.0
        %3569 = vmatpush2.msra.mxu0 0.0
        %3570 = vmatprep.subr.mxu0 0.0
        %3571 = vmatpush2.msra.mxu0 0.0
        %3572 = vmatprep.subr.mxu0 0.0
        %3573 = vmatpush2.msra.mxu0 0.0
        %3574 = vmatprep.subr.mxu0 0.0
        %3575 = vmatpush2.msra.mxu0 0.0
        %3576 = vmatprep.subr.mxu0 0.0
        %3577 = vmatpush2.msra.mxu0 0.0
        %3578 = vmatprep.subr.mxu0 0.0
        %3579 = vmatpush2.msra.mxu0 0.0
        %3580 = vmatprep.subr.mxu0 0.0
        %3581 = vmatpush2.msra.mxu0 0.0
        %3582 = vmatprep.mubr.f32.mxu0 0.0
        %3583 = vmatmul.mubr.f32.gmra.mxu0 %v3516
        %v3584 = vpop.f32.mrf.mxu0
        %v3585 = vadd.f32 0.0, %v3584
        %v3586 = vpop.f32.mrf.mxu0
        %3587 = vdwg.mxu0
        %v3588 = vsel %vm1011, %v1999, 0
        %3590 = vmatprep.subr.mxu0 0.0
        %3591 = vmatpush1.msra.mxu0 0.0
        %3592 = vmatprep.subr.mxu0 0.0
        %3593 = vmatpush1.msra.mxu0 0.0
        %3594 = vmatprep.subr.mxu0 0.0
        %3595 = vmatpush1.msra.mxu0 0.0
        %3596 = vmatprep.subr.mxu0 0.0
        %3597 = vmatpush1.msra.mxu0 0.0
        %3598 = vmatprep.subr.mxu0 0.0
        %3599 = vmatpush1.msra.mxu0 0.0
        %3600 = vmatprep.subr.mxu0 0.0
        %3601 = vmatpush1.msra.mxu0 0.0
        %3602 = vmatprep.subr.mxu0 0.0
        %3603 = vmatpush1.msra.mxu0 0.0
        %3604 = vmatprep.subr.mxu0 0.0
        %3605 = vmatpush1.msra.mxu0 0.0
        %3606 = vmatprep.subr.mxu0 0.0
        %3607 = vmatpush1.msra.mxu0 0.0
        %3608 = vmatprep.subr.mxu0 0.0
        %3609 = vmatpush1.msra.mxu0 0.0
        %3610 = vmatprep.subr.mxu0 0.0
        %3611 = vmatpush1.msra.mxu0 0.0
        %3612 = vmatprep.subr.mxu0 0.0
        %3613 = vmatpush1.msra.mxu0 0.0
        %3614 = vmatprep.subr.mxu0 0.0
        %3615 = vmatpush1.msra.mxu0 0.0
        %3616 = vmatprep.subr.mxu0 0.0
        %3617 = vmatpush1.msra.mxu0 0.0
        %3618 = vmatprep.subr.mxu0 0.0
        %3619 = vmatpush1.msra.mxu0 0.0
        %3620 = vmatprep.subr.mxu0 0.0
        %3621 = vmatpush1.msra.mxu0 %v295
        %3622 = vmatprep.subr.mxu0 0.0
        %3623 = vmatpush2.msra.mxu0 0.0
        %3624 = vmatprep.subr.mxu0 0.0
        %3625 = vmatpush2.msra.mxu0 0.0
        %3626 = vmatprep.subr.mxu0 0.0
        %3627 = vmatpush2.msra.mxu0 0.0
        %3628 = vmatprep.subr.mxu0 0.0
        %3629 = vmatpush2.msra.mxu0 0.0
        %3630 = vmatprep.subr.mxu0 0.0
        %3631 = vmatpush2.msra.mxu0 0.0
        %3632 = vmatprep.subr.mxu0 0.0
        %3633 = vmatpush2.msra.mxu0 0.0
        %3634 = vmatprep.subr.mxu0 0.0
        %3635 = vmatpush2.msra.mxu0 0.0
        %3636 = vmatprep.subr.mxu0 0.0
        %3637 = vmatpush2.msra.mxu0 0.0
        %3638 = vmatprep.subr.mxu0 0.0
        %3639 = vmatpush2.msra.mxu0 0.0
        %3640 = vmatprep.subr.mxu0 0.0
        %3641 = vmatpush2.msra.mxu0 0.0
        %3642 = vmatprep.subr.mxu0 0.0
        %3643 = vmatpush2.msra.mxu0 0.0
        %3644 = vmatprep.subr.mxu0 0.0
        %3645 = vmatpush2.msra.mxu0 0.0
        %3646 = vmatprep.subr.mxu0 0.0
        %3647 = vmatpush2.msra.mxu0 0.0
        %3648 = vmatprep.subr.mxu0 0.0
        %3649 = vmatpush2.msra.mxu0 0.0
        %3650 = vmatprep.subr.mxu0 0.0
        %3651 = vmatpush2.msra.mxu0 0.0
        %3652 = vmatprep.subr.mxu0 0.0
        %3653 = vmatpush2.msra.mxu0 0.0
        %3654 = vmatprep.mubr.f32.mxu0 0.0
        %3655 = vmatmul.mubr.f32.gmra.mxu0 %v3588
        %v3656 = vpop.f32.mrf.mxu0
        %v3657 = vadd.f32 0.0, %v3656
        %v3658 = vpop.f32.mrf.mxu0
        %3659 = vdwg.mxu0
        %v3660 = vsel %vm1011, %v2003, 0
        %3662 = vmatprep.subr.mxu0 0.0
        %3663 = vmatpush1.msra.mxu0 0.0
        %3664 = vmatprep.subr.mxu0 0.0
        %3665 = vmatpush1.msra.mxu0 0.0
        %3666 = vmatprep.subr.mxu0 0.0
        %3667 = vmatpush1.msra.mxu0 0.0
        %3668 = vmatprep.subr.mxu0 0.0
        %3669 = vmatpush1.msra.mxu0 0.0
        %3670 = vmatprep.subr.mxu0 0.0
        %3671 = vmatpush1.msra.mxu0 0.0
        %3672 = vmatprep.subr.mxu0 0.0
        %3673 = vmatpush1.msra.mxu0 0.0
        %3674 = vmatprep.subr.mxu0 0.0
        %3675 = vmatpush1.msra.mxu0 0.0
        %3676 = vmatprep.subr.mxu0 0.0
        %3677 = vmatpush1.msra.mxu0 0.0
        %3678 = vmatprep.subr.mxu0 0.0
        %3679 = vmatpush1.msra.mxu0 0.0
        %3680 = vmatprep.subr.mxu0 0.0
        %3681 = vmatpush1.msra.mxu0 0.0
        %3682 = vmatprep.subr.mxu0 0.0
        %3683 = vmatpush1.msra.mxu0 0.0
        %3684 = vmatprep.subr.mxu0 0.0
        %3685 = vmatpush1.msra.mxu0 0.0
        %3686 = vmatprep.subr.mxu0 0.0
        %3687 = vmatpush1.msra.mxu0 0.0
        %3688 = vmatprep.subr.mxu0 0.0
        %3689 = vmatpush1.msra.mxu0 0.0
        %3690 = vmatprep.subr.mxu0 0.0
        %3691 = vmatpush1.msra.mxu0 0.0
        %3692 = vmatprep.subr.mxu0 0.0
        %3693 = vmatpush1.msra.mxu0 %v296
        %3694 = vmatprep.subr.mxu0 0.0
        %3695 = vmatpush2.msra.mxu0 0.0
        %3696 = vmatprep.subr.mxu0 0.0
        %3697 = vmatpush2.msra.mxu0 0.0
        %3698 = vmatprep.subr.mxu0 0.0
        %3699 = vmatpush2.msra.mxu0 0.0
        %3700 = vmatprep.subr.mxu0 0.0
        %3701 = vmatpush2.msra.mxu0 0.0
        %3702 = vmatprep.subr.mxu0 0.0
        %3703 = vmatpush2.msra.mxu0 0.0
        %3704 = vmatprep.subr.mxu0 0.0
        %3705 = vmatpush2.msra.mxu0 0.0
        %3706 = vmatprep.subr.mxu0 0.0
        %3707 = vmatpush2.msra.mxu0 0.0
        %3708 = vmatprep.subr.mxu0 0.0
        %3709 = vmatpush2.msra.mxu0 0.0
        %3710 = vmatprep.subr.mxu0 0.0
        %3711 = vmatpush2.msra.mxu0 0.0
        %3712 = vmatprep.subr.mxu0 0.0
        %3713 = vmatpush2.msra.mxu0 0.0
        %3714 = vmatprep.subr.mxu0 0.0
        %3715 = vmatpush2.msra.mxu0 0.0
        %3716 = vmatprep.subr.mxu0 0.0
        %3717 = vmatpush2.msra.mxu0 0.0
        %3718 = vmatprep.subr.mxu0 0.0
        %3719 = vmatpush2.msra.mxu0 0.0
        %3720 = vmatprep.subr.mxu0 0.0
        %3721 = vmatpush2.msra.mxu0 0.0
        %3722 = vmatprep.subr.mxu0 0.0
        %3723 = vmatpush2.msra.mxu0 0.0
        %3724 = vmatprep.subr.mxu0 0.0
        %3725 = vmatpush2.msra.mxu0 0.0
        %3726 = vmatprep.mubr.f32.mxu0 0.0
        %3727 = vmatmul.mubr.f32.gmra.mxu0 %v3660
        %v3728 = vpop.f32.mrf.mxu0
        %v3729 = vadd.f32 0.0, %v3728
        %v3730 = vpop.f32.mrf.mxu0
        %3731 = vdwg.mxu0
        %v3732 = vsel %vm1011, %v2007, 0
        %3734 = vmatprep.subr.mxu0 0.0
        %3735 = vmatpush1.msra.mxu0 0.0
        %3736 = vmatprep.subr.mxu0 0.0
        %3737 = vmatpush1.msra.mxu0 0.0
        %3738 = vmatprep.subr.mxu0 0.0
        %3739 = vmatpush1.msra.mxu0 0.0
        %3740 = vmatprep.subr.mxu0 0.0
        %3741 = vmatpush1.msra.mxu0 0.0
        %3742 = vmatprep.subr.mxu0 0.0
        %3743 = vmatpush1.msra.mxu0 0.0
        %3744 = vmatprep.subr.mxu0 0.0
        %3745 = vmatpush1.msra.mxu0 0.0
        %3746 = vmatprep.subr.mxu0 0.0
        %3747 = vmatpush1.msra.mxu0 0.0
        %3748 = vmatprep.subr.mxu0 0.0
        %3749 = vmatpush1.msra.mxu0 0.0
        %3750 = vmatprep.subr.mxu0 0.0
        %3751 = vmatpush1.msra.mxu0 0.0
        %3752 = vmatprep.subr.mxu0 0.0
        %3753 = vmatpush1.msra.mxu0 0.0
        %3754 = vmatprep.subr.mxu0 0.0
        %3755 = vmatpush1.msra.mxu0 0.0
        %3756 = vmatprep.subr.mxu0 0.0
        %3757 = vmatpush1.msra.mxu0 0.0
        %3758 = vmatprep.subr.mxu0 0.0
        %3759 = vmatpush1.msra.mxu0 0.0
        %3760 = vmatprep.subr.mxu0 0.0
        %3761 = vmatpush1.msra.mxu0 0.0
        %3762 = vmatprep.subr.mxu0 0.0
        %3763 = vmatpush1.msra.mxu0 0.0
        %3764 = vmatprep.subr.mxu0 0.0
        %3765 = vmatpush1.msra.mxu0 %v297
        %3766 = vmatprep.subr.mxu0 0.0
        %3767 = vmatpush2.msra.mxu0 0.0
        %3768 = vmatprep.subr.mxu0 0.0
        %3769 = vmatpush2.msra.mxu0 0.0
        %3770 = vmatprep.subr.mxu0 0.0
        %3771 = vmatpush2.msra.mxu0 0.0
        %3772 = vmatprep.subr.mxu0 0.0
        %3773 = vmatpush2.msra.mxu0 0.0
        %3774 = vmatprep.subr.mxu0 0.0
        %3775 = vmatpush2.msra.mxu0 0.0
        %3776 = vmatprep.subr.mxu0 0.0
        %3777 = vmatpush2.msra.mxu0 0.0
        %3778 = vmatprep.subr.mxu0 0.0
        %3779 = vmatpush2.msra.mxu0 0.0
        %3780 = vmatprep.subr.mxu0 0.0
        %3781 = vmatpush2.msra.mxu0 0.0
        %3782 = vmatprep.subr.mxu0 0.0
        %3783 = vmatpush2.msra.mxu0 0.0
        %3784 = vmatprep.subr.mxu0 0.0
        %3785 = vmatpush2.msra.mxu0 0.0
        %3786 = vmatprep.subr.mxu0 0.0
        %3787 = vmatpush2.msra.mxu0 0.0
        %3788 = vmatprep.subr.mxu0 0.0
        %3789 = vmatpush2.msra.mxu0 0.0
        %3790 = vmatprep.subr.mxu0 0.0
        %3791 = vmatpush2.msra.mxu0 0.0
        %3792 = vmatprep.subr.mxu0 0.0
        %3793 = vmatpush2.msra.mxu0 0.0
        %3794 = vmatprep.subr.mxu0 0.0
        %3795 = vmatpush2.msra.mxu0 0.0
        %3796 = vmatprep.subr.mxu0 0.0
        %3797 = vmatpush2.msra.mxu0 0.0
        %3798 = vmatprep.mubr.f32.mxu0 0.0
        %3799 = vmatmul.mubr.f32.gmra.mxu0 %v3732
        %v3800 = vpop.f32.mrf.mxu0
        %v3801 = vadd.f32 0.0, %v3800
        %v3802 = vpop.f32.mrf.mxu0
        %3803 = vdwg.mxu0
        %v3804 = vsel %vm1011, %v2011, 0
        %3806 = vmatprep.subr.mxu0 0.0
        %3807 = vmatpush1.msra.mxu0 0.0
        %3808 = vmatprep.subr.mxu0 0.0
        %3809 = vmatpush1.msra.mxu0 0.0
        %3810 = vmatprep.subr.mxu0 0.0
        %3811 = vmatpush1.msra.mxu0 0.0
        %3812 = vmatprep.subr.mxu0 0.0
        %3813 = vmatpush1.msra.mxu0 0.0
        %3814 = vmatprep.subr.mxu0 0.0
        %3815 = vmatpush1.msra.mxu0 0.0
        %3816 = vmatprep.subr.mxu0 0.0
        %3817 = vmatpush1.msra.mxu0 0.0
        %3818 = vmatprep.subr.mxu0 0.0
        %3819 = vmatpush1.msra.mxu0 0.0
        %3820 = vmatprep.subr.mxu0 0.0
        %3821 = vmatpush1.msra.mxu0 0.0
        %3822 = vmatprep.subr.mxu0 0.0
        %3823 = vmatpush1.msra.mxu0 0.0
        %3824 = vmatprep.subr.mxu0 0.0
        %3825 = vmatpush1.msra.mxu0 0.0
        %3826 = vmatprep.subr.mxu0 0.0
        %3827 = vmatpush1.msra.mxu0 0.0
        %3828 = vmatprep.subr.mxu0 0.0
        %3829 = vmatpush1.msra.mxu0 0.0
        %3830 = vmatprep.subr.mxu0 0.0
        %3831 = vmatpush1.msra.mxu0 0.0
        %3832 = vmatprep.subr.mxu0 0.0
        %3833 = vmatpush1.msra.mxu0 0.0
        %3834 = vmatprep.subr.mxu0 0.0
        %3835 = vmatpush1.msra.mxu0 0.0
        %3836 = vmatprep.subr.mxu0 0.0
        %3837 = vmatpush1.msra.mxu0 %v298
        %3838 = vmatprep.subr.mxu0 0.0
        %3839 = vmatpush2.msra.mxu0 0.0
        %3840 = vmatprep.subr.mxu0 0.0
        %3841 = vmatpush2.msra.mxu0 0.0
        %3842 = vmatprep.subr.mxu0 0.0
        %3843 = vmatpush2.msra.mxu0 0.0
        %3844 = vmatprep.subr.mxu0 0.0
        %3845 = vmatpush2.msra.mxu0 0.0
        %3846 = vmatprep.subr.mxu0 0.0
        %3847 = vmatpush2.msra.mxu0 0.0
        %3848 = vmatprep.subr.mxu0 0.0
        %3849 = vmatpush2.msra.mxu0 0.0
        %3850 = vmatprep.subr.mxu0 0.0
        %3851 = vmatpush2.msra.mxu0 0.0
        %3852 = vmatprep.subr.mxu0 0.0
        %3853 = vmatpush2.msra.mxu0 0.0
        %3854 = vmatprep.subr.mxu0 0.0
        %3855 = vmatpush2.msra.mxu0 0.0
        %3856 = vmatprep.subr.mxu0 0.0
        %3857 = vmatpush2.msra.mxu0 0.0
        %3858 = vmatprep.subr.mxu0 0.0
        %3859 = vmatpush2.msra.mxu0 0.0
        %3860 = vmatprep.subr.mxu0 0.0
        %3861 = vmatpush2.msra.mxu0 0.0
        %3862 = vmatprep.subr.mxu0 0.0
        %3863 = vmatpush2.msra.mxu0 0.0
        %3864 = vmatprep.subr.mxu0 0.0
        %3865 = vmatpush2.msra.mxu0 0.0
        %3866 = vmatprep.subr.mxu0 0.0
        %3867 = vmatpush2.msra.mxu0 0.0
        %3868 = vmatprep.subr.mxu0 0.0
        %3869 = vmatpush2.msra.mxu0 0.0
        %3870 = vmatprep.mubr.f32.mxu0 0.0
        %3871 = vmatmul.mubr.f32.gmra.mxu0 %v3804
        %v3872 = vpop.f32.mrf.mxu0
        %v3873 = vadd.f32 0.0, %v3872
        %v3874 = vpop.f32.mrf.mxu0
        %3875 = vdwg.mxu0
        %v3876 = vsel %vm1011, %v2015, 0
        %3878 = vmatprep.subr.mxu0 0.0
        %3879 = vmatpush1.msra.mxu0 0.0
        %3880 = vmatprep.subr.mxu0 0.0
        %3881 = vmatpush1.msra.mxu0 0.0
        %3882 = vmatprep.subr.mxu0 0.0
        %3883 = vmatpush1.msra.mxu0 0.0
        %3884 = vmatprep.subr.mxu0 0.0
        %3885 = vmatpush1.msra.mxu0 0.0
        %3886 = vmatprep.subr.mxu0 0.0
        %3887 = vmatpush1.msra.mxu0 0.0
        %3888 = vmatprep.subr.mxu0 0.0
        %3889 = vmatpush1.msra.mxu0 0.0
        %3890 = vmatprep.subr.mxu0 0.0
        %3891 = vmatpush1.msra.mxu0 0.0
        %3892 = vmatprep.subr.mxu0 0.0
        %3893 = vmatpush1.msra.mxu0 0.0
        %3894 = vmatprep.subr.mxu0 0.0
        %3895 = vmatpush1.msra.mxu0 0.0
        %3896 = vmatprep.subr.mxu0 0.0
        %3897 = vmatpush1.msra.mxu0 0.0
        %3898 = vmatprep.subr.mxu0 0.0
        %3899 = vmatpush1.msra.mxu0 0.0
        %3900 = vmatprep.subr.mxu0 0.0
        %3901 = vmatpush1.msra.mxu0 0.0
        %3902 = vmatprep.subr.mxu0 0.0
        %3903 = vmatpush1.msra.mxu0 0.0
        %3904 = vmatprep.subr.mxu0 0.0
        %3905 = vmatpush1.msra.mxu0 0.0
        %3906 = vmatprep.subr.mxu0 0.0
        %3907 = vmatpush1.msra.mxu0 0.0
        %3908 = vmatprep.subr.mxu0 0.0
        %3909 = vmatpush1.msra.mxu0 %v299
        %3910 = vmatprep.subr.mxu0 0.0
        %3911 = vmatpush2.msra.mxu0 0.0
        %3912 = vmatprep.subr.mxu0 0.0
        %3913 = vmatpush2.msra.mxu0 0.0
        %3914 = vmatprep.subr.mxu0 0.0
        %3915 = vmatpush2.msra.mxu0 0.0
        %3916 = vmatprep.subr.mxu0 0.0
        %3917 = vmatpush2.msra.mxu0 0.0
        %3918 = vmatprep.subr.mxu0 0.0
        %3919 = vmatpush2.msra.mxu0 0.0
        %3920 = vmatprep.subr.mxu0 0.0
        %3921 = vmatpush2.msra.mxu0 0.0
        %3922 = vmatprep.subr.mxu0 0.0
        %3923 = vmatpush2.msra.mxu0 0.0
        %3924 = vmatprep.subr.mxu0 0.0
        %3925 = vmatpush2.msra.mxu0 0.0
        %3926 = vmatprep.subr.mxu0 0.0
        %3927 = vmatpush2.msra.mxu0 0.0
        %3928 = vmatprep.subr.mxu0 0.0
        %3929 = vmatpush2.msra.mxu0 0.0
        %3930 = vmatprep.subr.mxu0 0.0
        %3931 = vmatpush2.msra.mxu0 0.0
        %3932 = vmatprep.subr.mxu0 0.0
        %3933 = vmatpush2.msra.mxu0 0.0
        %3934 = vmatprep.subr.mxu0 0.0
        %3935 = vmatpush2.msra.mxu0 0.0
        %3936 = vmatprep.subr.mxu0 0.0
        %3937 = vmatpush2.msra.mxu0 0.0
        %3938 = vmatprep.subr.mxu0 0.0
        %3939 = vmatpush2.msra.mxu0 0.0
        %3940 = vmatprep.subr.mxu0 0.0
        %3941 = vmatpush2.msra.mxu0 0.0
        %3942 = vmatprep.mubr.f32.mxu0 0.0
        %3943 = vmatmul.mubr.f32.gmra.mxu0 %v3876
        %v3944 = vpop.f32.mrf.mxu0
        %v3945 = vadd.f32 0.0, %v3944
        %v3946 = vpop.f32.mrf.mxu0
        %3947 = vdwg.mxu0
        %v3948 = vsel %vm1011, %v2019, 0
        %3950 = vmatprep.subr.mxu0 0.0
        %3951 = vmatpush1.msra.mxu0 0.0
        %3952 = vmatprep.subr.mxu0 0.0
        %3953 = vmatpush1.msra.mxu0 0.0
        %3954 = vmatprep.subr.mxu0 0.0
        %3955 = vmatpush1.msra.mxu0 0.0
        %3956 = vmatprep.subr.mxu0 0.0
        %3957 = vmatpush1.msra.mxu0 0.0
        %3958 = vmatprep.subr.mxu0 0.0
        %3959 = vmatpush1.msra.mxu0 0.0
        %3960 = vmatprep.subr.mxu0 0.0
        %3961 = vmatpush1.msra.mxu0 0.0
        %3962 = vmatprep.subr.mxu0 0.0
        %3963 = vmatpush1.msra.mxu0 0.0
        %3964 = vmatprep.subr.mxu0 0.0
        %3965 = vmatpush1.msra.mxu0 0.0
        %3966 = vmatprep.subr.mxu0 0.0
        %3967 = vmatpush1.msra.mxu0 0.0
        %3968 = vmatprep.subr.mxu0 0.0
        %3969 = vmatpush1.msra.mxu0 0.0
        %3970 = vmatprep.subr.mxu0 0.0
        %3971 = vmatpush1.msra.mxu0 0.0
        %3972 = vmatprep.subr.mxu0 0.0
        %3973 = vmatpush1.msra.mxu0 0.0
        %3974 = vmatprep.subr.mxu0 0.0
        %3975 = vmatpush1.msra.mxu0 0.0
        %3976 = vmatprep.subr.mxu0 0.0
        %3977 = vmatpush1.msra.mxu0 0.0
        %3978 = vmatprep.subr.mxu0 0.0
        %3979 = vmatpush1.msra.mxu0 0.0
        %3980 = vmatprep.subr.mxu0 0.0
        %3981 = vmatpush1.msra.mxu0 %v300
        %3982 = vmatprep.subr.mxu0 0.0
        %3983 = vmatpush2.msra.mxu0 0.0
        %3984 = vmatprep.subr.mxu0 0.0
        %3985 = vmatpush2.msra.mxu0 0.0
        %3986 = vmatprep.subr.mxu0 0.0
        %3987 = vmatpush2.msra.mxu0 0.0
        %3988 = vmatprep.subr.mxu0 0.0
        %3989 = vmatpush2.msra.mxu0 0.0
        %3990 = vmatprep.subr.mxu0 0.0
        %3991 = vmatpush2.msra.mxu0 0.0
        %3992 = vmatprep.subr.mxu0 0.0
        %3993 = vmatpush2.msra.mxu0 0.0
        %3994 = vmatprep.subr.mxu0 0.0
        %3995 = vmatpush2.msra.mxu0 0.0
        %3996 = vmatprep.subr.mxu0 0.0
        %3997 = vmatpush2.msra.mxu0 0.0
        %3998 = vmatprep.subr.mxu0 0.0
        %3999 = vmatpush2.msra.mxu0 0.0
        %4000 = vmatprep.subr.mxu0 0.0
        %4001 = vmatpush2.msra.mxu0 0.0
        %4002 = vmatprep.subr.mxu0 0.0
        %4003 = vmatpush2.msra.mxu0 0.0
        %4004 = vmatprep.subr.mxu0 0.0
        %4005 = vmatpush2.msra.mxu0 0.0
        %4006 = vmatprep.subr.mxu0 0.0
        %4007 = vmatpush2.msra.mxu0 0.0
        %4008 = vmatprep.subr.mxu0 0.0
        %4009 = vmatpush2.msra.mxu0 0.0
        %4010 = vmatprep.subr.mxu0 0.0
        %4011 = vmatpush2.msra.mxu0 0.0
        %4012 = vmatprep.subr.mxu0 0.0
        %4013 = vmatpush2.msra.mxu0 0.0
        %4014 = vmatprep.mubr.f32.mxu0 0.0
        %4015 = vmatmul.mubr.f32.gmra.mxu0 %v3948
        %v4016 = vpop.f32.mrf.mxu0
        %v4017 = vadd.f32 0.0, %v4016
        %v4018 = vpop.f32.mrf.mxu0
        %4019 = vdwg.mxu0
        %v4020 = vsel %vm1011, %v2023, 0
        %4022 = vmatprep.subr.mxu0 0.0
        %4023 = vmatpush1.msra.mxu0 0.0
        %4024 = vmatprep.subr.mxu0 0.0
        %4025 = vmatpush1.msra.mxu0 0.0
        %4026 = vmatprep.subr.mxu0 0.0
        %4027 = vmatpush1.msra.mxu0 0.0
        %4028 = vmatprep.subr.mxu0 0.0
        %4029 = vmatpush1.msra.mxu0 0.0
        %4030 = vmatprep.subr.mxu0 0.0
        %4031 = vmatpush1.msra.mxu0 0.0
        %4032 = vmatprep.subr.mxu0 0.0
        %4033 = vmatpush1.msra.mxu0 0.0
        %4034 = vmatprep.subr.mxu0 0.0
        %4035 = vmatpush1.msra.mxu0 0.0
        %4036 = vmatprep.subr.mxu0 0.0
        %4037 = vmatpush1.msra.mxu0 0.0
        %4038 = vmatprep.subr.mxu0 0.0
        %4039 = vmatpush1.msra.mxu0 0.0
        %4040 = vmatprep.subr.mxu0 0.0
        %4041 = vmatpush1.msra.mxu0 0.0
        %4042 = vmatprep.subr.mxu0 0.0
        %4043 = vmatpush1.msra.mxu0 0.0
        %4044 = vmatprep.subr.mxu0 0.0
        %4045 = vmatpush1.msra.mxu0 0.0
        %4046 = vmatprep.subr.mxu0 0.0
        %4047 = vmatpush1.msra.mxu0 0.0
        %4048 = vmatprep.subr.mxu0 0.0
        %4049 = vmatpush1.msra.mxu0 0.0
        %4050 = vmatprep.subr.mxu0 0.0
        %4051 = vmatpush1.msra.mxu0 0.0
        %4052 = vmatprep.subr.mxu0 0.0
        %4053 = vmatpush1.msra.mxu0 %v301
        %4054 = vmatprep.subr.mxu0 0.0
        %4055 = vmatpush2.msra.mxu0 0.0
        %4056 = vmatprep.subr.mxu0 0.0
        %4057 = vmatpush2.msra.mxu0 0.0
        %4058 = vmatprep.subr.mxu0 0.0
        %4059 = vmatpush2.msra.mxu0 0.0
        %4060 = vmatprep.subr.mxu0 0.0
        %4061 = vmatpush2.msra.mxu0 0.0
        %4062 = vmatprep.subr.mxu0 0.0
        %4063 = vmatpush2.msra.mxu0 0.0
        %4064 = vmatprep.subr.mxu0 0.0
        %4065 = vmatpush2.msra.mxu0 0.0
        %4066 = vmatprep.subr.mxu0 0.0
        %4067 = vmatpush2.msra.mxu0 0.0
        %4068 = vmatprep.subr.mxu0 0.0
        %4069 = vmatpush2.msra.mxu0 0.0
        %4070 = vmatprep.subr.mxu0 0.0
        %4071 = vmatpush2.msra.mxu0 0.0
        %4072 = vmatprep.subr.mxu0 0.0
        %4073 = vmatpush2.msra.mxu0 0.0
        %4074 = vmatprep.subr.mxu0 0.0
        %4075 = vmatpush2.msra.mxu0 0.0
        %4076 = vmatprep.subr.mxu0 0.0
        %4077 = vmatpush2.msra.mxu0 0.0
        %4078 = vmatprep.subr.mxu0 0.0
        %4079 = vmatpush2.msra.mxu0 0.0
        %4080 = vmatprep.subr.mxu0 0.0
        %4081 = vmatpush2.msra.mxu0 0.0
        %4082 = vmatprep.subr.mxu0 0.0
        %4083 = vmatpush2.msra.mxu0 0.0
        %4084 = vmatprep.subr.mxu0 0.0
        %4085 = vmatpush2.msra.mxu0 0.0
        %4086 = vmatprep.mubr.f32.mxu0 0.0
        %4087 = vmatmul.mubr.f32.gmra.mxu0 %v4020
        %v4088 = vpop.f32.mrf.mxu0
        %v4089 = vadd.f32 0.0, %v4088
        %v4090 = vpop.f32.mrf.mxu0
        %4091 = vdwg.mxu0
        %v4092 = vsel %vm1011, %v2027, 0
        %4094 = vmatprep.subr.mxu0 0.0
        %4095 = vmatpush1.msra.mxu0 0.0
        %4096 = vmatprep.subr.mxu0 0.0
        %4097 = vmatpush1.msra.mxu0 0.0
        %4098 = vmatprep.subr.mxu0 0.0
        %4099 = vmatpush1.msra.mxu0 0.0
        %4100 = vmatprep.subr.mxu0 0.0
        %4101 = vmatpush1.msra.mxu0 0.0
        %4102 = vmatprep.subr.mxu0 0.0
        %4103 = vmatpush1.msra.mxu0 0.0
        %4104 = vmatprep.subr.mxu0 0.0
        %4105 = vmatpush1.msra.mxu0 0.0
        %4106 = vmatprep.subr.mxu0 0.0
        %4107 = vmatpush1.msra.mxu0 0.0
        %4108 = vmatprep.subr.mxu0 0.0
        %4109 = vmatpush1.msra.mxu0 0.0
        %4110 = vmatprep.subr.mxu0 0.0
        %4111 = vmatpush1.msra.mxu0 0.0
        %4112 = vmatprep.subr.mxu0 0.0
        %4113 = vmatpush1.msra.mxu0 0.0
        %4114 = vmatprep.subr.mxu0 0.0
        %4115 = vmatpush1.msra.mxu0 0.0
        %4116 = vmatprep.subr.mxu0 0.0
        %4117 = vmatpush1.msra.mxu0 0.0
        %4118 = vmatprep.subr.mxu0 0.0
        %4119 = vmatpush1.msra.mxu0 0.0
        %4120 = vmatprep.subr.mxu0 0.0
        %4121 = vmatpush1.msra.mxu0 0.0
        %4122 = vmatprep.subr.mxu0 0.0
        %4123 = vmatpush1.msra.mxu0 0.0
        %4124 = vmatprep.subr.mxu0 0.0
        %4125 = vmatpush1.msra.mxu0 %v302
        %4126 = vmatprep.subr.mxu0 0.0
        %4127 = vmatpush2.msra.mxu0 0.0
        %4128 = vmatprep.subr.mxu0 0.0
        %4129 = vmatpush2.msra.mxu0 0.0
        %4130 = vmatprep.subr.mxu0 0.0
        %4131 = vmatpush2.msra.mxu0 0.0
        %4132 = vmatprep.subr.mxu0 0.0
        %4133 = vmatpush2.msra.mxu0 0.0
        %4134 = vmatprep.subr.mxu0 0.0
        %4135 = vmatpush2.msra.mxu0 0.0
        %4136 = vmatprep.subr.mxu0 0.0
        %4137 = vmatpush2.msra.mxu0 0.0
        %4138 = vmatprep.subr.mxu0 0.0
        %4139 = vmatpush2.msra.mxu0 0.0
        %4140 = vmatprep.subr.mxu0 0.0
        %4141 = vmatpush2.msra.mxu0 0.0
        %4142 = vmatprep.subr.mxu0 0.0
        %4143 = vmatpush2.msra.mxu0 0.0
        %4144 = vmatprep.subr.mxu0 0.0
        %4145 = vmatpush2.msra.mxu0 0.0
        %4146 = vmatprep.subr.mxu0 0.0
        %4147 = vmatpush2.msra.mxu0 0.0
        %4148 = vmatprep.subr.mxu0 0.0
        %4149 = vmatpush2.msra.mxu0 0.0
        %4150 = vmatprep.subr.mxu0 0.0
        %4151 = vmatpush2.msra.mxu0 0.0
        %4152 = vmatprep.subr.mxu0 0.0
        %4153 = vmatpush2.msra.mxu0 0.0
        %4154 = vmatprep.subr.mxu0 0.0
        %4155 = vmatpush2.msra.mxu0 0.0
        %4156 = vmatprep.subr.mxu0 0.0
        %4157 = vmatpush2.msra.mxu0 0.0
        %4158 = vmatprep.mubr.f32.mxu0 0.0
        %4159 = vmatmul.mubr.f32.gmra.mxu0 %v4092
        %v4160 = vpop.f32.mrf.mxu0
        %v4161 = vadd.f32 0.0, %v4160
        %v4162 = vpop.f32.mrf.mxu0
        %4163 = vdwg.mxu0
        %v4164 = vsel %vm1011, %v2031, 0
        %4166 = vmatprep.subr.mxu0 0.0
        %4167 = vmatpush1.msra.mxu0 0.0
        %4168 = vmatprep.subr.mxu0 0.0
        %4169 = vmatpush1.msra.mxu0 0.0
        %4170 = vmatprep.subr.mxu0 0.0
        %4171 = vmatpush1.msra.mxu0 0.0
        %4172 = vmatprep.subr.mxu0 0.0
        %4173 = vmatpush1.msra.mxu0 0.0
        %4174 = vmatprep.subr.mxu0 0.0
        %4175 = vmatpush1.msra.mxu0 0.0
        %4176 = vmatprep.subr.mxu0 0.0
        %4177 = vmatpush1.msra.mxu0 0.0
        %4178 = vmatprep.subr.mxu0 0.0
        %4179 = vmatpush1.msra.mxu0 0.0
        %4180 = vmatprep.subr.mxu0 0.0
        %4181 = vmatpush1.msra.mxu0 0.0
        %4182 = vmatprep.subr.mxu0 0.0
        %4183 = vmatpush1.msra.mxu0 0.0
        %4184 = vmatprep.subr.mxu0 0.0
        %4185 = vmatpush1.msra.mxu0 0.0
        %4186 = vmatprep.subr.mxu0 0.0
        %4187 = vmatpush1.msra.mxu0 0.0
        %4188 = vmatprep.subr.mxu0 0.0
        %4189 = vmatpush1.msra.mxu0 0.0
        %4190 = vmatprep.subr.mxu0 0.0
        %4191 = vmatpush1.msra.mxu0 0.0
        %4192 = vmatprep.subr.mxu0 0.0
        %4193 = vmatpush1.msra.mxu0 0.0
        %4194 = vmatprep.subr.mxu0 0.0
        %4195 = vmatpush1.msra.mxu0 0.0
        %4196 = vmatprep.subr.mxu0 0.0
        %4197 = vmatpush1.msra.mxu0 %v303
        %4198 = vmatprep.subr.mxu0 0.0
        %4199 = vmatpush2.msra.mxu0 0.0
        %4200 = vmatprep.subr.mxu0 0.0
        %4201 = vmatpush2.msra.mxu0 0.0
        %4202 = vmatprep.subr.mxu0 0.0
        %4203 = vmatpush2.msra.mxu0 0.0
        %4204 = vmatprep.subr.mxu0 0.0
        %4205 = vmatpush2.msra.mxu0 0.0
        %4206 = vmatprep.subr.mxu0 0.0
        %4207 = vmatpush2.msra.mxu0 0.0
        %4208 = vmatprep.subr.mxu0 0.0
        %4209 = vmatpush2.msra.mxu0 0.0
        %4210 = vmatprep.subr.mxu0 0.0
        %4211 = vmatpush2.msra.mxu0 0.0
        %4212 = vmatprep.subr.mxu0 0.0
        %4213 = vmatpush2.msra.mxu0 0.0
        %4214 = vmatprep.subr.mxu0 0.0
        %4215 = vmatpush2.msra.mxu0 0.0
        %4216 = vmatprep.subr.mxu0 0.0
        %4217 = vmatpush2.msra.mxu0 0.0
        %4218 = vmatprep.subr.mxu0 0.0
        %4219 = vmatpush2.msra.mxu0 0.0
        %4220 = vmatprep.subr.mxu0 0.0
        %4221 = vmatpush2.msra.mxu0 0.0
        %4222 = vmatprep.subr.mxu0 0.0
        %4223 = vmatpush2.msra.mxu0 0.0
        %4224 = vmatprep.subr.mxu0 0.0
        %4225 = vmatpush2.msra.mxu0 0.0
        %4226 = vmatprep.subr.mxu0 0.0
        %4227 = vmatpush2.msra.mxu0 0.0
        %4228 = vmatprep.subr.mxu0 0.0
        %4229 = vmatpush2.msra.mxu0 0.0
        %4230 = vmatprep.mubr.f32.mxu0 0.0
        %4231 = vmatmul.mubr.f32.gmra.mxu0 %v4164
        %v4232 = vpop.f32.mrf.mxu0
        %v4233 = vadd.f32 0.0, %v4232
        %v4234 = vpop.f32.mrf.mxu0
        %4235 = vdwg.mxu0
        %v4236 = vsel %vm1011, %v2035, 0
        %4238 = vmatprep.subr.mxu0 0.0
        %4239 = vmatpush1.msra.mxu0 0.0
        %4240 = vmatprep.subr.mxu0 0.0
        %4241 = vmatpush1.msra.mxu0 0.0
        %4242 = vmatprep.subr.mxu0 0.0
        %4243 = vmatpush1.msra.mxu0 0.0
        %4244 = vmatprep.subr.mxu0 0.0
        %4245 = vmatpush1.msra.mxu0 0.0
        %4246 = vmatprep.subr.mxu0 0.0
        %4247 = vmatpush1.msra.mxu0 0.0
        %4248 = vmatprep.subr.mxu0 0.0
        %4249 = vmatpush1.msra.mxu0 0.0
        %4250 = vmatprep.subr.mxu0 0.0
        %4251 = vmatpush1.msra.mxu0 0.0
        %4252 = vmatprep.subr.mxu0 0.0
        %4253 = vmatpush1.msra.mxu0 0.0
        %4254 = vmatprep.subr.mxu0 0.0
        %4255 = vmatpush1.msra.mxu0 0.0
        %4256 = vmatprep.subr.mxu0 0.0
        %4257 = vmatpush1.msra.mxu0 0.0
        %4258 = vmatprep.subr.mxu0 0.0
        %4259 = vmatpush1.msra.mxu0 0.0
        %4260 = vmatprep.subr.mxu0 0.0
        %4261 = vmatpush1.msra.mxu0 0.0
        %4262 = vmatprep.subr.mxu0 0.0
        %4263 = vmatpush1.msra.mxu0 0.0
        %4264 = vmatprep.subr.mxu0 0.0
        %4265 = vmatpush1.msra.mxu0 0.0
        %4266 = vmatprep.subr.mxu0 0.0
        %4267 = vmatpush1.msra.mxu0 0.0
        %4268 = vmatprep.subr.mxu0 0.0
        %4269 = vmatpush1.msra.mxu0 %v304
        %4270 = vmatprep.subr.mxu0 0.0
        %4271 = vmatpush2.msra.mxu0 0.0
        %4272 = vmatprep.subr.mxu0 0.0
        %4273 = vmatpush2.msra.mxu0 0.0
        %4274 = vmatprep.subr.mxu0 0.0
        %4275 = vmatpush2.msra.mxu0 0.0
        %4276 = vmatprep.subr.mxu0 0.0
        %4277 = vmatpush2.msra.mxu0 0.0
        %4278 = vmatprep.subr.mxu0 0.0
        %4279 = vmatpush2.msra.mxu0 0.0
        %4280 = vmatprep.subr.mxu0 0.0
        %4281 = vmatpush2.msra.mxu0 0.0
        %4282 = vmatprep.subr.mxu0 0.0
        %4283 = vmatpush2.msra.mxu0 0.0
        %4284 = vmatprep.subr.mxu0 0.0
        %4285 = vmatpush2.msra.mxu0 0.0
        %4286 = vmatprep.subr.mxu0 0.0
        %4287 = vmatpush2.msra.mxu0 0.0
        %4288 = vmatprep.subr.mxu0 0.0
        %4289 = vmatpush2.msra.mxu0 0.0
        %4290 = vmatprep.subr.mxu0 0.0
        %4291 = vmatpush2.msra.mxu0 0.0
        %4292 = vmatprep.subr.mxu0 0.0
        %4293 = vmatpush2.msra.mxu0 0.0
        %4294 = vmatprep.subr.mxu0 0.0
        %4295 = vmatpush2.msra.mxu0 0.0
        %4296 = vmatprep.subr.mxu0 0.0
        %4297 = vmatpush2.msra.mxu0 0.0
        %4298 = vmatprep.subr.mxu0 0.0
        %4299 = vmatpush2.msra.mxu0 0.0
        %4300 = vmatprep.subr.mxu0 0.0
        %4301 = vmatpush2.msra.mxu0 0.0
        %4302 = vmatprep.mubr.f32.mxu0 0.0
        %4303 = vmatmul.mubr.f32.gmra.mxu0 %v4236
        %v4304 = vpop.f32.mrf.mxu0
        %v4305 = vadd.f32 0.0, %v4304
        %v4306 = vpop.f32.mrf.mxu0
        %4307 = vdwg.mxu0
        %v4308 = vsel %vm1011, %v2039, 0
        %4310 = vmatprep.subr.mxu0 0.0
        %4311 = vmatpush1.msra.mxu0 0.0
        %4312 = vmatprep.subr.mxu0 0.0
        %4313 = vmatpush1.msra.mxu0 0.0
        %4314 = vmatprep.subr.mxu0 0.0
        %4315 = vmatpush1.msra.mxu0 0.0
        %4316 = vmatprep.subr.mxu0 0.0
        %4317 = vmatpush1.msra.mxu0 0.0
        %4318 = vmatprep.subr.mxu0 0.0
        %4319 = vmatpush1.msra.mxu0 0.0
        %4320 = vmatprep.subr.mxu0 0.0
        %4321 = vmatpush1.msra.mxu0 0.0
        %4322 = vmatprep.subr.mxu0 0.0
        %4323 = vmatpush1.msra.mxu0 0.0
        %4324 = vmatprep.subr.mxu0 0.0
        %4325 = vmatpush1.msra.mxu0 0.0
        %4326 = vmatprep.subr.mxu0 0.0
        %4327 = vmatpush1.msra.mxu0 0.0
        %4328 = vmatprep.subr.mxu0 0.0
        %4329 = vmatpush1.msra.mxu0 0.0
        %4330 = vmatprep.subr.mxu0 0.0
        %4331 = vmatpush1.msra.mxu0 0.0
        %4332 = vmatprep.subr.mxu0 0.0
        %4333 = vmatpush1.msra.mxu0 0.0
        %4334 = vmatprep.subr.mxu0 0.0
        %4335 = vmatpush1.msra.mxu0 0.0
        %4336 = vmatprep.subr.mxu0 0.0
        %4337 = vmatpush1.msra.mxu0 0.0
        %4338 = vmatprep.subr.mxu0 0.0
        %4339 = vmatpush1.msra.mxu0 0.0
        %4340 = vmatprep.subr.mxu0 0.0
        %4341 = vmatpush1.msra.mxu0 %v305
        %4342 = vmatprep.subr.mxu0 0.0
        %4343 = vmatpush2.msra.mxu0 0.0
        %4344 = vmatprep.subr.mxu0 0.0
        %4345 = vmatpush2.msra.mxu0 0.0
        %4346 = vmatprep.subr.mxu0 0.0
        %4347 = vmatpush2.msra.mxu0 0.0
        %4348 = vmatprep.subr.mxu0 0.0
        %4349 = vmatpush2.msra.mxu0 0.0
        %4350 = vmatprep.subr.mxu0 0.0
        %4351 = vmatpush2.msra.mxu0 0.0
        %4352 = vmatprep.subr.mxu0 0.0
        %4353 = vmatpush2.msra.mxu0 0.0
        %4354 = vmatprep.subr.mxu0 0.0
        %4355 = vmatpush2.msra.mxu0 0.0
        %4356 = vmatprep.subr.mxu0 0.0
        %4357 = vmatpush2.msra.mxu0 0.0
        %4358 = vmatprep.subr.mxu0 0.0
        %4359 = vmatpush2.msra.mxu0 0.0
        %4360 = vmatprep.subr.mxu0 0.0
        %4361 = vmatpush2.msra.mxu0 0.0
        %4362 = vmatprep.subr.mxu0 0.0
        %4363 = vmatpush2.msra.mxu0 0.0
        %4364 = vmatprep.subr.mxu0 0.0
        %4365 = vmatpush2.msra.mxu0 0.0
        %4366 = vmatprep.subr.mxu0 0.0
        %4367 = vmatpush2.msra.mxu0 0.0
        %4368 = vmatprep.subr.mxu0 0.0
        %4369 = vmatpush2.msra.mxu0 0.0
        %4370 = vmatprep.subr.mxu0 0.0
        %4371 = vmatpush2.msra.mxu0 0.0
        %4372 = vmatprep.subr.mxu0 0.0
        %4373 = vmatpush2.msra.mxu0 0.0
        %4374 = vmatprep.mubr.f32.mxu0 0.0
        %4375 = vmatmul.mubr.f32.gmra.mxu0 %v4308
        %v4376 = vpop.f32.mrf.mxu0
        %v4377 = vadd.f32 0.0, %v4376
        %v4378 = vpop.f32.mrf.mxu0
        %4379 = vdwg.mxu0
        %vm4380 = vcmask 516096
        %4381 = vst.msk [vmem:[%s258] sm:$0x1] %vm4380, %v2145
        %4382 = vst.msk [vmem:[%s258 + $0x1] sm:$0x1] %vm4380, %v2217
        %4383 = vst.msk [vmem:[%s258 + $0x2] sm:$0x1] %vm4380, %v2289
        %4384 = vst.msk [vmem:[%s258 + $0x3] sm:$0x1] %vm4380, %v2361
        %4385 = vst.msk [vmem:[%s258 + $0x4] sm:$0x1] %vm4380, %v2433
        %4386 = vst.msk [vmem:[%s258 + $0x5] sm:$0x1] %vm4380, %v2505
        %4387 = vst.msk [vmem:[%s258 + $0x6] sm:$0x1] %vm4380, %v2577
        %4388 = vst.msk [vmem:[%s258 + $0x7] sm:$0x1] %vm4380, %v2649
        %4389 = vst.msk [vmem:[%s258 + $0x8] sm:$0x1] %vm4380, %v2721
        %4390 = vst.msk [vmem:[%s258 + $0x9] sm:$0x1] %vm4380, %v2793
        %4391 = vst.msk [vmem:[%s258 + $0xa] sm:$0x1] %vm4380, %v2865
        %4392 = vst.msk [vmem:[%s258 + $0xb] sm:$0x1] %vm4380, %v2937
        %4393 = vst.msk [vmem:[%s258 + $0xc] sm:$0x1] %vm4380, %v3009
        %4394 = vst.msk [vmem:[%s258 + $0xd] sm:$0x1] %vm4380, %v3081
        %4395 = vst.msk [vmem:[%s258 + $0xe] sm:$0x1] %vm4380, %v3153
        %4396 = vst.msk [vmem:[%s258 + $0xf] sm:$0x1] %vm4380, %v3225
        %4397 = vst.msk [vmem:[%s258 + $0x10] sm:$0x1] %vm4380, %v3297
        %4398 = vst.msk [vmem:[%s258 + $0x11] sm:$0x1] %vm4380, %v3369
        %4399 = vst.msk [vmem:[%s258 + $0x12] sm:$0x1] %vm4380, %v3441
        %4400 = vst.msk [vmem:[%s258 + $0x13] sm:$0x1] %vm4380, %v3513
        %4401 = vst.msk [vmem:[%s258 + $0x14] sm:$0x1] %vm4380, %v3585
        %4402 = vst.msk [vmem:[%s258 + $0x15] sm:$0x1] %vm4380, %v3657
        %4403 = vst.msk [vmem:[%s258 + $0x16] sm:$0x1] %vm4380, %v3729
        %4404 = vst.msk [vmem:[%s258 + $0x17] sm:$0x1] %vm4380, %v3801
        %4405 = vst.msk [vmem:[%s258 + $0x18] sm:$0x1] %vm4380, %v3873
        %4406 = vst.msk [vmem:[%s258 + $0x19] sm:$0x1] %vm4380, %v3945
        %4407 = vst.msk [vmem:[%s258 + $0x1a] sm:$0x1] %vm4380, %v4017
        %4408 = vst.msk [vmem:[%s258 + $0x1b] sm:$0x1] %vm4380, %v4089
        %4409 = vst.msk [vmem:[%s258 + $0x1c] sm:$0x1] %vm4380, %v4161
        %4410 = vst.msk [vmem:[%s258 + $0x1d] sm:$0x1] %vm4380, %v4233
        %4411 = vst.msk [vmem:[%s258 + $0x1e] sm:$0x1] %vm4380, %v4305
        %4412 = vst.msk [vmem:[%s258 + $0x1f] sm:$0x1] %vm4380, %v4377
        %s4413 = sand.u32 %s121, 1
        %s4414 = scalar_lea.sflag [#allocation4], %s4413
        %s4415 = sand.u32 %s121, 1
        %s4416 = smul.addr %s4415, 32
        %s4417 = scalar_lea.vmem [#allocation7], %s4416
        %s4418 = smul.u32 4, %s24
        %p4419 = scmp.lt.s32.totalorder %s4418, 7
        %s4420 = scalar_select %p4419, %s4418, 7
        %s4421 = smul.addr %s4420, 8
        %s4422 = scalar_lea.vmem %s5, %s4421
        // Predicated region
        $region45: #{tpu_custom_call.1} parent=35 // pred_check
          %p4423 = pneg %p131
        $region46: #{tpu_custom_call.1} parent=35 // pred_check_branch
          %4425 = sbr.rel (%p4423) target = $region48
        $region47: #{tpu_custom_call.1} parent=35 // pred_region
          %s4426 = smul.u32 32, %s24
          %s4428 = ssub.s32 512, 512
          %4429 = vsyncadd %s4414, %s4428
          %s4430 = smul.addr %s4426, 16
          %s4431 = scalar_lea.hbm %s4, %s4430
          %s4432 = sshll.u32 %s4417, 4
          %s4433 = int_to_ptr.vmem [resolvable:$true] %s4432
          %4438 = dma.vmem_to_hbm [thread:$0]  %s4433, 512, %s4431, %s4414, 16, 16, 1
        $region48: #{tpu_custom_call.1} parent=35 // pred_fallthru
          _
        // Predicated region
        $region49: #{tpu_custom_call.1} parent=35 // pred_check
          %p4439 = pneg %p157
        $region50: #{tpu_custom_call.1} parent=35 // pred_check_branch
          %4441 = sbr.rel (%p4439) target = $region52
        $region51: #{tpu_custom_call.1} parent=35 // pred_region
          %s4442 = smul.u32 4, %s24
        $region52: #{tpu_custom_call.1} parent=35 // pred_fallthru
          _
      $region36: #{tpu_custom_call.1} parent=5 // pred_fallthru
        _
      %p4443 = scmp.le.s32.totalorder 2, %s19
      // Predicated region
      $region53: #{tpu_custom_call.1} parent=5 // pred_check
        %p4444 = pneg %p4443
      $region54: #{tpu_custom_call.1} parent=5 // pred_check_branch
        %4446 = sbr.rel (%p4444) target = $region56
      $region55: #{tpu_custom_call.1} parent=5 // pred_region
        %s4447 = ssub.s32 %s19, 2
        // Predicated region
        $region57: #{tpu_custom_call.1} parent=55 // pred_check
          %p4448 = pneg %p137
        $region58: #{tpu_custom_call.1} parent=55 // pred_check_branch
          %4450 = sbr.rel (%p4448) target = $region60
        $region59: #{tpu_custom_call.1} parent=55 // pred_region
          %s4451 = sand.u32 %s122, 1
          %s4452 = scalar_lea.sflag [#allocation4], %s4451
          %s4453 = sand.u32 %s122, 1
          %s4454 = smul.addr %s4453, 32
          %s4455 = scalar_lea.vmem [#allocation7], %s4454
          %4456 = dma.done %s4452, 512
        $region60: #{tpu_custom_call.1} parent=55 // pred_fallthru
          _
        // Predicated region
        $region61: #{tpu_custom_call.1} parent=55 // pred_check
          %p4457 = pneg %p163
        $region62: #{tpu_custom_call.1} parent=55 // pred_check_branch
          %4459 = sbr.rel (%p4457) target = $region64
        $region63: #{tpu_custom_call.1} parent=55 // pred_region
          %s4460 = smul.u32 4, %s25
          %p4461 = scmp.lt.s32.totalorder %s4460, 7
          %s4462 = scalar_select %p4461, %s4460, 7
          %s4463 = smul.addr %s4462, 8
          %s4464 = scalar_lea.vmem %s5, %s4463
        $region64: #{tpu_custom_call.1} parent=55 // pred_fallthru
          _
      $region56: #{tpu_custom_call.1} parent=5 // pred_fallthru
        _
    $region6: #{tpu_custom_call.1} parent=1 // loop_footer
      %s23 = sadd.s32 1, %s19
    $region7: #{tpu_custom_call.1} parent=1 // loop_footer_branch
      %18 = sbr.rel target = $region3
    $region8: #{tpu_custom_call.1} parent=1 // loop_exit
      _
    %4465 = vsyncpa [#allocation3], 1
    %s4466 = scalar_lea.sflag [#allocation3], 1
    %4467 = vsyncpa %s4466, 1
    %4468 = vsyncpa [#allocation6], 1
    %4469 = vsyncpa [#allocation4], 1
    %s4470 = scalar_lea.sflag [#allocation4], 1
    %4471 = vsyncpa %s4470, 1

</llo_original>
